<compile_context>
chip_gen: v7x
topology: tpu7x:2x2x1
jax: 0.10.0
libtpu: 0.0.40
codegen_flags: <defaults>
</compile_context>

<pallas_src>
import numpy as np
import jax
import jax.numpy as jnp
from jax import lax
from jax.experimental import pallas as pl
from jax.experimental.pallas import tpu as pltpu

HOP = 128            # overlap-add hop inside a slice (lane aligned)
SLICE_LEN = 2 * HOP  # each slice synthesizes 256 samples, 50% overlap


# ----------------------------- Pallas kernel ------------------------------- #
def _make_kernel(nb, ts, has_prev):
    """Kernel over one chunk of `ts` slices; coefficient/atom refs are per-bucket.

    refs = [cprev_0..cprev_{nb-1}]? + [c_0..c_{nb-1}] + [a_0..a_{nb-1}] + [y_ref]
      cprev_b : (1, B, Kb)  bf16  previous chunk's last slice (only if has_prev)
      c_b     : (ts, B, Kb) bf16  this chunk's coefficient slices
      a_b     : (Kb, 256)   bf16  interleaved synthesis atoms [ar; -ai]
      y_ref   : (B, ts*HOP) f32   lane-dense output hop blocks of this chunk
    """
    def kernel(*refs):
        off = nb if has_prev else 0
        cprev_refs = refs[:off]
        c_refs = refs[off:off + nb]
        a_refs = refs[off + nb:off + 2 * nb]
        y_ref = refs[off + 2 * nb]

        def synth(load):
            # sum of per-bucket MXU dots, f32 accumulation
            acc = None
            for b in range(nb):
                d = jnp.dot(load(b), a_refs[b][...],
                            preferred_element_type=jnp.float32)
                acc = d if acc is None else acc + d
            return acc                                    # (B, SLICE_LEN) f32

        if has_prev:
            # Recompute the incoming half-slice from the previous chunk's last
            # slice -> chunks are fully independent (grid axis is "parallel",
            # v7x megacore can split them).  Zeroed on the first chunk.
            not_first = (pl.program_id(0) > 0).astype(jnp.float32)
            prev = synth(lambda b: cprev_refs[b][0])[:, HOP:] * not_first
        else:
            prev = jnp.zeros((y_ref.shape[0], HOP), jnp.float32)

        if ts <= 32:
            # small chunk: full static unroll
            for j in range(ts):
                sl = synth(lambda b, j=j: c_refs[b][j])
                y_ref[:, j * HOP:(j + 1) * HOP] = prev + sl[:, :HOP]
                prev = sl[:, HOP:]
        else:
            # big chunk: bounded unroll, carry threaded through the loop state
            def body(j, prev):
                sl = synth(lambda b: c_refs[b][j])
                start = pl.multiple_of(j * HOP, HOP)
                y_ref[:, pl.ds(start, HOP)] = prev + sl[:, :HOP]
                return sl[:, HOP:]
            lax.fori_loop(0, ts, body, prev, unroll=8)

    return kernel


def _vmem_capacity_bytes():
    """Per-core VMEM capacity; conservative fallback (v7x has 64 MiB / TC)."""
    try:
        info = pltpu.get_tpu_info()
        cap = getattr(info, "vmem_capacity_bytes", None)
        if cap:
            return int(cap)
    except Exception:
        pass
    return 64 << 20


def fused_slice_synthesis(C_list, A_list, length):
    """C_list[b]: (T, B, Kb) bf16 slice-major coefficients; A_list[b]: (Kb, 256) bf16.

    Returns (B, t_pad*HOP) f32 overlap-added waveform (>= max(length, (T+1)*HOP))."""
    T, B = int(C_list[0].shape[0]), int(C_list[0].shape[1])
    for c in C_list:
        assert int(c.shape[0]) == T and int(c.shape[1]) == B
    Ks = [int(c.shape[2]) for c in C_list]
    Ktot = sum(Ks)
    nb = len(C_list)

    n_hops = max(T + 1, -(-length // HOP))          # hop T holds the final half-slice

    # ---- chunk sizing by a generation-aware VMEM byte budget ---------------- #
    vmem_cap = _vmem_capacity_bytes()
    budget = int(min(vmem_cap, 128 << 20) * 0.6)    # leave headroom; v7x is 64 MiB/TC
    b_c = -(-B // 16) * 16                          # bf16 sublane padding in VMEM
    b_o = -(-B // 8) * 8                            # f32 sublane padding in VMEM
    fixed = (2 * Ktot * SLICE_LEN * 2               # atoms (worst case double-buffered)
             + 2 * b_c * Ktot * 2                   # prev-slice blocks (double-buffered)
             + (1 << 20))                           # misc margin
    per_slice = 2 * b_c * Ktot * 2 + 2 * b_o * HOP * 4   # coeff + output double buffers
    ts = int(max(1, min((budget - fixed) // per_slice, n_hops)))
    n_chunks = -(-n_hops // ts)
    ts = -(-n_hops // n_chunks)                     # rebalance -> minimal zero padding
    t_pad = n_chunks * ts
    has_prev = n_chunks > 1
    # TODO(synk): for very large Ktot (real xumx-sliCQ bucket counts) add an inner
    # K grid axis with f32 scratch accumulation so the atoms need not be VMEM-resident.

    # minimal time zero-pad: only the slices needed to cover n_hops (<= n_chunks extra)
    Cs = [jnp.pad(c, ((0, t_pad - T), (0, 0), (0, 0))) if t_pad > T else c
          for c in C_list]

    args, in_specs = [], []
    if has_prev:
        for c, Kb in zip(Cs, Ks):
            # previous chunk's last slice (clamped to 0 for chunk 0, masked in-kernel)
            in_specs.append(pl.BlockSpec(
                (1, B, Kb), lambda ch, ts=ts: (jnp.maximum(ch * ts - 1, 0), 0, 0)))
            args.append(c)
    for c, Kb in zip(Cs, Ks):
        in_specs.append(pl.BlockSpec((ts, B, Kb), lambda ch: (ch, 0, 0)))
        args.append(c)
    args.extend(A_list)

    vmem_limit = fixed + per_slice * ts + (8 << 20)
    vmem_limit = int(min(max(vmem_limit, 32 << 20), int(vmem_cap * 0.9)))

    def build(atoms_single_buffered):
        specs = list(in_specs)
        for Kb in Ks:
            kw = {"pipeline_mode": pl.Buffered(1)} if atoms_single_buffered else {}
            specs.append(pl.BlockSpec((Kb, SLICE_LEN), lambda ch: (0, 0), **kw))
        return pl.pallas_call(
            _make_kernel(nb, ts, has_prev),
            out_shape=jax.ShapeDtypeStruct((B, t_pad * HOP), jnp.float32),
            grid=(n_chunks,),
            in_specs=specs,
            out_specs=pl.BlockSpec((B, ts * HOP), lambda ch: (0, ch)),
            compiler_params=pltpu.CompilerParams(
                dimension_semantics=("parallel",),   # carry is recomputed per chunk
                vmem_limit_bytes=vmem_limit),
        )

    try:
        # atoms have a constant index_map (fetched once); single-buffer them.
        return build(True)(*args)
    except Exception:
        # graceful fallback if pipeline_mode=pl.Buffered is unsupported here
        return build(False)(*args)


# ----------------------- deterministic "parameters" ------------------------ #
def make_synth_atoms(F, M, f_offset):
    """Hann-windowed complex exponential synthesis atoms, shape (F*M, SLICE_LEN)."""
    N = SLICE_LEN
    a = N // M
    n = jnp.arange(N, dtype=jnp.float32)
    m = jnp.arange(M, dtype=jnp.float32)
    rel = jnp.mod(n[None, :] - m[:, None] * a, N)                       # (M, N)
    L = 2.0 * a
    win = jnp.where(rel < L, 0.5 - 0.5 * jnp.cos(2.0 * jnp.pi * rel / L), 0.0)
    f = jnp.arange(F, dtype=jnp.float32) + f_offset
    phase = 2.0 * jnp.pi * f[:, None] * n[None, :] / N                  # (F, N)
    ar = (win[None, :, :] * jnp.cos(phase)[:, None, :]).reshape(F * M, N)
    ai = (win[None, :, :] * jnp.sin(phase)[:, None, :]).reshape(F * M, N)
    return ar.astype(jnp.float32), ai.astype(jnp.float32)


# --------------------------- INSGT_SL forward ------------------------------ #
def insgt_sl_forward(X_list, length, atoms):
    """Mirrors INSGT_SL.forward: real-stacked inputs, packed batch, moveaxis, iNSGT."""
    # TODO(synk): exact NSGT dual windows / FFT config of the wrapped `nsgt` object
    # is not available; synthesis atoms are deterministic synthetic stand-ins.
    C_list, A_list = [], []
    shape = None
    for X, (ar, ai) in zip(X_list, atoms):
        shape = X.shape[:-1]                              # complex shape (view_as_complex)
        F, T, M = shape[-3], shape[-2], shape[-1]
        B = int(np.prod(shape[:-3]))                      # handles 6-dim and 7-dim inputs
        # early bf16 cast so the transpose/pack copies below move half the bytes
        Xb = X.astype(jnp.bfloat16).reshape((B, F, T, M, 2))
        Xb = jnp.moveaxis(Xb, 2, 0)                       # (T, B, F, M, 2) == moveaxis(-2, 0)
        # keep the trailing (re, im) axis interleaved in K -> no re/im split, no K concat
        C_list.append(Xb.reshape(T, B, F * M * 2))
        # matching interleaved atoms:  Re((xr + i xi)(ar + i ai)) = xr*ar + xi*(-ai)
        A_list.append(jnp.stack([ar, -ai], axis=1)
                      .reshape(F * M * 2, SLICE_LEN).astype(jnp.bfloat16))
    y = fused_slice_synthesis(C_list, A_list, length)     # (B, t_pad*HOP)
    y = y[:, :length]
    return y.reshape(shape[:-3] + (-1,))                  # y.view(*shape[:-3], -1)


# ------------------------------ reference ---------------------------------- #
def reference(X_list, length, atoms):
    """Exact overlap-add reference on bf16-quantized inputs (matches kernel feed)."""
    def q(a):
        return np.asarray(jnp.asarray(a).astype(jnp.bfloat16).astype(jnp.float32),
                          dtype=np.float64)

    total, S_, C_ = None, None, None
    for X, (ar, ai) in zip(X_list, atoms):
        Xn = np.asarray(X)
        xr, xi = Xn[..., 0], Xn[..., 1]
        S_, C_, F, T, M = xr.shape
        cr = np.moveaxis(xr.reshape(S_ * C_, F, T, M), -2, 0).reshape(T, S_ * C_, F * M)
        ci = np.moveaxis(xi.reshape(S_ * C_, F, T, M), -2, 0).reshape(T, S_ * C_, F * M)
        st = (np.einsum("tbk,kn->tbn", q(cr), q(ar))
              - np.einsum("tbk,kn->tbn", q(ci), q(ai)))
        buf = np.zeros((S_ * C_, (T + 1) * HOP), np.float64)
        for t in range(T):
            buf[:, t * HOP:t * HOP + SLICE_LEN] += st[t]
        total = buf if total is None else total + buf
    return total[:, :length].reshape(S_, C_, length)


if __name__ == "__main__":
    key = jax.random.PRNGKey(0)
    S, C = 2, 2          # nb_samples, nb_channels
    T = 4                # nb_slices (time frames of the sliced transform)
    length = 600         # requested output length (<= (T+1)*HOP = 640)
    bucket_cfg = [(8, 16), (4, 32)]   # (F_bins, M_frames) per frequency bucket

    atoms = [make_synth_atoms(F, M, f_offset=1.0 + 4.0 * i)
             for i, (F, M) in enumerate(bucket_cfg)]

    X_list = []
    for (F, M) in bucket_cfg:
        key, k = jax.random.split(key)
        # real-stacked sliCQ coefficients: (nb_samples, nb_channels, F, T, M, 2)
        X_list.append(jax.random.normal(k, (S, C, F, T, M, 2), dtype=jnp.float32))

    y = insgt_sl_forward(X_list, length, atoms)
    y = jax.block_until_ready(y)

    y_ref = reference(X_list, length, atoms)
    assert y.shape == (S, C, length), y.shape
    np.testing.assert_allclose(np.asarray(y), np.asarray(y_ref), rtol=1e-2, atol=1e-2)
    print("KERNEL_OK")
</pallas_src>

<mosaic_0001>
module attributes {stable_mosaic.version = 11 : i64} {
  func.func @kernel(%arg0: i32, %arg1: memref<5x4x256xbf16, #tpu.memory_space<vmem>>, %arg2: memref<5x4x256xbf16, #tpu.memory_space<vmem>>, %arg3: memref<256x256xbf16, #tpu.memory_space<vmem>>, %arg4: memref<256x256xbf16, #tpu.memory_space<vmem>>, %arg5: memref<4x640xf32, #tpu.memory_space<vmem>>) attributes {dimension_semantics = [#tpu.dimension_semantics<parallel>], iteration_bounds = array<i64: 1>, scalar_prefetch = 0 : i64, scratch_operands = 0 : i64, tpu.core_type = #tpu.core_type<tc>, window_params = [{transform_indices = @transform_0, window_bounds = array<i64: 5, 4, 256>}, {transform_indices = @transform_1, window_bounds = array<i64: 5, 4, 256>}, {pipeline_mode = #tpu.pipeline_mode<synchronous>, transform_indices = @transform_2, window_bounds = array<i64: 256, 256>}, {pipeline_mode = #tpu.pipeline_mode<synchronous>, transform_indices = @transform_3, window_bounds = array<i64: 256, 256>}, {transform_indices = @transform_4, window_bounds = array<i64: 4, 640>}]} {
    %cst = arith.constant 0.000000e+00 : f32
    %0 = vector.broadcast %cst : f32 to vector<4x128xf32>
    %c0 = arith.constant 0 : index
    %c0_0 = arith.constant 0 : index
    %c0_1 = arith.constant 0 : index
    %1 = vector.load %arg1[%c0, %c0_0, %c0_1] : memref<5x4x256xbf16, #tpu.memory_space<vmem>>, vector<1x4x256xbf16>
    %2 = vector.shape_cast %1 : vector<1x4x256xbf16> to vector<4x256xbf16>
    %c0_2 = arith.constant 0 : index
    %c0_3 = arith.constant 0 : index
    %3 = vector.load %arg3[%c0_2, %c0_3] : memref<256x256xbf16, #tpu.memory_space<vmem>>, vector<256x256xbf16>
    %cst_4 = arith.constant dense<0.000000e+00> : vector<4x256xf32>
    %4 = tpu.matmul %2, %3, %cst_4 {dimension_numbers = #tpu.dot_dimension_numbers<[1], [0], [0], [1], [0, 0, 1, 1], [], []>} : vector<4x256xbf16>, vector<256x256xbf16>, vector<4x256xf32> -> vector<4x256xf32>
    %c0_5 = arith.constant 0 : index
    %c0_6 = arith.constant 0 : index
    %c0_7 = arith.constant 0 : index
    %5 = vector.load %arg2[%c0_5, %c0_6, %c0_7] : memref<5x4x256xbf16, #tpu.memory_space<vmem>>, vector<1x4x256xbf16>
    %6 = vector.shape_cast %5 : vector<1x4x256xbf16> to vector<4x256xbf16>
    %c0_8 = arith.constant 0 : index
    %c0_9 = arith.constant 0 : index
    %7 = vector.load %arg4[%c0_8, %c0_9] : memref<256x256xbf16, #tpu.memory_space<vmem>>, vector<256x256xbf16>
    %cst_10 = arith.constant dense<0.000000e+00> : vector<4x256xf32>
    %8 = tpu.matmul %6, %7, %cst_10 {dimension_numbers = #tpu.dot_dimension_numbers<[1], [0], [0], [1], [0, 0, 1, 1], [], []>} : vector<4x256xbf16>, vector<256x256xbf16>, vector<4x256xf32> -> vector<4x256xf32>
    %9 = arith.addf %4, %8 : vector<4x256xf32>
    %10 = vector.extract_strided_slice %9 {offsets = [0, 0], sizes = [4, 128], strides = [1, 1]} : vector<4x256xf32> to vector<4x128xf32>
    %11 = arith.addf %0, %10 : vector<4x128xf32>
    %c0_11 = arith.constant 0 : index
    %c0_12 = arith.constant 0 : index
    %12 = vector.load %arg5[%c0_11, %c0_12] : memref<4x640xf32, #tpu.memory_space<vmem>>, vector<4x128xf32>
    tpu.vector_store %arg5[%c0_11, %c0_12], %11 {strides = array<i32>} : memref<4x640xf32, #tpu.memory_space<vmem>>, vector<4x128xf32>,
    %13 = vector.extract_strided_slice %9 {offsets = [0, 128], sizes = [4, 128], strides = [1, 1]} : vector<4x256xf32> to vector<4x128xf32>
    %c1 = arith.constant 1 : index
    %c0_13 = arith.constant 0 : index
    %c0_14 = arith.constant 0 : index
    %14 = vector.load %arg1[%c1, %c0_13, %c0_14] : memref<5x4x256xbf16, #tpu.memory_space<vmem>>, vector<1x4x256xbf16>
    %15 = vector.shape_cast %14 : vector<1x4x256xbf16> to vector<4x256xbf16>
    %c0_15 = arith.constant 0 : index
    %c0_16 = arith.constant 0 : index
    %16 = vector.load %arg3[%c0_15, %c0_16] : memref<256x256xbf16, #tpu.memory_space<vmem>>, vector<256x256xbf16>
    %cst_17 = arith.constant dense<0.000000e+00> : vector<4x256xf32>
    %17 = tpu.matmul %15, %16, %cst_17 {dimension_numbers = #tpu.dot_dimension_numbers<[1], [0], [0], [1], [0, 0, 1, 1], [], []>} : vector<4x256xbf16>, vector<256x256xbf16>, vector<4x256xf32> -> vector<4x256xf32>
    %c1_18 = arith.constant 1 : index
    %c0_19 = arith.constant 0 : index
    %c0_20 = arith.constant 0 : index
    %18 = vector.load %arg2[%c1_18, %c0_19, %c0_20] : memref<5x4x256xbf16, #tpu.memory_space<vmem>>, vector<1x4x256xbf16>
    %19 = vector.shape_cast %18 : vector<1x4x256xbf16> to vector<4x256xbf16>
    %c0_21 = arith.constant 0 : index
    %c0_22 = arith.constant 0 : index
    %20 = vector.load %arg4[%c0_21, %c0_22] : memref<256x256xbf16, #tpu.memory_space<vmem>>, vector<256x256xbf16>
    %cst_23 = arith.constant dense<0.000000e+00> : vector<4x256xf32>
    %21 = tpu.matmul %19, %20, %cst_23 {dimension_numbers = #tpu.dot_dimension_numbers<[1], [0], [0], [1], [0, 0, 1, 1], [], []>} : vector<4x256xbf16>, vector<256x256xbf16>, vector<4x256xf32> -> vector<4x256xf32>
    %22 = arith.addf %17, %21 : vector<4x256xf32>
    %23 = vector.extract_strided_slice %22 {offsets = [0, 0], sizes = [4, 128], strides = [1, 1]} : vector<4x256xf32> to vector<4x128xf32>
    %24 = arith.addf %13, %23 : vector<4x128xf32>
    %c0_24 = arith.constant 0 : index
    %c128 = arith.constant 128 : index
    %25 = vector.load %arg5[%c0_24, %c128] : memref<4x640xf32, #tpu.memory_space<vmem>>, vector<4x128xf32>
    tpu.vector_store %arg5[%c0_24, %c128], %24 {strides = array<i32>} : memref<4x640xf32, #tpu.memory_space<vmem>>, vector<4x128xf32>,
    %26 = vector.extract_strided_slice %22 {offsets = [0, 128], sizes = [4, 128], strides = [1, 1]} : vector<4x256xf32> to vector<4x128xf32>
    %c2 = arith.constant 2 : index
    %c0_25 = arith.constant 0 : index
    %c0_26 = arith.constant 0 : index
    %27 = vector.load %arg1[%c2, %c0_25, %c0_26] : memref<5x4x256xbf16, #tpu.memory_space<vmem>>, vector<1x4x256xbf16>
    %28 = vector.shape_cast %27 : vector<1x4x256xbf16> to vector<4x256xbf16>
    %c0_27 = arith.constant 0 : index
    %c0_28 = arith.constant 0 : index
    %29 = vector.load %arg3[%c0_27, %c0_28] : memref<256x256xbf16, #tpu.memory_space<vmem>>, vector<256x256xbf16>
    %cst_29 = arith.constant dense<0.000000e+00> : vector<4x256xf32>
    %30 = tpu.matmul %28, %29, %cst_29 {dimension_numbers = #tpu.dot_dimension_numbers<[1], [0], [0], [1], [0, 0, 1, 1], [], []>} : vector<4x256xbf16>, vector<256x256xbf16>, vector<4x256xf32> -> vector<4x256xf32>
    %c2_30 = arith.constant 2 : index
    %c0_31 = arith.constant 0 : index
    %c0_32 = arith.constant 0 : index
    %31 = vector.load %arg2[%c2_30, %c0_31, %c0_32] : memref<5x4x256xbf16, #tpu.memory_space<vmem>>, vector<1x4x256xbf16>
    %32 = vector.shape_cast %31 : vector<1x4x256xbf16> to vector<4x256xbf16>
    %c0_33 = arith.constant 0 : index
    %c0_34 = arith.constant 0 : index
    %33 = vector.load %arg4[%c0_33, %c0_34] : memref<256x256xbf16, #tpu.memory_space<vmem>>, vector<256x256xbf16>
    %cst_35 = arith.constant dense<0.000000e+00> : vector<4x256xf32>
    %34 = tpu.matmul %32, %33, %cst_35 {dimension_numbers = #tpu.dot_dimension_numbers<[1], [0], [0], [1], [0, 0, 1, 1], [], []>} : vector<4x256xbf16>, vector<256x256xbf16>, vector<4x256xf32> -> vector<4x256xf32>
    %35 = arith.addf %30, %34 : vector<4x256xf32>
    %36 = vector.extract_strided_slice %35 {offsets = [0, 0], sizes = [4, 128], strides = [1, 1]} : vector<4x256xf32> to vector<4x128xf32>
    %37 = arith.addf %26, %36 : vector<4x128xf32>
    %c0_36 = arith.constant 0 : index
    %c256 = arith.constant 256 : index
    %38 = vector.load %arg5[%c0_36, %c256] : memref<4x640xf32, #tpu.memory_space<vmem>>, vector<4x128xf32>
    tpu.vector_store %arg5[%c0_36, %c256], %37 {strides = array<i32>} : memref<4x640xf32, #tpu.memory_space<vmem>>, vector<4x128xf32>,
    %39 = vector.extract_strided_slice %35 {offsets = [0, 128], sizes = [4, 128], strides = [1, 1]} : vector<4x256xf32> to vector<4x128xf32>
    %c3 = arith.constant 3 : index
    %c0_37 = arith.constant 0 : index
    %c0_38 = arith.constant 0 : index
    %40 = vector.load %arg1[%c3, %c0_37, %c0_38] : memref<5x4x256xbf16, #tpu.memory_space<vmem>>, vector<1x4x256xbf16>
    %41 = vector.shape_cast %40 : vector<1x4x256xbf16> to vector<4x256xbf16>
    %c0_39 = arith.constant 0 : index
    %c0_40 = arith.constant 0 : index
    %42 = vector.load %arg3[%c0_39, %c0_40] : memref<256x256xbf16, #tpu.memory_space<vmem>>, vector<256x256xbf16>
    %cst_41 = arith.constant dense<0.000000e+00> : vector<4x256xf32>
    %43 = tpu.matmul %41, %42, %cst_41 {dimension_numbers = #tpu.dot_dimension_numbers<[1], [0], [0], [1], [0, 0, 1, 1], [], []>} : vector<4x256xbf16>, vector<256x256xbf16>, vector<4x256xf32> -> vector<4x256xf32>
    %c3_42 = arith.constant 3 : index
    %c0_43 = arith.constant 0 : index
    %c0_44 = arith.constant 0 : index
    %44 = vector.load %arg2[%c3_42, %c0_43, %c0_44] : memref<5x4x256xbf16, #tpu.memory_space<vmem>>, vector<1x4x256xbf16>
    %45 = vector.shape_cast %44 : vector<1x4x256xbf16> to vector<4x256xbf16>
    %c0_45 = arith.constant 0 : index
    %c0_46 = arith.constant 0 : index
    %46 = vector.load %arg4[%c0_45, %c0_46] : memref<256x256xbf16, #tpu.memory_space<vmem>>, vector<256x256xbf16>
    %cst_47 = arith.constant dense<0.000000e+00> : vector<4x256xf32>
    %47 = tpu.matmul %45, %46, %cst_47 {dimension_numbers = #tpu.dot_dimension_numbers<[1], [0], [0], [1], [0, 0, 1, 1], [], []>} : vector<4x256xbf16>, vector<256x256xbf16>, vector<4x256xf32> -> vector<4x256xf32>
    %48 = arith.addf %43, %47 : vector<4x256xf32>
    %49 = vector.extract_strided_slice %48 {offsets = [0, 0], sizes = [4, 128], strides = [1, 1]} : vector<4x256xf32> to vector<4x128xf32>
    %50 = arith.addf %39, %49 : vector<4x128xf32>
    %c0_48 = arith.constant 0 : index
    %c384 = arith.constant 384 : index
    %51 = vector.load %arg5[%c0_48, %c384] : memref<4x640xf32, #tpu.memory_space<vmem>>, vector<4x128xf32>
    tpu.vector_store %arg5[%c0_48, %c384], %50 {strides = array<i32>} : memref<4x640xf32, #tpu.memory_space<vmem>>, vector<4x128xf32>,
    %52 = vector.extract_strided_slice %48 {offsets = [0, 128], sizes = [4, 128], strides = [1, 1]} : vector<4x256xf32> to vector<4x128xf32>
    %c4 = arith.constant 4 : index
    %c0_49 = arith.constant 0 : index
    %c0_50 = arith.constant 0 : index
    %53 = vector.load %arg1[%c4, %c0_49, %c0_50] : memref<5x4x256xbf16, #tpu.memory_space<vmem>>, vector<1x4x256xbf16>
    %54 = vector.shape_cast %53 : vector<1x4x256xbf16> to vector<4x256xbf16>
    %c0_51 = arith.constant 0 : index
    %c0_52 = arith.constant 0 : index
    %55 = vector.load %arg3[%c0_51, %c0_52] : memref<256x256xbf16, #tpu.memory_space<vmem>>, vector<256x256xbf16>
    %cst_53 = arith.constant dense<0.000000e+00> : vector<4x256xf32>
    %56 = tpu.matmul %54, %55, %cst_53 {dimension_numbers = #tpu.dot_dimension_numbers<[1], [0], [0], [1], [0, 0, 1, 1], [], []>} : vector<4x256xbf16>, vector<256x256xbf16>, vector<4x256xf32> -> vector<4x256xf32>
    %c4_54 = arith.constant 4 : index
    %c0_55 = arith.constant 0 : index
    %c0_56 = arith.constant 0 : index
    %57 = vector.load %arg2[%c4_54, %c0_55, %c0_56] : memref<5x4x256xbf16, #tpu.memory_space<vmem>>, vector<1x4x256xbf16>
    %58 = vector.shape_cast %57 : vector<1x4x256xbf16> to vector<4x256xbf16>
    %c0_57 = arith.constant 0 : index
    %c0_58 = arith.constant 0 : index
    %59 = vector.load %arg4[%c0_57, %c0_58] : memref<256x256xbf16, #tpu.memory_space<vmem>>, vector<256x256xbf16>
    %cst_59 = arith.constant dense<0.000000e+00> : vector<4x256xf32>
    %60 = tpu.matmul %58, %59, %cst_59 {dimension_numbers = #tpu.dot_dimension_numbers<[1], [0], [0], [1], [0, 0, 1, 1], [], []>} : vector<4x256xbf16>, vector<256x256xbf16>, vector<4x256xf32> -> vector<4x256xf32>
    %61 = arith.addf %56, %60 : vector<4x256xf32>
    %62 = vector.extract_strided_slice %61 {offsets = [0, 0], sizes = [4, 128], strides = [1, 1]} : vector<4x256xf32> to vector<4x128xf32>
    %63 = arith.addf %52, %62 : vector<4x128xf32>
    %c0_60 = arith.constant 0 : index
    %c512 = arith.constant 512 : index
    %64 = vector.load %arg5[%c0_60, %c512] : memref<4x640xf32, #tpu.memory_space<vmem>>, vector<4x128xf32>
    tpu.vector_store %arg5[%c0_60, %c512], %63 {strides = array<i32>} : memref<4x640xf32, #tpu.memory_space<vmem>>, vector<4x128xf32>,
    return
  }
  func.func @transform_0(%arg0: i32) -> (i32, i32, i32) {
    %c0_i32 = arith.constant 0 : i32
    %c0_i32_0 = arith.constant 0 : i32
    %c0_i32_1 = arith.constant 0 : i32
    return %arg0, %c0_i32, %c0_i32_0 : i32, i32, i32
  }
  func.func @transform_1(%arg0: i32) -> (i32, i32, i32) {
    %c0_i32 = arith.constant 0 : i32
    %c0_i32_0 = arith.constant 0 : i32
    %c0_i32_1 = arith.constant 0 : i32
    return %arg0, %c0_i32, %c0_i32_0 : i32, i32, i32
  }
  func.func @transform_2(%arg0: i32) -> (i32, i32) {
    %c0_i32 = arith.constant 0 : i32
    %c0_i32_0 = arith.constant 0 : i32
    %c0_i32_1 = arith.constant 0 : i32
    return %c0_i32, %c0_i32_0 : i32, i32
  }
  func.func @transform_3(%arg0: i32) -> (i32, i32) {
    %c0_i32 = arith.constant 0 : i32
    %c0_i32_0 = arith.constant 0 : i32
    %c0_i32_1 = arith.constant 0 : i32
    return %c0_i32, %c0_i32_0 : i32, i32
  }
  func.func @transform_4(%arg0: i32) -> (i32, i32) {
    %c0_i32 = arith.constant 0 : i32
    %c0_i32_0 = arith.constant 0 : i32
    return %c0_i32, %arg0 : i32, i32
  }
}

module attributes {stable_mosaic.version = 11 : i64} {
  func.func @kernel(%arg0: i32, %arg1: memref<5x4x256xbf16, #tpu.memory_space<vmem>>, %arg2: memref<5x4x256xbf16, #tpu.memory_space<vmem>>, %arg3: memref<256x256xbf16, #tpu.memory_space<vmem>>, %arg4: memref<256x256xbf16, #tpu.memory_space<vmem>>, %arg5: memref<4x640xf32, #tpu.memory_space<vmem>>) attributes {dimension_semantics = [#tpu.dimension_semantics<parallel>], iteration_bounds = array<i64: 1>, scalar_prefetch = 0 : i64, scratch_operands = 0 : i64, tpu.core_type = #tpu.core_type<tc>, window_params = [{transform_indices = @transform_0, window_bounds = array<i64: 5, 4, 256>}, {transform_indices = @transform_1, window_bounds = array<i64: 5, 4, 256>}, {pipeline_mode = #tpu.pipeline_mode<synchronous>, transform_indices = @transform_2, window_bounds = array<i64: 256, 256>}, {pipeline_mode = #tpu.pipeline_mode<synchronous>, transform_indices = @transform_3, window_bounds = array<i64: 256, 256>}, {transform_indices = @transform_4, window_bounds = array<i64: 4, 640>}]} {
    %cst = arith.constant 0.000000e+00 : f32
    %0 = vector.broadcast %cst : f32 to vector<4x128xf32>
    %c0 = arith.constant 0 : index
    %c0_0 = arith.constant 0 : index
    %c0_1 = arith.constant 0 : index
    %1 = vector.load %arg1[%c0, %c0_0, %c0_1] : memref<5x4x256xbf16, #tpu.memory_space<vmem>>, vector<1x4x256xbf16>
    %2 = vector.shape_cast %1 : vector<1x4x256xbf16> to vector<4x256xbf16>
    %c0_2 = arith.constant 0 : index
    %c0_3 = arith.constant 0 : index
    %3 = vector.load %arg3[%c0_2, %c0_3] : memref<256x256xbf16, #tpu.memory_space<vmem>>, vector<256x256xbf16>
    %cst_4 = arith.constant dense<0.000000e+00> : vector<4x256xf32>
    %4 = tpu.matmul %2, %3, %cst_4 {dimension_numbers = #tpu.dot_dimension_numbers<[1], [0], [0], [1], [0, 0, 1, 1], [], []>} : vector<4x256xbf16>, vector<256x256xbf16>, vector<4x256xf32> -> vector<4x256xf32>
    %c0_5 = arith.constant 0 : index
    %c0_6 = arith.constant 0 : index
    %c0_7 = arith.constant 0 : index
    %5 = vector.load %arg2[%c0_5, %c0_6, %c0_7] : memref<5x4x256xbf16, #tpu.memory_space<vmem>>, vector<1x4x256xbf16>
    %6 = vector.shape_cast %5 : vector<1x4x256xbf16> to vector<4x256xbf16>
    %c0_8 = arith.constant 0 : index
    %c0_9 = arith.constant 0 : index
    %7 = vector.load %arg4[%c0_8, %c0_9] : memref<256x256xbf16, #tpu.memory_space<vmem>>, vector<256x256xbf16>
    %cst_10 = arith.constant dense<0.000000e+00> : vector<4x256xf32>
    %8 = tpu.matmul %6, %7, %cst_10 {dimension_numbers = #tpu.dot_dimension_numbers<[1], [0], [0], [1], [0, 0, 1, 1], [], []>} : vector<4x256xbf16>, vector<256x256xbf16>, vector<4x256xf32> -> vector<4x256xf32>
    %9 = arith.addf %4, %8 : vector<4x256xf32>
    %10 = vector.extract_strided_slice %9 {offsets = [0, 0], sizes = [4, 128], strides = [1, 1]} : vector<4x256xf32> to vector<4x128xf32>
    %11 = arith.addf %0, %10 : vector<4x128xf32>
    %c0_11 = arith.constant 0 : index
    %c0_12 = arith.constant 0 : index
    %12 = vector.load %arg5[%c0_11, %c0_12] : memref<4x640xf32, #tpu.memory_space<vmem>>, vector<4x128xf32>
    tpu.vector_store %arg5[%c0_11, %c0_12], %11 {strides = array<i32>} : memref<4x640xf32, #tpu.memory_space<vmem>>, vector<4x128xf32>,
    %13 = vector.extract_strided_slice %9 {offsets = [0, 128], sizes = [4, 128], strides = [1, 1]} : vector<4x256xf32> to vector<4x128xf32>
    %c1 = arith.constant 1 : index
    %c0_13 = arith.constant 0 : index
    %c0_14 = arith.constant 0 : index
    %14 = vector.load %arg1[%c1, %c0_13, %c0_14] : memref<5x4x256xbf16, #tpu.memory_space<vmem>>, vector<1x4x256xbf16>
    %15 = vector.shape_cast %14 : vector<1x4x256xbf16> to vector<4x256xbf16>
    %c0_15 = arith.constant 0 : index
    %c0_16 = arith.constant 0 : index
    %16 = vector.load %arg3[%c0_15, %c0_16] : memref<256x256xbf16, #tpu.memory_space<vmem>>, vector<256x256xbf16>
    %cst_17 = arith.constant dense<0.000000e+00> : vector<4x256xf32>
    %17 = tpu.matmul %15, %16, %cst_17 {dimension_numbers = #tpu.dot_dimension_numbers<[1], [0], [0], [1], [0, 0, 1, 1], [], []>} : vector<4x256xbf16>, vector<256x256xbf16>, vector<4x256xf32> -> vector<4x256xf32>
    %c1_18 = arith.constant 1 : index
    %c0_19 = arith.constant 0 : index
    %c0_20 = arith.constant 0 : index
    %18 = vector.load %arg2[%c1_18, %c0_19, %c0_20] : memref<5x4x256xbf16, #tpu.memory_space<vmem>>, vector<1x4x256xbf16>
    %19 = vector.shape_cast %18 : vector<1x4x256xbf16> to vector<4x256xbf16>
    %c0_21 = arith.constant 0 : index
    %c0_22 = arith.constant 0 : index
    %20 = vector.load %arg4[%c0_21, %c0_22] : memref<256x256xbf16, #tpu.memory_space<vmem>>, vector<256x256xbf16>
    %cst_23 = arith.constant dense<0.000000e+00> : vector<4x256xf32>
    %21 = tpu.matmul %19, %20, %cst_23 {dimension_numbers = #tpu.dot_dimension_numbers<[1], [0], [0], [1], [0, 0, 1, 1], [], []>} : vector<4x256xbf16>, vector<256x256xbf16>, vector<4x256xf32> -> vector<4x256xf32>
    %22 = arith.addf %17, %21 : vector<4x256xf32>
    %23 = vector.extract_strided_slice %22 {offsets = [0, 0], sizes = [4, 128], strides = [1, 1]} : vector<4x256xf32> to vector<4x128xf32>
    %24 = arith.addf %13, %23 : vector<4x128xf32>
    %c0_24 = arith.constant 0 : index
    %c128 = arith.constant 128 : index
    %25 = vector.load %arg5[%c0_24, %c128] : memref<4x640xf32, #tpu.memory_space<vmem>>, vector<4x128xf32>
    tpu.vector_store %arg5[%c0_24, %c128], %24 {strides = array<i32>} : memref<4x640xf32, #tpu.memory_space<vmem>>, vector<4x128xf32>,
    %26 = vector.extract_strided_slice %22 {offsets = [0, 128], sizes = [4, 128], strides = [1, 1]} : vector<4x256xf32> to vector<4x128xf32>
    %c2 = arith.constant 2 : index
    %c0_25 = arith.constant 0 : index
    %c0_26 = arith.constant 0 : index
    %27 = vector.load %arg1[%c2, %c0_25, %c0_26] : memref<5x4x256xbf16, #tpu.memory_space<vmem>>, vector<1x4x256xbf16>
    %28 = vector.shape_cast %27 : vector<1x4x256xbf16> to vector<4x256xbf16>
    %c0_27 = arith.constant 0 : index
    %c0_28 = arith.constant 0 : index
    %29 = vector.load %arg3[%c0_27, %c0_28] : memref<256x256xbf16, #tpu.memory_space<vmem>>, vector<256x256xbf16>
    %cst_29 = arith.constant dense<0.000000e+00> : vector<4x256xf32>
    %30 = tpu.matmul %28, %29, %cst_29 {dimension_numbers = #tpu.dot_dimension_numbers<[1], [0], [0], [1], [0, 0, 1, 1], [], []>} : vector<4x256xbf16>, vector<256x256xbf16>, vector<4x256xf32> -> vector<4x256xf32>
    %c2_30 = arith.constant 2 : index
    %c0_31 = arith.constant 0 : index
    %c0_32 = arith.constant 0 : index
    %31 = vector.load %arg2[%c2_30, %c0_31, %c0_32] : memref<5x4x256xbf16, #tpu.memory_space<vmem>>, vector<1x4x256xbf16>
    %32 = vector.shape_cast %31 : vector<1x4x256xbf16> to vector<4x256xbf16>
    %c0_33 = arith.constant 0 : index
    %c0_34 = arith.constant 0 : index
    %33 = vector.load %arg4[%c0_33, %c0_34] : memref<256x256xbf16, #tpu.memory_space<vmem>>, vector<256x256xbf16>
    %cst_35 = arith.constant dense<0.000000e+00> : vector<4x256xf32>
    %34 = tpu.matmul %32, %33, %cst_35 {dimension_numbers = #tpu.dot_dimension_numbers<[1], [0], [0], [1], [0, 0, 1, 1], [], []>} : vector<4x256xbf16>, vector<256x256xbf16>, vector<4x256xf32> -> vector<4x256xf32>
    %35 = arith.addf %30, %34 : vector<4x256xf32>
    %36 = vector.extract_strided_slice %35 {offsets = [0, 0], sizes = [4, 128], strides = [1, 1]} : vector<4x256xf32> to vector<4x128xf32>
    %37 = arith.addf %26, %36 : vector<4x128xf32>
    %c0_36 = arith.constant 0 : index
    %c256 = arith.constant 256 : index
    %38 = vector.load %arg5[%c0_36, %c256] : memref<4x640xf32, #tpu.memory_space<vmem>>, vector<4x128xf32>
    tpu.vector_store %arg5[%c0_36, %c256], %37 {strides = array<i32>} : memref<4x640xf32, #tpu.memory_space<vmem>>, vector<4x128xf32>,
    %39 = vector.extract_strided_slice %35 {offsets = [0, 128], sizes = [4, 128], strides = [1, 1]} : vector<4x256xf32> to vector<4x128xf32>
    %c3 = arith.constant 3 : index
    %c0_37 = arith.constant 0 : index
    %c0_38 = arith.constant 0 : index
    %40 = vector.load %arg1[%c3, %c0_37, %c0_38] : memref<5x4x256xbf16, #tpu.memory_space<vmem>>, vector<1x4x256xbf16>
    %41 = vector.shape_cast %40 : vector<1x4x256xbf16> to vector<4x256xbf16>
    %c0_39 = arith.constant 0 : index
    %c0_40 = arith.constant 0 : index
    %42 = vector.load %arg3[%c0_39, %c0_40] : memref<256x256xbf16, #tpu.memory_space<vmem>>, vector<256x256xbf16>
    %cst_41 = arith.constant dense<0.000000e+00> : vector<4x256xf32>
    %43 = tpu.matmul %41, %42, %cst_41 {dimension_numbers = #tpu.dot_dimension_numbers<[1], [0], [0], [1], [0, 0, 1, 1], [], []>} : vector<4x256xbf16>, vector<256x256xbf16>, vector<4x256xf32> -> vector<4x256xf32>
    %c3_42 = arith.constant 3 : index
    %c0_43 = arith.constant 0 : index
    %c0_44 = arith.constant 0 : index
    %44 = vector.load %arg2[%c3_42, %c0_43, %c0_44] : memref<5x4x256xbf16, #tpu.memory_space<vmem>>, vector<1x4x256xbf16>
    %45 = vector.shape_cast %44 : vector<1x4x256xbf16> to vector<4x256xbf16>
    %c0_45 = arith.constant 0 : index
    %c0_46 = arith.constant 0 : index
    %46 = vector.load %arg4[%c0_45, %c0_46] : memref<256x256xbf16, #tpu.memory_space<vmem>>, vector<256x256xbf16>
    %cst_47 = arith.constant dense<0.000000e+00> : vector<4x256xf32>
    %47 = tpu.matmul %45, %46, %cst_47 {dimension_numbers = #tpu.dot_dimension_numbers<[1], [0], [0], [1], [0, 0, 1, 1], [], []>} : vector<4x256xbf16>, vector<256x256xbf16>, vector<4x256xf32> -> vector<4x256xf32>
    %48 = arith.addf %43, %47 : vector<4x256xf32>
    %49 = vector.extract_strided_slice %48 {offsets = [0, 0], sizes = [4, 128], strides = [1, 1]} : vector<4x256xf32> to vector<4x128xf32>
    %50 = arith.addf %39, %49 : vector<4x128xf32>
    %c0_48 = arith.constant 0 : index
    %c384 = arith.constant 384 : index
    %51 = vector.load %arg5[%c0_48, %c384] : memref<4x640xf32, #tpu.memory_space<vmem>>, vector<4x128xf32>
    tpu.vector_store %arg5[%c0_48, %c384], %50 {strides = array<i32>} : memref<4x640xf32, #tpu.memory_space<vmem>>, vector<4x128xf32>,
    %52 = vector.extract_strided_slice %48 {offsets = [0, 128], sizes = [4, 128], strides = [1, 1]} : vector<4x256xf32> to vector<4x128xf32>
    %c4 = arith.constant 4 : index
    %c0_49 = arith.constant 0 : index
    %c0_50 = arith.constant 0 : index
    %53 = vector.load %arg1[%c4, %c0_49, %c0_50] : memref<5x4x256xbf16, #tpu.memory_space<vmem>>, vector<1x4x256xbf16>
    %54 = vector.shape_cast %53 : vector<1x4x256xbf16> to vector<4x256xbf16>
    %c0_51 = arith.constant 0 : index
    %c0_52 = arith.constant 0 : index
    %55 = vector.load %arg3[%c0_51, %c0_52] : memref<256x256xbf16, #tpu.memory_space<vmem>>, vector<256x256xbf16>
    %cst_53 = arith.constant dense<0.000000e+00> : vector<4x256xf32>
    %56 = tpu.matmul %54, %55, %cst_53 {dimension_numbers = #tpu.dot_dimension_numbers<[1], [0], [0], [1], [0, 0, 1, 1], [], []>} : vector<4x256xbf16>, vector<256x256xbf16>, vector<4x256xf32> -> vector<4x256xf32>
    %c4_54 = arith.constant 4 : index
    %c0_55 = arith.constant 0 : index
    %c0_56 = arith.constant 0 : index
    %57 = vector.load %arg2[%c4_54, %c0_55, %c0_56] : memref<5x4x256xbf16, #tpu.memory_space<vmem>>, vector<1x4x256xbf16>
    %58 = vector.shape_cast %57 : vector<1x4x256xbf16> to vector<4x256xbf16>
    %c0_57 = arith.constant 0 : index
    %c0_58 = arith.constant 0 : index
    %59 = vector.load %arg4[%c0_57, %c0_58] : memref<256x256xbf16, #tpu.memory_space<vmem>>, vector<256x256xbf16>
    %cst_59 = arith.constant dense<0.000000e+00> : vector<4x256xf32>
    %60 = tpu.matmul %58, %59, %cst_59 {dimension_numbers = #tpu.dot_dimension_numbers<[1], [0], [0], [1], [0, 0, 1, 1], [], []>} : vector<4x256xbf16>, vector<256x256xbf16>, vector<4x256xf32> -> vector<4x256xf32>
    %61 = arith.addf %56, %60 : vector<4x256xf32>
    %62 = vector.extract_strided_slice %61 {offsets = [0, 0], sizes = [4, 128], strides = [1, 1]} : vector<4x256xf32> to vector<4x128xf32>
    %63 = arith.addf %52, %62 : vector<4x128xf32>
    %c0_60 = arith.constant 0 : index
    %c512 = arith.constant 512 : index
    %64 = vector.load %arg5[%c0_60, %c512] : memref<4x640xf32, #tpu.memory_space<vmem>>, vector<4x128xf32>
    tpu.vector_store %arg5[%c0_60, %c512], %63 {strides = array<i32>} : memref<4x640xf32, #tpu.memory_space<vmem>>, vector<4x128xf32>,
    return
  }
  func.func @transform_0(%arg0: i32) -> (i32, i32, i32) {
    %c0_i32 = arith.constant 0 : i32
    %c0_i32_0 = arith.constant 0 : i32
    %c0_i32_1 = arith.constant 0 : i32
    return %arg0, %c0_i32, %c0_i32_0 : i32, i32, i32
  }
  func.func @transform_1(%arg0: i32) -> (i32, i32, i32) {
    %c0_i32 = arith.constant 0 : i32
    %c0_i32_0 = arith.constant 0 : i32
    %c0_i32_1 = arith.constant 0 : i32
    return %arg0, %c0_i32, %c0_i32_0 : i32, i32, i32
  }
  func.func @transform_2(%arg0: i32) -> (i32, i32) {
    %c0_i32 = arith.constant 0 : i32
    %c0_i32_0 = arith.constant 0 : i32
    %c0_i32_1 = arith.constant 0 : i32
    return %c0_i32, %c0_i32_0 : i32, i32
  }
  func.func @transform_3(%arg0: i32) -> (i32, i32) {
    %c0_i32 = arith.constant 0 : i32
    %c0_i32_0 = arith.constant 0 : i32
    %c0_i32_1 = arith.constant 0 : i32
    return %c0_i32, %c0_i32_0 : i32, i32
  }
  func.func @transform_4(%arg0: i32) -> (i32, i32) {
    %c0_i32 = arith.constant 0 : i32
    %c0_i32_0 = arith.constant 0 : i32
    return %c0_i32, %arg0 : i32, i32
  }
}

</mosaic_0001>

<llo_original>
// kernel: tpu_custom_call.1
$region0: #{tpu_custom_call.1}
  #allocation0 [shape = 'u32[]', space=smem, size = 0x4, offset = 0x4, fixed_abs, tag = 'smem constant byte address 0x4 - core index']
  #allocation1 [shape = 'u32[144,128]{1,0:T(1,128)}', space=vmem, size = 0x12000, scoped, tag = 'internal scratch']
  %s0 = inlined_call_operand.hbm [shape: bf16[5,4,256], index: 0, kind: input, shape index: {}]
  %s1 = inlined_call_operand.hbm [shape: bf16[5,4,256], index: 1, kind: input, shape index: {}]
  %s2 = inlined_call_operand.hbm [shape: bf16[256,256], index: 2, kind: input, shape index: {}]
  %s3 = inlined_call_operand.hbm [shape: bf16[256,256], index: 3, kind: input, shape index: {}]
  %s4 = inlined_call_operand.hbm [shape: f32[4,640], index: 4, kind: output, shape index: {}]
  %s5 = sld [smem:[#allocation0]]
  $region42: #{tpu_custom_call.1} parent=0
    _
  %s7 = ssub.s32 1, %s5
  %s8 = scalar_select 0, %s7, %s5
  $region1: #{tpu_custom_call.1} parent=0
    #allocation2 [shape = 'u8[10240]{0}', space=vmem, size = 0x2800, scoped, tag = 'input window, operand 0, single buffered']
    #allocation3 [shape = 's32[1]{0}', space=sflag, size = 0x4, scoped, tag = 'scoped memory for tpu_custom_call.1']
    #allocation4 [shape = 's32[1]{0}', space=sflag, size = 0x4, scoped, tag = 'scoped memory for tpu_custom_call.1']
    #allocation5 [shape = 'u8[10240]{0}', space=vmem, size = 0x2800, scoped, tag = 'input window, operand 1, single buffered']
    #allocation6 [shape = 's32[1]{0}', space=sflag, size = 0x4, scoped, tag = 'scoped memory for tpu_custom_call.1']
    #allocation7 [shape = 'u8[131072]{0}', space=vmem, size = 0x20000, scoped, tag = 'input window, operand 2, single buffered']
    #allocation8 [shape = 'u8[131072]{0}', space=vmem, size = 0x20000, scoped, tag = 'input window, operand 3, single buffered']
    #allocation9 [shape = 's32[1]{0}', space=sflag, size = 0x4, scoped, tag = 'scoped memory for tpu_custom_call.1']
    #allocation10 [shape = 'u8[10240]{0}', space=vmem, size = 0x2800, scoped, tag = 'output window, operand 0, single buffered']
    %9 = vsyncpa [#allocation3], 0
    %10 = vsyncpa [#allocation6], 0
    %11 = vsyncpa [#allocation9], 0
    %12 = vsyncpa [#allocation4], 0
    // Predicated region
    $region2: #{tpu_custom_call.1} parent=1 // pred_check
      _
    $region3: #{tpu_custom_call.1} parent=1 // pred_check_branch
      %14 = sbr.rel (0) target = $region5
    $region4: #{tpu_custom_call.1} parent=1 // pred_region
      %s16 = ssub.s32 320, 320
      %17 = vsyncadd [#allocation3], %s16
      %s18 = sshll.u32 [#allocation2], 4
      %s19 = int_to_ptr.vmem [resolvable:$true] %s18
      %24 = dma.hbm_to_vmem [thread:$0]  %s0, 320, %s19, [#allocation3], 64, 64, 4
    $region5: #{tpu_custom_call.1} parent=1 // pred_fallthru
      _
    // Predicated region
    $region6: #{tpu_custom_call.1} parent=1 // pred_check
      _
    $region7: #{tpu_custom_call.1} parent=1 // pred_check_branch
      %26 = sbr.rel (0) target = $region9
    $region8: #{tpu_custom_call.1} parent=1 // pred_region
      %s28 = ssub.s32 320, 320
      %29 = vsyncadd [#allocation6], %s28
      %s30 = sshll.u32 [#allocation5], 4
      %s31 = int_to_ptr.vmem [resolvable:$true] %s30
      %36 = dma.hbm_to_vmem [thread:$0]  %s1, 320, %s31, [#allocation6], 64, 64, 4
    $region9: #{tpu_custom_call.1} parent=1 // pred_fallthru
      _
    // Predicated region
    $region10: #{tpu_custom_call.1} parent=1 // pred_check
      _
    $region11: #{tpu_custom_call.1} parent=1 // pred_check_branch
      %38 = sbr.rel (0) target = $region13
    $region12: #{tpu_custom_call.1} parent=1 // pred_region
      %s40 = ssub.s32 4096, 4096
      %41 = vsyncadd [#allocation6], %s40
      %s42 = sshll.u32 [#allocation7], 4
      %s43 = int_to_ptr.vmem [resolvable:$true] %s42
      %48 = dma.hbm_to_vmem [thread:$0]  %s2, 4096, %s43, [#allocation6], 128, 128, 8
    $region13: #{tpu_custom_call.1} parent=1 // pred_fallthru
      _
    // Predicated region
    $region14: #{tpu_custom_call.1} parent=1 // pred_check
      _
    $region15: #{tpu_custom_call.1} parent=1 // pred_check_branch
      %50 = sbr.rel (0) target = $region17
    $region16: #{tpu_custom_call.1} parent=1 // pred_region
      %s52 = ssub.s32 4096, 4096
      %53 = vsyncadd [#allocation9], %s52
      %s54 = sshll.u32 [#allocation8], 4
      %s55 = int_to_ptr.vmem [resolvable:$true] %s54
      %60 = dma.hbm_to_vmem [thread:$0]  %s3, 4096, %s55, [#allocation9], 128, 128, 8
    $region17: #{tpu_custom_call.1} parent=1 // pred_fallthru
      _
    // Predicated region
    $region18: #{tpu_custom_call.1} parent=1 // pred_check
      _
    $region19: #{tpu_custom_call.1} parent=1 // pred_check_branch
      %62 = sbr.rel (0) target = $region21
    $region20: #{tpu_custom_call.1} parent=1 // pred_region
      %63 = dma.done [#allocation3], 320
    $region21: #{tpu_custom_call.1} parent=1 // pred_fallthru
      _
    // Predicated region
    $region22: #{tpu_custom_call.1} parent=1 // pred_check
      _
    $region23: #{tpu_custom_call.1} parent=1 // pred_check_branch
      %65 = sbr.rel (0) target = $region25
    $region24: #{tpu_custom_call.1} parent=1 // pred_region
      %66 = dma.done [#allocation6], 320
    $region25: #{tpu_custom_call.1} parent=1 // pred_fallthru
      _
    // Predicated region
    $region26: #{tpu_custom_call.1} parent=1 // pred_check
      _
    $region27: #{tpu_custom_call.1} parent=1 // pred_check_branch
      %68 = sbr.rel (0) target = $region29
    $region28: #{tpu_custom_call.1} parent=1 // pred_region
      %69 = dma.done [#allocation6], 4096
    $region29: #{tpu_custom_call.1} parent=1 // pred_fallthru
      _
    // Predicated region
    $region30: #{tpu_custom_call.1} parent=1 // pred_check
      _
    $region31: #{tpu_custom_call.1} parent=1 // pred_check_branch
      %71 = sbr.rel (0) target = $region33
    $region32: #{tpu_custom_call.1} parent=1 // pred_region
      %72 = dma.done [#allocation9], 4096
    $region33: #{tpu_custom_call.1} parent=1 // pred_fallthru
      _
    %v73 = vld [vmem:[#allocation2] sm:$0xf]
    %v74 = vld [vmem:[#allocation7] sm:$0xff]
    %v75 = vld [vmem:[#allocation7 + $0x8] sm:$0xff]
    %v76 = vld [vmem:[#allocation7 + $0x10] sm:$0xff]
    %v77 = vld [vmem:[#allocation7 + $0x18] sm:$0xff]
    %v78 = vld [vmem:[#allocation7 + $0x20] sm:$0xff]
    %v79 = vld [vmem:[#allocation7 + $0x28] sm:$0xff]
    %v80 = vld [vmem:[#allocation7 + $0x30] sm:$0xff]
    %v81 = vld [vmem:[#allocation7 + $0x38] sm:$0xff]
    %v82 = vld [vmem:[#allocation7 + $0x40] sm:$0xff]
    %v83 = vld [vmem:[#allocation7 + $0x48] sm:$0xff]
    %v84 = vld [vmem:[#allocation7 + $0x50] sm:$0xff]
    %v85 = vld [vmem:[#allocation7 + $0x58] sm:$0xff]
    %v86 = vld [vmem:[#allocation7 + $0x60] sm:$0xff]
    %v87 = vld [vmem:[#allocation7 + $0x68] sm:$0xff]
    %v88 = vld [vmem:[#allocation7 + $0x70] sm:$0xff]
    %v89 = vld [vmem:[#allocation7 + $0x78] sm:$0xff]
    %v90 = vld [vmem:[#allocation7 + $0x80] sm:$0xff]
    %v91 = vld [vmem:[#allocation7 + $0x88] sm:$0xff]
    %v92 = vld [vmem:[#allocation7 + $0x90] sm:$0xff]
    %v93 = vld [vmem:[#allocation7 + $0x98] sm:$0xff]
    %v94 = vld [vmem:[#allocation7 + $0xa0] sm:$0xff]
    %v95 = vld [vmem:[#allocation7 + $0xa8] sm:$0xff]
    %v96 = vld [vmem:[#allocation7 + $0xb0] sm:$0xff]
    %v97 = vld [vmem:[#allocation7 + $0xb8] sm:$0xff]
    %v98 = vld [vmem:[#allocation7 + $0xc0] sm:$0xff]
    %v99 = vld [vmem:[#allocation7 + $0xc8] sm:$0xff]
    %v100 = vld [vmem:[#allocation7 + $0xd0] sm:$0xff]
    %v101 = vld [vmem:[#allocation7 + $0xd8] sm:$0xff]
    %v102 = vld [vmem:[#allocation7 + $0xe0] sm:$0xff]
    %v103 = vld [vmem:[#allocation7 + $0xe8] sm:$0xff]
    %v104 = vld [vmem:[#allocation7 + $0xf0] sm:$0xff]
    %v105 = vld [vmem:[#allocation7 + $0xf8] sm:$0xff]
    %v106 = vld [vmem:[#allocation5] sm:$0xf]
    %v107 = vld [vmem:[#allocation8] sm:$0xff]
    %v108 = vld [vmem:[#allocation8 + $0x8] sm:$0xff]
    %v109 = vld [vmem:[#allocation8 + $0x10] sm:$0xff]
    %v110 = vld [vmem:[#allocation8 + $0x18] sm:$0xff]
    %v111 = vld [vmem:[#allocation8 + $0x20] sm:$0xff]
    %v112 = vld [vmem:[#allocation8 + $0x28] sm:$0xff]
    %v113 = vld [vmem:[#allocation8 + $0x30] sm:$0xff]
    %v114 = vld [vmem:[#allocation8 + $0x38] sm:$0xff]
    %v115 = vld [vmem:[#allocation8 + $0x40] sm:$0xff]
    %v116 = vld [vmem:[#allocation8 + $0x48] sm:$0xff]
    %v117 = vld [vmem:[#allocation8 + $0x50] sm:$0xff]
    %v118 = vld [vmem:[#allocation8 + $0x58] sm:$0xff]
    %v119 = vld [vmem:[#allocation8 + $0x60] sm:$0xff]
    %v120 = vld [vmem:[#allocation8 + $0x68] sm:$0xff]
    %v121 = vld [vmem:[#allocation8 + $0x70] sm:$0xff]
    %v122 = vld [vmem:[#allocation8 + $0x78] sm:$0xff]
    %v123 = vld [vmem:[#allocation8 + $0x80] sm:$0xff]
    %v124 = vld [vmem:[#allocation8 + $0x88] sm:$0xff]
    %v125 = vld [vmem:[#allocation8 + $0x90] sm:$0xff]
    %v126 = vld [vmem:[#allocation8 + $0x98] sm:$0xff]
    %v127 = vld [vmem:[#allocation8 + $0xa0] sm:$0xff]
    %v128 = vld [vmem:[#allocation8 + $0xa8] sm:$0xff]
    %v129 = vld [vmem:[#allocation8 + $0xb0] sm:$0xff]
    %v130 = vld [vmem:[#allocation8 + $0xb8] sm:$0xff]
    %v131 = vld [vmem:[#allocation8 + $0xc0] sm:$0xff]
    %v132 = vld [vmem:[#allocation8 + $0xc8] sm:$0xff]
    %v133 = vld [vmem:[#allocation8 + $0xd0] sm:$0xff]
    %v134 = vld [vmem:[#allocation8 + $0xd8] sm:$0xff]
    %v135 = vld [vmem:[#allocation8 + $0xe0] sm:$0xff]
    %v136 = vld [vmem:[#allocation8 + $0xe8] sm:$0xff]
    %v137 = vld [vmem:[#allocation8 + $0xf0] sm:$0xff]
    %v138 = vld [vmem:[#allocation8 + $0xf8] sm:$0xff]
    %v141 = vunpack.c.l.s4 1983009808
    %v142 = vunpack.c.0.s8 %v141
    %v143 = vlaneseq
    %v144 = vshrl.u32 %v143, 7
    %v145 = vsub.s32 %v142, %v144
    %v146 = vrot.slane %v106, %v145
    %v147 = vcombine.high %v146, %v146
    %v182 = vunpack.c.l.b16 %v107
    %v183 = vunpack.c.h.b16 %v107
    %v184 = vunpack.c.l.b16 %v108
    %v185 = vunpack.c.h.b16 %v108
    %v186 = vunpack.c.l.b16 %v109
    %v187 = vunpack.c.h.b16 %v109
    %v188 = vunpack.c.l.b16 %v110
    %v189 = vunpack.c.h.b16 %v110
    %v190 = vunpack.c.l.b16 %v111
    %v191 = vunpack.c.h.b16 %v111
    %v192 = vunpack.c.l.b16 %v112
    %v193 = vunpack.c.h.b16 %v112
    %v194 = vunpack.c.l.b16 %v113
    %v195 = vunpack.c.h.b16 %v113
    %v196 = vunpack.c.l.b16 %v114
    %v197 = vunpack.c.h.b16 %v114
    %v198 = vunpack.c.l.b16 %v115
    %v199 = vunpack.c.h.b16 %v115
    %v200 = vunpack.c.l.b16 %v116
    %v201 = vunpack.c.h.b16 %v116
    %v202 = vunpack.c.l.b16 %v117
    %v203 = vunpack.c.h.b16 %v117
    %v204 = vunpack.c.l.b16 %v118
    %v205 = vunpack.c.h.b16 %v118
    %v206 = vunpack.c.l.b16 %v119
    %v207 = vunpack.c.h.b16 %v119
    %v208 = vunpack.c.l.b16 %v120
    %v209 = vunpack.c.h.b16 %v120
    %v210 = vunpack.c.l.b16 %v121
    %v211 = vunpack.c.h.b16 %v121
    %v212 = vunpack.c.l.b16 %v122
    %v213 = vunpack.c.h.b16 %v122
    %v214 = vunpack.c.l.b16 %v123
    %v215 = vunpack.c.h.b16 %v123
    %v216 = vunpack.c.l.b16 %v124
    %v217 = vunpack.c.h.b16 %v124
    %v218 = vunpack.c.l.b16 %v125
    %v219 = vunpack.c.h.b16 %v125
    %v220 = vunpack.c.l.b16 %v126
    %v221 = vunpack.c.h.b16 %v126
    %v222 = vunpack.c.l.b16 %v127
    %v223 = vunpack.c.h.b16 %v127
    %v224 = vunpack.c.l.b16 %v128
    %v225 = vunpack.c.h.b16 %v128
    %v226 = vunpack.c.l.b16 %v129
    %v227 = vunpack.c.h.b16 %v129
    %v228 = vunpack.c.l.b16 %v130
    %v229 = vunpack.c.h.b16 %v130
    %v230 = vunpack.c.l.b16 %v131
    %v231 = vunpack.c.h.b16 %v131
    %v232 = vunpack.c.l.b16 %v132
    %v233 = vunpack.c.h.b16 %v132
    %v234 = vunpack.c.l.b16 %v133
    %v235 = vunpack.c.h.b16 %v133
    %v236 = vunpack.c.l.b16 %v134
    %v237 = vunpack.c.h.b16 %v134
    %v238 = vunpack.c.l.b16 %v135
    %v239 = vunpack.c.h.b16 %v135
    %v240 = vunpack.c.l.b16 %v136
    %v241 = vunpack.c.h.b16 %v136
    %v242 = vunpack.c.l.b16 %v137
    %v243 = vunpack.c.h.b16 %v137
    %v244 = vunpack.c.l.b16 %v138
    %v245 = vunpack.c.h.b16 %v138
    %v246 = vpack.c.b16 %v184, %v182
    %v247 = vpack.c.b16 %v185, %v183
    %v248 = vpack.c.b16 %v188, %v186
    %v249 = vpack.c.b16 %v189, %v187
    %v250 = vpack.c.b16 %v192, %v190
    %v251 = vpack.c.b16 %v193, %v191
    %v252 = vpack.c.b16 %v196, %v194
    %v253 = vpack.c.b16 %v197, %v195
    %v254 = vpack.c.b16 %v200, %v198
    %v255 = vpack.c.b16 %v201, %v199
    %v256 = vpack.c.b16 %v204, %v202
    %v257 = vpack.c.b16 %v205, %v203
    %v258 = vpack.c.b16 %v208, %v206
    %v259 = vpack.c.b16 %v209, %v207
    %v260 = vpack.c.b16 %v212, %v210
    %v261 = vpack.c.b16 %v213, %v211
    %v262 = vpack.c.b16 %v216, %v214
    %v263 = vpack.c.b16 %v217, %v215
    %v264 = vpack.c.b16 %v220, %v218
    %v265 = vpack.c.b16 %v221, %v219
    %v266 = vpack.c.b16 %v224, %v222
    %v267 = vpack.c.b16 %v225, %v223
    %v268 = vpack.c.b16 %v228, %v226
    %v269 = vpack.c.b16 %v229, %v227
    %v270 = vpack.c.b16 %v232, %v230
    %v271 = vpack.c.b16 %v233, %v231
    %v272 = vpack.c.b16 %v236, %v234
    %v273 = vpack.c.b16 %v237, %v235
    %v274 = vpack.c.b16 %v240, %v238
    %v275 = vpack.c.b16 %v241, %v239
    %v276 = vpack.c.b16 %v244, %v242
    %v277 = vpack.c.b16 %v245, %v243
    %310 = vmatprep.subr.bf16.mxu0 %v247
    %311 = vmatpush1.bf16.msra.mxu0 %v246
    %312 = vmatprep.subr.bf16.mxu0 %v249
    %313 = vmatpush1.bf16.msra.mxu0 %v248
    %314 = vmatprep.subr.bf16.mxu0 %v251
    %315 = vmatpush1.bf16.msra.mxu0 %v250
    %316 = vmatprep.subr.bf16.mxu0 %v253
    %317 = vmatpush1.bf16.msra.mxu0 %v252
    %318 = vmatprep.subr.bf16.mxu0 %v255
    %319 = vmatpush1.bf16.msra.mxu0 %v254
    %320 = vmatprep.subr.bf16.mxu0 %v257
    %321 = vmatpush1.bf16.msra.mxu0 %v256
    %322 = vmatprep.subr.bf16.mxu0 %v259
    %323 = vmatpush1.bf16.msra.mxu0 %v258
    %324 = vmatprep.subr.bf16.mxu0 %v261
    %325 = vmatpush1.bf16.msra.mxu0 %v260
    %326 = vmatprep.subr.bf16.mxu0 %v263
    %327 = vmatpush1.bf16.msra.mxu0 %v262
    %328 = vmatprep.subr.bf16.mxu0 %v265
    %329 = vmatpush1.bf16.msra.mxu0 %v264
    %330 = vmatprep.subr.bf16.mxu0 %v267
    %331 = vmatpush1.bf16.msra.mxu0 %v266
    %332 = vmatprep.subr.bf16.mxu0 %v269
    %333 = vmatpush1.bf16.msra.mxu0 %v268
    %334 = vmatprep.subr.bf16.mxu0 %v271
    %335 = vmatpush1.bf16.msra.mxu0 %v270
    %336 = vmatprep.subr.bf16.mxu0 %v273
    %337 = vmatpush1.bf16.msra.mxu0 %v272
    %338 = vmatprep.subr.bf16.mxu0 %v275
    %339 = vmatpush1.bf16.msra.mxu0 %v274
    %340 = vmatprep.subr.bf16.mxu0 %v277
    %341 = vmatpush1.bf16.msra.mxu0 %v276
    %342 = vmatprep.mubr.bf16.mxu0 %v147
    %343 = vmatmul.mubr.bf16.gmra.mrb[0].mxu0 %v146
    %v344 = vpop.f32.mrb[0].mxu0
    %v345 = vadd.f32 0.0, %v344
    %v346 = vpop.f32.mrb[0].mxu0
    %v347 = vadd.f32 0.0, %v346
    %v348 = vpop.f32.mrb[0].mxu0
    %v349 = vpop.f32.mrb[0].mxu0
    %350 = vdwg.mxu0
    %v353 = vunpack.c.l.s4 1983009808
    %v354 = vunpack.c.0.s8 %v353
    %v355 = vlaneseq
    %v356 = vshrl.u32 %v355, 7
    %v357 = vsub.s32 %v354, %v356
    %v358 = vrot.slane %v73, %v357
    %v359 = vcombine.high %v358, %v358
    %v394 = vunpack.c.l.b16 %v74
    %v395 = vunpack.c.h.b16 %v74
    %v396 = vunpack.c.l.b16 %v75
    %v397 = vunpack.c.h.b16 %v75
    %v398 = vunpack.c.l.b16 %v76
    %v399 = vunpack.c.h.b16 %v76
    %v400 = vunpack.c.l.b16 %v77
    %v401 = vunpack.c.h.b16 %v77
    %v402 = vunpack.c.l.b16 %v78
    %v403 = vunpack.c.h.b16 %v78
    %v404 = vunpack.c.l.b16 %v79
    %v405 = vunpack.c.h.b16 %v79
    %v406 = vunpack.c.l.b16 %v80
    %v407 = vunpack.c.h.b16 %v80
    %v408 = vunpack.c.l.b16 %v81
    %v409 = vunpack.c.h.b16 %v81
    %v410 = vunpack.c.l.b16 %v82
    %v411 = vunpack.c.h.b16 %v82
    %v412 = vunpack.c.l.b16 %v83
    %v413 = vunpack.c.h.b16 %v83
    %v414 = vunpack.c.l.b16 %v84
    %v415 = vunpack.c.h.b16 %v84
    %v416 = vunpack.c.l.b16 %v85
    %v417 = vunpack.c.h.b16 %v85
    %v418 = vunpack.c.l.b16 %v86
    %v419 = vunpack.c.h.b16 %v86
    %v420 = vunpack.c.l.b16 %v87
    %v421 = vunpack.c.h.b16 %v87
    %v422 = vunpack.c.l.b16 %v88
    %v423 = vunpack.c.h.b16 %v88
    %v424 = vunpack.c.l.b16 %v89
    %v425 = vunpack.c.h.b16 %v89
    %v426 = vunpack.c.l.b16 %v90
    %v427 = vunpack.c.h.b16 %v90
    %v428 = vunpack.c.l.b16 %v91
    %v429 = vunpack.c.h.b16 %v91
    %v430 = vunpack.c.l.b16 %v92
    %v431 = vunpack.c.h.b16 %v92
    %v432 = vunpack.c.l.b16 %v93
    %v433 = vunpack.c.h.b16 %v93
    %v434 = vunpack.c.l.b16 %v94
    %v435 = vunpack.c.h.b16 %v94
    %v436 = vunpack.c.l.b16 %v95
    %v437 = vunpack.c.h.b16 %v95
    %v438 = vunpack.c.l.b16 %v96
    %v439 = vunpack.c.h.b16 %v96
    %v440 = vunpack.c.l.b16 %v97
    %v441 = vunpack.c.h.b16 %v97
    %v442 = vunpack.c.l.b16 %v98
    %v443 = vunpack.c.h.b16 %v98
    %v444 = vunpack.c.l.b16 %v99
    %v445 = vunpack.c.h.b16 %v99
    %v446 = vunpack.c.l.b16 %v100
    %v447 = vunpack.c.h.b16 %v100
    %v448 = vunpack.c.l.b16 %v101
    %v449 = vunpack.c.h.b16 %v101
    %v450 = vunpack.c.l.b16 %v102
    %v451 = vunpack.c.h.b16 %v102
    %v452 = vunpack.c.l.b16 %v103
    %v453 = vunpack.c.h.b16 %v103
    %v454 = vunpack.c.l.b16 %v104
    %v455 = vunpack.c.h.b16 %v104
    %v456 = vunpack.c.l.b16 %v105
    %v457 = vunpack.c.h.b16 %v105
    %v458 = vpack.c.b16 %v396, %v394
    %v459 = vpack.c.b16 %v397, %v395
    %v460 = vpack.c.b16 %v400, %v398
    %v461 = vpack.c.b16 %v401, %v399
    %v462 = vpack.c.b16 %v404, %v402
    %v463 = vpack.c.b16 %v405, %v403
    %v464 = vpack.c.b16 %v408, %v406
    %v465 = vpack.c.b16 %v409, %v407
    %v466 = vpack.c.b16 %v412, %v410
    %v467 = vpack.c.b16 %v413, %v411
    %v468 = vpack.c.b16 %v416, %v414
    %v469 = vpack.c.b16 %v417, %v415
    %v470 = vpack.c.b16 %v420, %v418
    %v471 = vpack.c.b16 %v421, %v419
    %v472 = vpack.c.b16 %v424, %v422
    %v473 = vpack.c.b16 %v425, %v423
    %v474 = vpack.c.b16 %v428, %v426
    %v475 = vpack.c.b16 %v429, %v427
    %v476 = vpack.c.b16 %v432, %v430
    %v477 = vpack.c.b16 %v433, %v431
    %v478 = vpack.c.b16 %v436, %v434
    %v479 = vpack.c.b16 %v437, %v435
    %v480 = vpack.c.b16 %v440, %v438
    %v481 = vpack.c.b16 %v441, %v439
    %v482 = vpack.c.b16 %v444, %v442
    %v483 = vpack.c.b16 %v445, %v443
    %v484 = vpack.c.b16 %v448, %v446
    %v485 = vpack.c.b16 %v449, %v447
    %v486 = vpack.c.b16 %v452, %v450
    %v487 = vpack.c.b16 %v453, %v451
    %v488 = vpack.c.b16 %v456, %v454
    %v489 = vpack.c.b16 %v457, %v455
    %522 = vmatprep.subr.bf16.mxu0 %v459
    %523 = vmatpush1.bf16.msra.mxu0 %v458
    %524 = vmatprep.subr.bf16.mxu0 %v461
    %525 = vmatpush1.bf16.msra.mxu0 %v460
    %526 = vmatprep.subr.bf16.mxu0 %v463
    %527 = vmatpush1.bf16.msra.mxu0 %v462
    %528 = vmatprep.subr.bf16.mxu0 %v465
    %529 = vmatpush1.bf16.msra.mxu0 %v464
    %530 = vmatprep.subr.bf16.mxu0 %v467
    %531 = vmatpush1.bf16.msra.mxu0 %v466
    %532 = vmatprep.subr.bf16.mxu0 %v469
    %533 = vmatpush1.bf16.msra.mxu0 %v468
    %534 = vmatprep.subr.bf16.mxu0 %v471
    %535 = vmatpush1.bf16.msra.mxu0 %v470
    %536 = vmatprep.subr.bf16.mxu0 %v473
    %537 = vmatpush1.bf16.msra.mxu0 %v472
    %538 = vmatprep.subr.bf16.mxu0 %v475
    %539 = vmatpush1.bf16.msra.mxu0 %v474
    %540 = vmatprep.subr.bf16.mxu0 %v477
    %541 = vmatpush1.bf16.msra.mxu0 %v476
    %542 = vmatprep.subr.bf16.mxu0 %v479
    %543 = vmatpush1.bf16.msra.mxu0 %v478
    %544 = vmatprep.subr.bf16.mxu0 %v481
    %545 = vmatpush1.bf16.msra.mxu0 %v480
    %546 = vmatprep.subr.bf16.mxu0 %v483
    %547 = vmatpush1.bf16.msra.mxu0 %v482
    %548 = vmatprep.subr.bf16.mxu0 %v485
    %549 = vmatpush1.bf16.msra.mxu0 %v484
    %550 = vmatprep.subr.bf16.mxu0 %v487
    %551 = vmatpush1.bf16.msra.mxu0 %v486
    %552 = vmatprep.subr.bf16.mxu0 %v489
    %553 = vmatpush1.bf16.msra.mxu0 %v488
    %554 = vmatprep.mubr.bf16.mxu0 %v359
    %555 = vmatmul.mubr.bf16.gmra.mrb[0].mxu0 %v358
    %v556 = vpop.f32.mrb[0].mxu0
    %v557 = vadd.f32 %v345, %v556
    %v558 = vpop.f32.mrb[0].mxu0
    %v559 = vadd.f32 %v347, %v558
    %v560 = vpop.f32.mrb[0].mxu0
    %v561 = vpop.f32.mrb[0].mxu0
    %562 = vdwg.mxu0
    %v563 = vadd.f32 %v557, 0.0
    %564 = vst [vmem:[#allocation10] sm:$0xf] %v563
    %s565 = scalar_lea.vmem [#allocation2], 4
    %v566 = vld [vmem:[%s565] sm:$0xf]
    %v567 = vld [vmem:[#allocation7] sm:$0xff]
    %v568 = vld [vmem:[#allocation7 + $0x8] sm:$0xff]
    %v569 = vld [vmem:[#allocation7 + $0x10] sm:$0xff]
    %v570 = vld [vmem:[#allocation7 + $0x18] sm:$0xff]
    %v571 = vld [vmem:[#allocation7 + $0x20] sm:$0xff]
    %v572 = vld [vmem:[#allocation7 + $0x28] sm:$0xff]
    %v573 = vld [vmem:[#allocation7 + $0x30] sm:$0xff]
    %v574 = vld [vmem:[#allocation7 + $0x38] sm:$0xff]
    %v575 = vld [vmem:[#allocation7 + $0x40] sm:$0xff]
    %v576 = vld [vmem:[#allocation7 + $0x48] sm:$0xff]
    %v577 = vld [vmem:[#allocation7 + $0x50] sm:$0xff]
    %v578 = vld [vmem:[#allocation7 + $0x58] sm:$0xff]
    %v579 = vld [vmem:[#allocation7 + $0x60] sm:$0xff]
    %v580 = vld [vmem:[#allocation7 + $0x68] sm:$0xff]
    %v581 = vld [vmem:[#allocation7 + $0x70] sm:$0xff]
    %v582 = vld [vmem:[#allocation7 + $0x78] sm:$0xff]
    %v583 = vld [vmem:[#allocation7 + $0x80] sm:$0xff]
    %v584 = vld [vmem:[#allocation7 + $0x88] sm:$0xff]
    %v585 = vld [vmem:[#allocation7 + $0x90] sm:$0xff]
    %v586 = vld [vmem:[#allocation7 + $0x98] sm:$0xff]
    %v587 = vld [vmem:[#allocation7 + $0xa0] sm:$0xff]
    %v588 = vld [vmem:[#allocation7 + $0xa8] sm:$0xff]
    %v589 = vld [vmem:[#allocation7 + $0xb0] sm:$0xff]
    %v590 = vld [vmem:[#allocation7 + $0xb8] sm:$0xff]
    %v591 = vld [vmem:[#allocation7 + $0xc0] sm:$0xff]
    %v592 = vld [vmem:[#allocation7 + $0xc8] sm:$0xff]
    %v593 = vld [vmem:[#allocation7 + $0xd0] sm:$0xff]
    %v594 = vld [vmem:[#allocation7 + $0xd8] sm:$0xff]
    %v595 = vld [vmem:[#allocation7 + $0xe0] sm:$0xff]
    %v596 = vld [vmem:[#allocation7 + $0xe8] sm:$0xff]
    %v597 = vld [vmem:[#allocation7 + $0xf0] sm:$0xff]
    %v598 = vld [vmem:[#allocation7 + $0xf8] sm:$0xff]
    %s599 = scalar_lea.vmem [#allocation5], 4
    %v600 = vld [vmem:[%s599] sm:$0xf]
    %v601 = vld [vmem:[#allocation8] sm:$0xff]
    %v602 = vld [vmem:[#allocation8 + $0x8] sm:$0xff]
    %v603 = vld [vmem:[#allocation8 + $0x10] sm:$0xff]
    %v604 = vld [vmem:[#allocation8 + $0x18] sm:$0xff]
    %v605 = vld [vmem:[#allocation8 + $0x20] sm:$0xff]
    %v606 = vld [vmem:[#allocation8 + $0x28] sm:$0xff]
    %v607 = vld [vmem:[#allocation8 + $0x30] sm:$0xff]
    %v608 = vld [vmem:[#allocation8 + $0x38] sm:$0xff]
    %v609 = vld [vmem:[#allocation8 + $0x40] sm:$0xff]
    %v610 = vld [vmem:[#allocation8 + $0x48] sm:$0xff]
    %v611 = vld [vmem:[#allocation8 + $0x50] sm:$0xff]
    %v612 = vld [vmem:[#allocation8 + $0x58] sm:$0xff]
    %v613 = vld [vmem:[#allocation8 + $0x60] sm:$0xff]
    %v614 = vld [vmem:[#allocation8 + $0x68] sm:$0xff]
    %v615 = vld [vmem:[#allocation8 + $0x70] sm:$0xff]
    %v616 = vld [vmem:[#allocation8 + $0x78] sm:$0xff]
    %v617 = vld [vmem:[#allocation8 + $0x80] sm:$0xff]
    %v618 = vld [vmem:[#allocation8 + $0x88] sm:$0xff]
    %v619 = vld [vmem:[#allocation8 + $0x90] sm:$0xff]
    %v620 = vld [vmem:[#allocation8 + $0x98] sm:$0xff]
    %v621 = vld [vmem:[#allocation8 + $0xa0] sm:$0xff]
    %v622 = vld [vmem:[#allocation8 + $0xa8] sm:$0xff]
    %v623 = vld [vmem:[#allocation8 + $0xb0] sm:$0xff]
    %v624 = vld [vmem:[#allocation8 + $0xb8] sm:$0xff]
    %v625 = vld [vmem:[#allocation8 + $0xc0] sm:$0xff]
    %v626 = vld [vmem:[#allocation8 + $0xc8] sm:$0xff]
    %v627 = vld [vmem:[#allocation8 + $0xd0] sm:$0xff]
    %v628 = vld [vmem:[#allocation8 + $0xd8] sm:$0xff]
    %v629 = vld [vmem:[#allocation8 + $0xe0] sm:$0xff]
    %v630 = vld [vmem:[#allocation8 + $0xe8] sm:$0xff]
    %v631 = vld [vmem:[#allocation8 + $0xf0] sm:$0xff]
    %v632 = vld [vmem:[#allocation8 + $0xf8] sm:$0xff]
    %v635 = vunpack.c.l.s4 1983009808
    %v636 = vunpack.c.0.s8 %v635
    %v637 = vlaneseq
    %v638 = vshrl.u32 %v637, 7
    %v639 = vsub.s32 %v636, %v638
    %v640 = vrot.slane %v600, %v639
    %v641 = vcombine.high %v640, %v640
    %v676 = vunpack.c.l.b16 %v601
    %v677 = vunpack.c.h.b16 %v601
    %v678 = vunpack.c.l.b16 %v602
    %v679 = vunpack.c.h.b16 %v602
    %v680 = vunpack.c.l.b16 %v603
    %v681 = vunpack.c.h.b16 %v603
    %v682 = vunpack.c.l.b16 %v604
    %v683 = vunpack.c.h.b16 %v604
    %v684 = vunpack.c.l.b16 %v605
    %v685 = vunpack.c.h.b16 %v605
    %v686 = vunpack.c.l.b16 %v606
    %v687 = vunpack.c.h.b16 %v606
    %v688 = vunpack.c.l.b16 %v607
    %v689 = vunpack.c.h.b16 %v607
    %v690 = vunpack.c.l.b16 %v608
    %v691 = vunpack.c.h.b16 %v608
    %v692 = vunpack.c.l.b16 %v609
    %v693 = vunpack.c.h.b16 %v609
    %v694 = vunpack.c.l.b16 %v610
    %v695 = vunpack.c.h.b16 %v610
    %v696 = vunpack.c.l.b16 %v611
    %v697 = vunpack.c.h.b16 %v611
    %v698 = vunpack.c.l.b16 %v612
    %v699 = vunpack.c.h.b16 %v612
    %v700 = vunpack.c.l.b16 %v613
    %v701 = vunpack.c.h.b16 %v613
    %v702 = vunpack.c.l.b16 %v614
    %v703 = vunpack.c.h.b16 %v614
    %v704 = vunpack.c.l.b16 %v615
    %v705 = vunpack.c.h.b16 %v615
    %v706 = vunpack.c.l.b16 %v616
    %v707 = vunpack.c.h.b16 %v616
    %v708 = vunpack.c.l.b16 %v617
    %v709 = vunpack.c.h.b16 %v617
    %v710 = vunpack.c.l.b16 %v618
    %v711 = vunpack.c.h.b16 %v618
    %v712 = vunpack.c.l.b16 %v619
    %v713 = vunpack.c.h.b16 %v619
    %v714 = vunpack.c.l.b16 %v620
    %v715 = vunpack.c.h.b16 %v620
    %v716 = vunpack.c.l.b16 %v621
    %v717 = vunpack.c.h.b16 %v621
    %v718 = vunpack.c.l.b16 %v622
    %v719 = vunpack.c.h.b16 %v622
    %v720 = vunpack.c.l.b16 %v623
    %v721 = vunpack.c.h.b16 %v623
    %v722 = vunpack.c.l.b16 %v624
    %v723 = vunpack.c.h.b16 %v624
    %v724 = vunpack.c.l.b16 %v625
    %v725 = vunpack.c.h.b16 %v625
    %v726 = vunpack.c.l.b16 %v626
    %v727 = vunpack.c.h.b16 %v626
    %v728 = vunpack.c.l.b16 %v627
    %v729 = vunpack.c.h.b16 %v627
    %v730 = vunpack.c.l.b16 %v628
    %v731 = vunpack.c.h.b16 %v628
    %v732 = vunpack.c.l.b16 %v629
    %v733 = vunpack.c.h.b16 %v629
    %v734 = vunpack.c.l.b16 %v630
    %v735 = vunpack.c.h.b16 %v630
    %v736 = vunpack.c.l.b16 %v631
    %v737 = vunpack.c.h.b16 %v631
    %v738 = vunpack.c.l.b16 %v632
    %v739 = vunpack.c.h.b16 %v632
    %v740 = vpack.c.b16 %v678, %v676
    %v741 = vpack.c.b16 %v679, %v677
    %v742 = vpack.c.b16 %v682, %v680
    %v743 = vpack.c.b16 %v683, %v681
    %v744 = vpack.c.b16 %v686, %v684
    %v745 = vpack.c.b16 %v687, %v685
    %v746 = vpack.c.b16 %v690, %v688
    %v747 = vpack.c.b16 %v691, %v689
    %v748 = vpack.c.b16 %v694, %v692
    %v749 = vpack.c.b16 %v695, %v693
    %v750 = vpack.c.b16 %v698, %v696
    %v751 = vpack.c.b16 %v699, %v697
    %v752 = vpack.c.b16 %v702, %v700
    %v753 = vpack.c.b16 %v703, %v701
    %v754 = vpack.c.b16 %v706, %v704
    %v755 = vpack.c.b16 %v707, %v705
    %v756 = vpack.c.b16 %v710, %v708
    %v757 = vpack.c.b16 %v711, %v709
    %v758 = vpack.c.b16 %v714, %v712
    %v759 = vpack.c.b16 %v715, %v713
    %v760 = vpack.c.b16 %v718, %v716
    %v761 = vpack.c.b16 %v719, %v717
    %v762 = vpack.c.b16 %v722, %v720
    %v763 = vpack.c.b16 %v723, %v721
    %v764 = vpack.c.b16 %v726, %v724
    %v765 = vpack.c.b16 %v727, %v725
    %v766 = vpack.c.b16 %v730, %v728
    %v767 = vpack.c.b16 %v731, %v729
    %v768 = vpack.c.b16 %v734, %v732
    %v769 = vpack.c.b16 %v735, %v733
    %v770 = vpack.c.b16 %v738, %v736
    %v771 = vpack.c.b16 %v739, %v737
    %804 = vmatprep.subr.bf16.mxu0 %v741
    %805 = vmatpush1.bf16.msra.mxu0 %v740
    %806 = vmatprep.subr.bf16.mxu0 %v743
    %807 = vmatpush1.bf16.msra.mxu0 %v742
    %808 = vmatprep.subr.bf16.mxu0 %v745
    %809 = vmatpush1.bf16.msra.mxu0 %v744
    %810 = vmatprep.subr.bf16.mxu0 %v747
    %811 = vmatpush1.bf16.msra.mxu0 %v746
    %812 = vmatprep.subr.bf16.mxu0 %v749
    %813 = vmatpush1.bf16.msra.mxu0 %v748
    %814 = vmatprep.subr.bf16.mxu0 %v751
    %815 = vmatpush1.bf16.msra.mxu0 %v750
    %816 = vmatprep.subr.bf16.mxu0 %v753
    %817 = vmatpush1.bf16.msra.mxu0 %v752
    %818 = vmatprep.subr.bf16.mxu0 %v755
    %819 = vmatpush1.bf16.msra.mxu0 %v754
    %820 = vmatprep.subr.bf16.mxu0 %v757
    %821 = vmatpush1.bf16.msra.mxu0 %v756
    %822 = vmatprep.subr.bf16.mxu0 %v759
    %823 = vmatpush1.bf16.msra.mxu0 %v758
    %824 = vmatprep.subr.bf16.mxu0 %v761
    %825 = vmatpush1.bf16.msra.mxu0 %v760
    %826 = vmatprep.subr.bf16.mxu0 %v763
    %827 = vmatpush1.bf16.msra.mxu0 %v762
    %828 = vmatprep.subr.bf16.mxu0 %v765
    %829 = vmatpush1.bf16.msra.mxu0 %v764
    %830 = vmatprep.subr.bf16.mxu0 %v767
    %831 = vmatpush1.bf16.msra.mxu0 %v766
    %832 = vmatprep.subr.bf16.mxu0 %v769
    %833 = vmatpush1.bf16.msra.mxu0 %v768
    %834 = vmatprep.subr.bf16.mxu0 %v771
    %835 = vmatpush1.bf16.msra.mxu0 %v770
    %836 = vmatprep.mubr.bf16.mxu0 %v641
    %837 = vmatmul.mubr.bf16.gmra.mrb[0].mxu0 %v640
    %v838 = vpop.f32.mrb[0].mxu0
    %v839 = vadd.f32 0.0, %v838
    %v840 = vpop.f32.mrb[0].mxu0
    %v841 = vadd.f32 0.0, %v840
    %v842 = vpop.f32.mrb[0].mxu0
    %v843 = vpop.f32.mrb[0].mxu0
    %844 = vdwg.mxu0
    %v847 = vunpack.c.l.s4 1983009808
    %v848 = vunpack.c.0.s8 %v847
    %v849 = vlaneseq
    %v850 = vshrl.u32 %v849, 7
    %v851 = vsub.s32 %v848, %v850
    %v852 = vrot.slane %v566, %v851
    %v853 = vcombine.high %v852, %v852
    %v888 = vunpack.c.l.b16 %v567
    %v889 = vunpack.c.h.b16 %v567
    %v890 = vunpack.c.l.b16 %v568
    %v891 = vunpack.c.h.b16 %v568
    %v892 = vunpack.c.l.b16 %v569
    %v893 = vunpack.c.h.b16 %v569
    %v894 = vunpack.c.l.b16 %v570
    %v895 = vunpack.c.h.b16 %v570
    %v896 = vunpack.c.l.b16 %v571
    %v897 = vunpack.c.h.b16 %v571
    %v898 = vunpack.c.l.b16 %v572
    %v899 = vunpack.c.h.b16 %v572
    %v900 = vunpack.c.l.b16 %v573
    %v901 = vunpack.c.h.b16 %v573
    %v902 = vunpack.c.l.b16 %v574
    %v903 = vunpack.c.h.b16 %v574
    %v904 = vunpack.c.l.b16 %v575
    %v905 = vunpack.c.h.b16 %v575
    %v906 = vunpack.c.l.b16 %v576
    %v907 = vunpack.c.h.b16 %v576
    %v908 = vunpack.c.l.b16 %v577
    %v909 = vunpack.c.h.b16 %v577
    %v910 = vunpack.c.l.b16 %v578
    %v911 = vunpack.c.h.b16 %v578
    %v912 = vunpack.c.l.b16 %v579
    %v913 = vunpack.c.h.b16 %v579
    %v914 = vunpack.c.l.b16 %v580
    %v915 = vunpack.c.h.b16 %v580
    %v916 = vunpack.c.l.b16 %v581
    %v917 = vunpack.c.h.b16 %v581
    %v918 = vunpack.c.l.b16 %v582
    %v919 = vunpack.c.h.b16 %v582
    %v920 = vunpack.c.l.b16 %v583
    %v921 = vunpack.c.h.b16 %v583
    %v922 = vunpack.c.l.b16 %v584
    %v923 = vunpack.c.h.b16 %v584
    %v924 = vunpack.c.l.b16 %v585
    %v925 = vunpack.c.h.b16 %v585
    %v926 = vunpack.c.l.b16 %v586
    %v927 = vunpack.c.h.b16 %v586
    %v928 = vunpack.c.l.b16 %v587
    %v929 = vunpack.c.h.b16 %v587
    %v930 = vunpack.c.l.b16 %v588
    %v931 = vunpack.c.h.b16 %v588
    %v932 = vunpack.c.l.b16 %v589
    %v933 = vunpack.c.h.b16 %v589
    %v934 = vunpack.c.l.b16 %v590
    %v935 = vunpack.c.h.b16 %v590
    %v936 = vunpack.c.l.b16 %v591
    %v937 = vunpack.c.h.b16 %v591
    %v938 = vunpack.c.l.b16 %v592
    %v939 = vunpack.c.h.b16 %v592
    %v940 = vunpack.c.l.b16 %v593
    %v941 = vunpack.c.h.b16 %v593
    %v942 = vunpack.c.l.b16 %v594
    %v943 = vunpack.c.h.b16 %v594
    %v944 = vunpack.c.l.b16 %v595
    %v945 = vunpack.c.h.b16 %v595
    %v946 = vunpack.c.l.b16 %v596
    %v947 = vunpack.c.h.b16 %v596
    %v948 = vunpack.c.l.b16 %v597
    %v949 = vunpack.c.h.b16 %v597
    %v950 = vunpack.c.l.b16 %v598
    %v951 = vunpack.c.h.b16 %v598
    %v952 = vpack.c.b16 %v890, %v888
    %v953 = vpack.c.b16 %v891, %v889
    %v954 = vpack.c.b16 %v894, %v892
    %v955 = vpack.c.b16 %v895, %v893
    %v956 = vpack.c.b16 %v898, %v896
    %v957 = vpack.c.b16 %v899, %v897
    %v958 = vpack.c.b16 %v902, %v900
    %v959 = vpack.c.b16 %v903, %v901
    %v960 = vpack.c.b16 %v906, %v904
    %v961 = vpack.c.b16 %v907, %v905
    %v962 = vpack.c.b16 %v910, %v908
    %v963 = vpack.c.b16 %v911, %v909
    %v964 = vpack.c.b16 %v914, %v912
    %v965 = vpack.c.b16 %v915, %v913
    %v966 = vpack.c.b16 %v918, %v916
    %v967 = vpack.c.b16 %v919, %v917
    %v968 = vpack.c.b16 %v922, %v920
    %v969 = vpack.c.b16 %v923, %v921
    %v970 = vpack.c.b16 %v926, %v924
    %v971 = vpack.c.b16 %v927, %v925
    %v972 = vpack.c.b16 %v930, %v928
    %v973 = vpack.c.b16 %v931, %v929
    %v974 = vpack.c.b16 %v934, %v932
    %v975 = vpack.c.b16 %v935, %v933
    %v976 = vpack.c.b16 %v938, %v936
    %v977 = vpack.c.b16 %v939, %v937
    %v978 = vpack.c.b16 %v942, %v940
    %v979 = vpack.c.b16 %v943, %v941
    %v980 = vpack.c.b16 %v946, %v944
    %v981 = vpack.c.b16 %v947, %v945
    %v982 = vpack.c.b16 %v950, %v948
    %v983 = vpack.c.b16 %v951, %v949
    %1016 = vmatprep.subr.bf16.mxu0 %v953
    %1017 = vmatpush1.bf16.msra.mxu0 %v952
    %1018 = vmatprep.subr.bf16.mxu0 %v955
    %1019 = vmatpush1.bf16.msra.mxu0 %v954
    %1020 = vmatprep.subr.bf16.mxu0 %v957
    %1021 = vmatpush1.bf16.msra.mxu0 %v956
    %1022 = vmatprep.subr.bf16.mxu0 %v959
    %1023 = vmatpush1.bf16.msra.mxu0 %v958
    %1024 = vmatprep.subr.bf16.mxu0 %v961
    %1025 = vmatpush1.bf16.msra.mxu0 %v960
    %1026 = vmatprep.subr.bf16.mxu0 %v963
    %1027 = vmatpush1.bf16.msra.mxu0 %v962
    %1028 = vmatprep.subr.bf16.mxu0 %v965
    %1029 = vmatpush1.bf16.msra.mxu0 %v964
    %1030 = vmatprep.subr.bf16.mxu0 %v967
    %1031 = vmatpush1.bf16.msra.mxu0 %v966
    %1032 = vmatprep.subr.bf16.mxu0 %v969
    %1033 = vmatpush1.bf16.msra.mxu0 %v968
    %1034 = vmatprep.subr.bf16.mxu0 %v971
    %1035 = vmatpush1.bf16.msra.mxu0 %v970
    %1036 = vmatprep.subr.bf16.mxu0 %v973
    %1037 = vmatpush1.bf16.msra.mxu0 %v972
    %1038 = vmatprep.subr.bf16.mxu0 %v975
    %1039 = vmatpush1.bf16.msra.mxu0 %v974
    %1040 = vmatprep.subr.bf16.mxu0 %v977
    %1041 = vmatpush1.bf16.msra.mxu0 %v976
    %1042 = vmatprep.subr.bf16.mxu0 %v979
    %1043 = vmatpush1.bf16.msra.mxu0 %v978
    %1044 = vmatprep.subr.bf16.mxu0 %v981
    %1045 = vmatpush1.bf16.msra.mxu0 %v980
    %1046 = vmatprep.subr.bf16.mxu0 %v983
    %1047 = vmatpush1.bf16.msra.mxu0 %v982
    %1048 = vmatprep.mubr.bf16.mxu0 %v853
    %1049 = vmatmul.mubr.bf16.gmra.mrb[0].mxu0 %v852
    %v1050 = vpop.f32.mrb[0].mxu0
    %v1051 = vadd.f32 %v839, %v1050
    %v1052 = vpop.f32.mrb[0].mxu0
    %v1053 = vadd.f32 %v841, %v1052
    %v1054 = vpop.f32.mrb[0].mxu0
    %v1055 = vpop.f32.mrb[0].mxu0
    %1056 = vdwg.mxu0
    %v1057 = vadd.f32 %v559, %v1051
    %1058 = vst [vmem:[#allocation10 + $0x4] sm:$0xf] %v1057
    %s1059 = scalar_lea.vmem [#allocation2], 8
    %v1060 = vld [vmem:[%s1059] sm:$0xf]
    %v1061 = vld [vmem:[#allocation7] sm:$0xff]
    %v1062 = vld [vmem:[#allocation7 + $0x8] sm:$0xff]
    %v1063 = vld [vmem:[#allocation7 + $0x10] sm:$0xff]
    %v1064 = vld [vmem:[#allocation7 + $0x18] sm:$0xff]
    %v1065 = vld [vmem:[#allocation7 + $0x20] sm:$0xff]
    %v1066 = vld [vmem:[#allocation7 + $0x28] sm:$0xff]
    %v1067 = vld [vmem:[#allocation7 + $0x30] sm:$0xff]
    %v1068 = vld [vmem:[#allocation7 + $0x38] sm:$0xff]
    %v1069 = vld [vmem:[#allocation7 + $0x40] sm:$0xff]
    %v1070 = vld [vmem:[#allocation7 + $0x48] sm:$0xff]
    %v1071 = vld [vmem:[#allocation7 + $0x50] sm:$0xff]
    %v1072 = vld [vmem:[#allocation7 + $0x58] sm:$0xff]
    %v1073 = vld [vmem:[#allocation7 + $0x60] sm:$0xff]
    %v1074 = vld [vmem:[#allocation7 + $0x68] sm:$0xff]
    %v1075 = vld [vmem:[#allocation7 + $0x70] sm:$0xff]
    %v1076 = vld [vmem:[#allocation7 + $0x78] sm:$0xff]
    %v1077 = vld [vmem:[#allocation7 + $0x80] sm:$0xff]
    %v1078 = vld [vmem:[#allocation7 + $0x88] sm:$0xff]
    %v1079 = vld [vmem:[#allocation7 + $0x90] sm:$0xff]
    %v1080 = vld [vmem:[#allocation7 + $0x98] sm:$0xff]
    %v1081 = vld [vmem:[#allocation7 + $0xa0] sm:$0xff]
    %v1082 = vld [vmem:[#allocation7 + $0xa8] sm:$0xff]
    %v1083 = vld [vmem:[#allocation7 + $0xb0] sm:$0xff]
    %v1084 = vld [vmem:[#allocation7 + $0xb8] sm:$0xff]
    %v1085 = vld [vmem:[#allocation7 + $0xc0] sm:$0xff]
    %v1086 = vld [vmem:[#allocation7 + $0xc8] sm:$0xff]
    %v1087 = vld [vmem:[#allocation7 + $0xd0] sm:$0xff]
    %v1088 = vld [vmem:[#allocation7 + $0xd8] sm:$0xff]
    %v1089 = vld [vmem:[#allocation7 + $0xe0] sm:$0xff]
    %v1090 = vld [vmem:[#allocation7 + $0xe8] sm:$0xff]
    %v1091 = vld [vmem:[#allocation7 + $0xf0] sm:$0xff]
    %v1092 = vld [vmem:[#allocation7 + $0xf8] sm:$0xff]
    %s1093 = scalar_lea.vmem [#allocation5], 8
    %v1094 = vld [vmem:[%s1093] sm:$0xf]
    %v1095 = vld [vmem:[#allocation8] sm:$0xff]
    %v1096 = vld [vmem:[#allocation8 + $0x8] sm:$0xff]
    %v1097 = vld [vmem:[#allocation8 + $0x10] sm:$0xff]
    %v1098 = vld [vmem:[#allocation8 + $0x18] sm:$0xff]
    %v1099 = vld [vmem:[#allocation8 + $0x20] sm:$0xff]
    %v1100 = vld [vmem:[#allocation8 + $0x28] sm:$0xff]
    %v1101 = vld [vmem:[#allocation8 + $0x30] sm:$0xff]
    %v1102 = vld [vmem:[#allocation8 + $0x38] sm:$0xff]
    %v1103 = vld [vmem:[#allocation8 + $0x40] sm:$0xff]
    %v1104 = vld [vmem:[#allocation8 + $0x48] sm:$0xff]
    %v1105 = vld [vmem:[#allocation8 + $0x50] sm:$0xff]
    %v1106 = vld [vmem:[#allocation8 + $0x58] sm:$0xff]
    %v1107 = vld [vmem:[#allocation8 + $0x60] sm:$0xff]
    %v1108 = vld [vmem:[#allocation8 + $0x68] sm:$0xff]
    %v1109 = vld [vmem:[#allocation8 + $0x70] sm:$0xff]
    %v1110 = vld [vmem:[#allocation8 + $0x78] sm:$0xff]
    %v1111 = vld [vmem:[#allocation8 + $0x80] sm:$0xff]
    %v1112 = vld [vmem:[#allocation8 + $0x88] sm:$0xff]
    %v1113 = vld [vmem:[#allocation8 + $0x90] sm:$0xff]
    %v1114 = vld [vmem:[#allocation8 + $0x98] sm:$0xff]
    %v1115 = vld [vmem:[#allocation8 + $0xa0] sm:$0xff]
    %v1116 = vld [vmem:[#allocation8 + $0xa8] sm:$0xff]
    %v1117 = vld [vmem:[#allocation8 + $0xb0] sm:$0xff]
    %v1118 = vld [vmem:[#allocation8 + $0xb8] sm:$0xff]
    %v1119 = vld [vmem:[#allocation8 + $0xc0] sm:$0xff]
    %v1120 = vld [vmem:[#allocation8 + $0xc8] sm:$0xff]
    %v1121 = vld [vmem:[#allocation8 + $0xd0] sm:$0xff]
    %v1122 = vld [vmem:[#allocation8 + $0xd8] sm:$0xff]
    %v1123 = vld [vmem:[#allocation8 + $0xe0] sm:$0xff]
    %v1124 = vld [vmem:[#allocation8 + $0xe8] sm:$0xff]
    %v1125 = vld [vmem:[#allocation8 + $0xf0] sm:$0xff]
    %v1126 = vld [vmem:[#allocation8 + $0xf8] sm:$0xff]
    %v1129 = vunpack.c.l.s4 1983009808
    %v1130 = vunpack.c.0.s8 %v1129
    %v1131 = vlaneseq
    %v1132 = vshrl.u32 %v1131, 7
    %v1133 = vsub.s32 %v1130, %v1132
    %v1134 = vrot.slane %v1094, %v1133
    %v1135 = vcombine.high %v1134, %v1134
    %v1170 = vunpack.c.l.b16 %v1095
    %v1171 = vunpack.c.h.b16 %v1095
    %v1172 = vunpack.c.l.b16 %v1096
    %v1173 = vunpack.c.h.b16 %v1096
    %v1174 = vunpack.c.l.b16 %v1097
    %v1175 = vunpack.c.h.b16 %v1097
    %v1176 = vunpack.c.l.b16 %v1098
    %v1177 = vunpack.c.h.b16 %v1098
    %v1178 = vunpack.c.l.b16 %v1099
    %v1179 = vunpack.c.h.b16 %v1099
    %v1180 = vunpack.c.l.b16 %v1100
    %v1181 = vunpack.c.h.b16 %v1100
    %v1182 = vunpack.c.l.b16 %v1101
    %v1183 = vunpack.c.h.b16 %v1101
    %v1184 = vunpack.c.l.b16 %v1102
    %v1185 = vunpack.c.h.b16 %v1102
    %v1186 = vunpack.c.l.b16 %v1103
    %v1187 = vunpack.c.h.b16 %v1103
    %v1188 = vunpack.c.l.b16 %v1104
    %v1189 = vunpack.c.h.b16 %v1104
    %v1190 = vunpack.c.l.b16 %v1105
    %v1191 = vunpack.c.h.b16 %v1105
    %v1192 = vunpack.c.l.b16 %v1106
    %v1193 = vunpack.c.h.b16 %v1106
    %v1194 = vunpack.c.l.b16 %v1107
    %v1195 = vunpack.c.h.b16 %v1107
    %v1196 = vunpack.c.l.b16 %v1108
    %v1197 = vunpack.c.h.b16 %v1108
    %v1198 = vunpack.c.l.b16 %v1109
    %v1199 = vunpack.c.h.b16 %v1109
    %v1200 = vunpack.c.l.b16 %v1110
    %v1201 = vunpack.c.h.b16 %v1110
    %v1202 = vunpack.c.l.b16 %v1111
    %v1203 = vunpack.c.h.b16 %v1111
    %v1204 = vunpack.c.l.b16 %v1112
    %v1205 = vunpack.c.h.b16 %v1112
    %v1206 = vunpack.c.l.b16 %v1113
    %v1207 = vunpack.c.h.b16 %v1113
    %v1208 = vunpack.c.l.b16 %v1114
    %v1209 = vunpack.c.h.b16 %v1114
    %v1210 = vunpack.c.l.b16 %v1115
    %v1211 = vunpack.c.h.b16 %v1115
    %v1212 = vunpack.c.l.b16 %v1116
    %v1213 = vunpack.c.h.b16 %v1116
    %v1214 = vunpack.c.l.b16 %v1117
    %v1215 = vunpack.c.h.b16 %v1117
    %v1216 = vunpack.c.l.b16 %v1118
    %v1217 = vunpack.c.h.b16 %v1118
    %v1218 = vunpack.c.l.b16 %v1119
    %v1219 = vunpack.c.h.b16 %v1119
    %v1220 = vunpack.c.l.b16 %v1120
    %v1221 = vunpack.c.h.b16 %v1120
    %v1222 = vunpack.c.l.b16 %v1121
    %v1223 = vunpack.c.h.b16 %v1121
    %v1224 = vunpack.c.l.b16 %v1122
    %v1225 = vunpack.c.h.b16 %v1122
    %v1226 = vunpack.c.l.b16 %v1123
    %v1227 = vunpack.c.h.b16 %v1123
    %v1228 = vunpack.c.l.b16 %v1124
    %v1229 = vunpack.c.h.b16 %v1124
    %v1230 = vunpack.c.l.b16 %v1125
    %v1231 = vunpack.c.h.b16 %v1125
    %v1232 = vunpack.c.l.b16 %v1126
    %v1233 = vunpack.c.h.b16 %v1126
    %v1234 = vpack.c.b16 %v1172, %v1170
    %v1235 = vpack.c.b16 %v1173, %v1171
    %v1236 = vpack.c.b16 %v1176, %v1174
    %v1237 = vpack.c.b16 %v1177, %v1175
    %v1238 = vpack.c.b16 %v1180, %v1178
    %v1239 = vpack.c.b16 %v1181, %v1179
    %v1240 = vpack.c.b16 %v1184, %v1182
    %v1241 = vpack.c.b16 %v1185, %v1183
    %v1242 = vpack.c.b16 %v1188, %v1186
    %v1243 = vpack.c.b16 %v1189, %v1187
    %v1244 = vpack.c.b16 %v1192, %v1190
    %v1245 = vpack.c.b16 %v1193, %v1191
    %v1246 = vpack.c.b16 %v1196, %v1194
    %v1247 = vpack.c.b16 %v1197, %v1195
    %v1248 = vpack.c.b16 %v1200, %v1198
    %v1249 = vpack.c.b16 %v1201, %v1199
    %v1250 = vpack.c.b16 %v1204, %v1202
    %v1251 = vpack.c.b16 %v1205, %v1203
    %v1252 = vpack.c.b16 %v1208, %v1206
    %v1253 = vpack.c.b16 %v1209, %v1207
    %v1254 = vpack.c.b16 %v1212, %v1210
    %v1255 = vpack.c.b16 %v1213, %v1211
    %v1256 = vpack.c.b16 %v1216, %v1214
    %v1257 = vpack.c.b16 %v1217, %v1215
    %v1258 = vpack.c.b16 %v1220, %v1218
    %v1259 = vpack.c.b16 %v1221, %v1219
    %v1260 = vpack.c.b16 %v1224, %v1222
    %v1261 = vpack.c.b16 %v1225, %v1223
    %v1262 = vpack.c.b16 %v1228, %v1226
    %v1263 = vpack.c.b16 %v1229, %v1227
    %v1264 = vpack.c.b16 %v1232, %v1230
    %v1265 = vpack.c.b16 %v1233, %v1231
    %1298 = vmatprep.subr.bf16.mxu0 %v1235
    %1299 = vmatpush1.bf16.msra.mxu0 %v1234
    %1300 = vmatprep.subr.bf16.mxu0 %v1237
    %1301 = vmatpush1.bf16.msra.mxu0 %v1236
    %1302 = vmatprep.subr.bf16.mxu0 %v1239
    %1303 = vmatpush1.bf16.msra.mxu0 %v1238
    %1304 = vmatprep.subr.bf16.mxu0 %v1241
    %1305 = vmatpush1.bf16.msra.mxu0 %v1240
    %1306 = vmatprep.subr.bf16.mxu0 %v1243
    %1307 = vmatpush1.bf16.msra.mxu0 %v1242
    %1308 = vmatprep.subr.bf16.mxu0 %v1245
    %1309 = vmatpush1.bf16.msra.mxu0 %v1244
    %1310 = vmatprep.subr.bf16.mxu0 %v1247
    %1311 = vmatpush1.bf16.msra.mxu0 %v1246
    %1312 = vmatprep.subr.bf16.mxu0 %v1249
    %1313 = vmatpush1.bf16.msra.mxu0 %v1248
    %1314 = vmatprep.subr.bf16.mxu0 %v1251
    %1315 = vmatpush1.bf16.msra.mxu0 %v1250
    %1316 = vmatprep.subr.bf16.mxu0 %v1253
    %1317 = vmatpush1.bf16.msra.mxu0 %v1252
    %1318 = vmatprep.subr.bf16.mxu0 %v1255
    %1319 = vmatpush1.bf16.msra.mxu0 %v1254
    %1320 = vmatprep.subr.bf16.mxu0 %v1257
    %1321 = vmatpush1.bf16.msra.mxu0 %v1256
    %1322 = vmatprep.subr.bf16.mxu0 %v1259
    %1323 = vmatpush1.bf16.msra.mxu0 %v1258
    %1324 = vmatprep.subr.bf16.mxu0 %v1261
    %1325 = vmatpush1.bf16.msra.mxu0 %v1260
    %1326 = vmatprep.subr.bf16.mxu0 %v1263
    %1327 = vmatpush1.bf16.msra.mxu0 %v1262
    %1328 = vmatprep.subr.bf16.mxu0 %v1265
    %1329 = vmatpush1.bf16.msra.mxu0 %v1264
    %1330 = vmatprep.mubr.bf16.mxu0 %v1135
    %1331 = vmatmul.mubr.bf16.gmra.mrb[0].mxu0 %v1134
    %v1332 = vpop.f32.mrb[0].mxu0
    %v1333 = vadd.f32 0.0, %v1332
    %v1334 = vpop.f32.mrb[0].mxu0
    %v1335 = vadd.f32 0.0, %v1334
    %v1336 = vpop.f32.mrb[0].mxu0
    %v1337 = vpop.f32.mrb[0].mxu0
    %1338 = vdwg.mxu0
    %v1341 = vunpack.c.l.s4 1983009808
    %v1342 = vunpack.c.0.s8 %v1341
    %v1343 = vlaneseq
    %v1344 = vshrl.u32 %v1343, 7
    %v1345 = vsub.s32 %v1342, %v1344
    %v1346 = vrot.slane %v1060, %v1345
    %v1347 = vcombine.high %v1346, %v1346
    %v1382 = vunpack.c.l.b16 %v1061
    %v1383 = vunpack.c.h.b16 %v1061
    %v1384 = vunpack.c.l.b16 %v1062
    %v1385 = vunpack.c.h.b16 %v1062
    %v1386 = vunpack.c.l.b16 %v1063
    %v1387 = vunpack.c.h.b16 %v1063
    %v1388 = vunpack.c.l.b16 %v1064
    %v1389 = vunpack.c.h.b16 %v1064
    %v1390 = vunpack.c.l.b16 %v1065
    %v1391 = vunpack.c.h.b16 %v1065
    %v1392 = vunpack.c.l.b16 %v1066
    %v1393 = vunpack.c.h.b16 %v1066
    %v1394 = vunpack.c.l.b16 %v1067
    %v1395 = vunpack.c.h.b16 %v1067
    %v1396 = vunpack.c.l.b16 %v1068
    %v1397 = vunpack.c.h.b16 %v1068
    %v1398 = vunpack.c.l.b16 %v1069
    %v1399 = vunpack.c.h.b16 %v1069
    %v1400 = vunpack.c.l.b16 %v1070
    %v1401 = vunpack.c.h.b16 %v1070
    %v1402 = vunpack.c.l.b16 %v1071
    %v1403 = vunpack.c.h.b16 %v1071
    %v1404 = vunpack.c.l.b16 %v1072
    %v1405 = vunpack.c.h.b16 %v1072
    %v1406 = vunpack.c.l.b16 %v1073
    %v1407 = vunpack.c.h.b16 %v1073
    %v1408 = vunpack.c.l.b16 %v1074
    %v1409 = vunpack.c.h.b16 %v1074
    %v1410 = vunpack.c.l.b16 %v1075
    %v1411 = vunpack.c.h.b16 %v1075
    %v1412 = vunpack.c.l.b16 %v1076
    %v1413 = vunpack.c.h.b16 %v1076
    %v1414 = vunpack.c.l.b16 %v1077
    %v1415 = vunpack.c.h.b16 %v1077
    %v1416 = vunpack.c.l.b16 %v1078
    %v1417 = vunpack.c.h.b16 %v1078
    %v1418 = vunpack.c.l.b16 %v1079
    %v1419 = vunpack.c.h.b16 %v1079
    %v1420 = vunpack.c.l.b16 %v1080
    %v1421 = vunpack.c.h.b16 %v1080
    %v1422 = vunpack.c.l.b16 %v1081
    %v1423 = vunpack.c.h.b16 %v1081
    %v1424 = vunpack.c.l.b16 %v1082
    %v1425 = vunpack.c.h.b16 %v1082
    %v1426 = vunpack.c.l.b16 %v1083
    %v1427 = vunpack.c.h.b16 %v1083
    %v1428 = vunpack.c.l.b16 %v1084
    %v1429 = vunpack.c.h.b16 %v1084
    %v1430 = vunpack.c.l.b16 %v1085
    %v1431 = vunpack.c.h.b16 %v1085
    %v1432 = vunpack.c.l.b16 %v1086
    %v1433 = vunpack.c.h.b16 %v1086
    %v1434 = vunpack.c.l.b16 %v1087
    %v1435 = vunpack.c.h.b16 %v1087
    %v1436 = vunpack.c.l.b16 %v1088
    %v1437 = vunpack.c.h.b16 %v1088
    %v1438 = vunpack.c.l.b16 %v1089
    %v1439 = vunpack.c.h.b16 %v1089
    %v1440 = vunpack.c.l.b16 %v1090
    %v1441 = vunpack.c.h.b16 %v1090
    %v1442 = vunpack.c.l.b16 %v1091
    %v1443 = vunpack.c.h.b16 %v1091
    %v1444 = vunpack.c.l.b16 %v1092
    %v1445 = vunpack.c.h.b16 %v1092
    %v1446 = vpack.c.b16 %v1384, %v1382
    %v1447 = vpack.c.b16 %v1385, %v1383
    %v1448 = vpack.c.b16 %v1388, %v1386
    %v1449 = vpack.c.b16 %v1389, %v1387
    %v1450 = vpack.c.b16 %v1392, %v1390
    %v1451 = vpack.c.b16 %v1393, %v1391
    %v1452 = vpack.c.b16 %v1396, %v1394
    %v1453 = vpack.c.b16 %v1397, %v1395
    %v1454 = vpack.c.b16 %v1400, %v1398
    %v1455 = vpack.c.b16 %v1401, %v1399
    %v1456 = vpack.c.b16 %v1404, %v1402
    %v1457 = vpack.c.b16 %v1405, %v1403
    %v1458 = vpack.c.b16 %v1408, %v1406
    %v1459 = vpack.c.b16 %v1409, %v1407
    %v1460 = vpack.c.b16 %v1412, %v1410
    %v1461 = vpack.c.b16 %v1413, %v1411
    %v1462 = vpack.c.b16 %v1416, %v1414
    %v1463 = vpack.c.b16 %v1417, %v1415
    %v1464 = vpack.c.b16 %v1420, %v1418
    %v1465 = vpack.c.b16 %v1421, %v1419
    %v1466 = vpack.c.b16 %v1424, %v1422
    %v1467 = vpack.c.b16 %v1425, %v1423
    %v1468 = vpack.c.b16 %v1428, %v1426
    %v1469 = vpack.c.b16 %v1429, %v1427
    %v1470 = vpack.c.b16 %v1432, %v1430
    %v1471 = vpack.c.b16 %v1433, %v1431
    %v1472 = vpack.c.b16 %v1436, %v1434
    %v1473 = vpack.c.b16 %v1437, %v1435
    %v1474 = vpack.c.b16 %v1440, %v1438
    %v1475 = vpack.c.b16 %v1441, %v1439
    %v1476 = vpack.c.b16 %v1444, %v1442
    %v1477 = vpack.c.b16 %v1445, %v1443
    %1510 = vmatprep.subr.bf16.mxu0 %v1447
    %1511 = vmatpush1.bf16.msra.mxu0 %v1446
    %1512 = vmatprep.subr.bf16.mxu0 %v1449
    %1513 = vmatpush1.bf16.msra.mxu0 %v1448
    %1514 = vmatprep.subr.bf16.mxu0 %v1451
    %1515 = vmatpush1.bf16.msra.mxu0 %v1450
    %1516 = vmatprep.subr.bf16.mxu0 %v1453
    %1517 = vmatpush1.bf16.msra.mxu0 %v1452
    %1518 = vmatprep.subr.bf16.mxu0 %v1455
    %1519 = vmatpush1.bf16.msra.mxu0 %v1454
    %1520 = vmatprep.subr.bf16.mxu0 %v1457
    %1521 = vmatpush1.bf16.msra.mxu0 %v1456
    %1522 = vmatprep.subr.bf16.mxu0 %v1459
    %1523 = vmatpush1.bf16.msra.mxu0 %v1458
    %1524 = vmatprep.subr.bf16.mxu0 %v1461
    %1525 = vmatpush1.bf16.msra.mxu0 %v1460
    %1526 = vmatprep.subr.bf16.mxu0 %v1463
    %1527 = vmatpush1.bf16.msra.mxu0 %v1462
    %1528 = vmatprep.subr.bf16.mxu0 %v1465
    %1529 = vmatpush1.bf16.msra.mxu0 %v1464
    %1530 = vmatprep.subr.bf16.mxu0 %v1467
    %1531 = vmatpush1.bf16.msra.mxu0 %v1466
    %1532 = vmatprep.subr.bf16.mxu0 %v1469
    %1533 = vmatpush1.bf16.msra.mxu0 %v1468
    %1534 = vmatprep.subr.bf16.mxu0 %v1471
    %1535 = vmatpush1.bf16.msra.mxu0 %v1470
    %1536 = vmatprep.subr.bf16.mxu0 %v1473
    %1537 = vmatpush1.bf16.msra.mxu0 %v1472
    %1538 = vmatprep.subr.bf16.mxu0 %v1475
    %1539 = vmatpush1.bf16.msra.mxu0 %v1474
    %1540 = vmatprep.subr.bf16.mxu0 %v1477
    %1541 = vmatpush1.bf16.msra.mxu0 %v1476
    %1542 = vmatprep.mubr.bf16.mxu0 %v1347
    %1543 = vmatmul.mubr.bf16.gmra.mrb[0].mxu0 %v1346
    %v1544 = vpop.f32.mrb[0].mxu0
    %v1545 = vadd.f32 %v1333, %v1544
    %v1546 = vpop.f32.mrb[0].mxu0
    %v1547 = vadd.f32 %v1335, %v1546
    %v1548 = vpop.f32.mrb[0].mxu0
    %v1549 = vpop.f32.mrb[0].mxu0
    %1550 = vdwg.mxu0
    %v1551 = vadd.f32 %v1053, %v1545
    %1552 = vst [vmem:[#allocation10 + $0x8] sm:$0xf] %v1551
    %s1553 = scalar_lea.vmem [#allocation2], 12
    %v1554 = vld [vmem:[%s1553] sm:$0xf]
    %v1555 = vld [vmem:[#allocation7] sm:$0xff]
    %v1556 = vld [vmem:[#allocation7 + $0x8] sm:$0xff]
    %v1557 = vld [vmem:[#allocation7 + $0x10] sm:$0xff]
    %v1558 = vld [vmem:[#allocation7 + $0x18] sm:$0xff]
    %v1559 = vld [vmem:[#allocation7 + $0x20] sm:$0xff]
    %v1560 = vld [vmem:[#allocation7 + $0x28] sm:$0xff]
    %v1561 = vld [vmem:[#allocation7 + $0x30] sm:$0xff]
    %v1562 = vld [vmem:[#allocation7 + $0x38] sm:$0xff]
    %v1563 = vld [vmem:[#allocation7 + $0x40] sm:$0xff]
    %v1564 = vld [vmem:[#allocation7 + $0x48] sm:$0xff]
    %v1565 = vld [vmem:[#allocation7 + $0x50] sm:$0xff]
    %v1566 = vld [vmem:[#allocation7 + $0x58] sm:$0xff]
    %v1567 = vld [vmem:[#allocation7 + $0x60] sm:$0xff]
    %v1568 = vld [vmem:[#allocation7 + $0x68] sm:$0xff]
    %v1569 = vld [vmem:[#allocation7 + $0x70] sm:$0xff]
    %v1570 = vld [vmem:[#allocation7 + $0x78] sm:$0xff]
    %v1571 = vld [vmem:[#allocation7 + $0x80] sm:$0xff]
    %v1572 = vld [vmem:[#allocation7 + $0x88] sm:$0xff]
    %v1573 = vld [vmem:[#allocation7 + $0x90] sm:$0xff]
    %v1574 = vld [vmem:[#allocation7 + $0x98] sm:$0xff]
    %v1575 = vld [vmem:[#allocation7 + $0xa0] sm:$0xff]
    %v1576 = vld [vmem:[#allocation7 + $0xa8] sm:$0xff]
    %v1577 = vld [vmem:[#allocation7 + $0xb0] sm:$0xff]
    %v1578 = vld [vmem:[#allocation7 + $0xb8] sm:$0xff]
    %v1579 = vld [vmem:[#allocation7 + $0xc0] sm:$0xff]
    %v1580 = vld [vmem:[#allocation7 + $0xc8] sm:$0xff]
    %v1581 = vld [vmem:[#allocation7 + $0xd0] sm:$0xff]
    %v1582 = vld [vmem:[#allocation7 + $0xd8] sm:$0xff]
    %v1583 = vld [vmem:[#allocation7 + $0xe0] sm:$0xff]
    %v1584 = vld [vmem:[#allocation7 + $0xe8] sm:$0xff]
    %v1585 = vld [vmem:[#allocation7 + $0xf0] sm:$0xff]
    %v1586 = vld [vmem:[#allocation7 + $0xf8] sm:$0xff]
    %s1587 = scalar_lea.vmem [#allocation5], 12
    %v1588 = vld [vmem:[%s1587] sm:$0xf]
    %v1589 = vld [vmem:[#allocation8] sm:$0xff]
    %v1590 = vld [vmem:[#allocation8 + $0x8] sm:$0xff]
    %v1591 = vld [vmem:[#allocation8 + $0x10] sm:$0xff]
    %v1592 = vld [vmem:[#allocation8 + $0x18] sm:$0xff]
    %v1593 = vld [vmem:[#allocation8 + $0x20] sm:$0xff]
    %v1594 = vld [vmem:[#allocation8 + $0x28] sm:$0xff]
    %v1595 = vld [vmem:[#allocation8 + $0x30] sm:$0xff]
    %v1596 = vld [vmem:[#allocation8 + $0x38] sm:$0xff]
    %v1597 = vld [vmem:[#allocation8 + $0x40] sm:$0xff]
    %v1598 = vld [vmem:[#allocation8 + $0x48] sm:$0xff]
    %v1599 = vld [vmem:[#allocation8 + $0x50] sm:$0xff]
    %v1600 = vld [vmem:[#allocation8 + $0x58] sm:$0xff]
    %v1601 = vld [vmem:[#allocation8 + $0x60] sm:$0xff]
    %v1602 = vld [vmem:[#allocation8 + $0x68] sm:$0xff]
    %v1603 = vld [vmem:[#allocation8 + $0x70] sm:$0xff]
    %v1604 = vld [vmem:[#allocation8 + $0x78] sm:$0xff]
    %v1605 = vld [vmem:[#allocation8 + $0x80] sm:$0xff]
    %v1606 = vld [vmem:[#allocation8 + $0x88] sm:$0xff]
    %v1607 = vld [vmem:[#allocation8 + $0x90] sm:$0xff]
    %v1608 = vld [vmem:[#allocation8 + $0x98] sm:$0xff]
    %v1609 = vld [vmem:[#allocation8 + $0xa0] sm:$0xff]
    %v1610 = vld [vmem:[#allocation8 + $0xa8] sm:$0xff]
    %v1611 = vld [vmem:[#allocation8 + $0xb0] sm:$0xff]
    %v1612 = vld [vmem:[#allocation8 + $0xb8] sm:$0xff]
    %v1613 = vld [vmem:[#allocation8 + $0xc0] sm:$0xff]
    %v1614 = vld [vmem:[#allocation8 + $0xc8] sm:$0xff]
    %v1615 = vld [vmem:[#allocation8 + $0xd0] sm:$0xff]
    %v1616 = vld [vmem:[#allocation8 + $0xd8] sm:$0xff]
    %v1617 = vld [vmem:[#allocation8 + $0xe0] sm:$0xff]
    %v1618 = vld [vmem:[#allocation8 + $0xe8] sm:$0xff]
    %v1619 = vld [vmem:[#allocation8 + $0xf0] sm:$0xff]
    %v1620 = vld [vmem:[#allocation8 + $0xf8] sm:$0xff]
    %v1623 = vunpack.c.l.s4 1983009808
    %v1624 = vunpack.c.0.s8 %v1623
    %v1625 = vlaneseq
    %v1626 = vshrl.u32 %v1625, 7
    %v1627 = vsub.s32 %v1624, %v1626
    %v1628 = vrot.slane %v1588, %v1627
    %v1629 = vcombine.high %v1628, %v1628
    %v1664 = vunpack.c.l.b16 %v1589
    %v1665 = vunpack.c.h.b16 %v1589
    %v1666 = vunpack.c.l.b16 %v1590
    %v1667 = vunpack.c.h.b16 %v1590
    %v1668 = vunpack.c.l.b16 %v1591
    %v1669 = vunpack.c.h.b16 %v1591
    %v1670 = vunpack.c.l.b16 %v1592
    %v1671 = vunpack.c.h.b16 %v1592
    %v1672 = vunpack.c.l.b16 %v1593
    %v1673 = vunpack.c.h.b16 %v1593
    %v1674 = vunpack.c.l.b16 %v1594
    %v1675 = vunpack.c.h.b16 %v1594
    %v1676 = vunpack.c.l.b16 %v1595
    %v1677 = vunpack.c.h.b16 %v1595
    %v1678 = vunpack.c.l.b16 %v1596
    %v1679 = vunpack.c.h.b16 %v1596
    %v1680 = vunpack.c.l.b16 %v1597
    %v1681 = vunpack.c.h.b16 %v1597
    %v1682 = vunpack.c.l.b16 %v1598
    %v1683 = vunpack.c.h.b16 %v1598
    %v1684 = vunpack.c.l.b16 %v1599
    %v1685 = vunpack.c.h.b16 %v1599
    %v1686 = vunpack.c.l.b16 %v1600
    %v1687 = vunpack.c.h.b16 %v1600
    %v1688 = vunpack.c.l.b16 %v1601
    %v1689 = vunpack.c.h.b16 %v1601
    %v1690 = vunpack.c.l.b16 %v1602
    %v1691 = vunpack.c.h.b16 %v1602
    %v1692 = vunpack.c.l.b16 %v1603
    %v1693 = vunpack.c.h.b16 %v1603
    %v1694 = vunpack.c.l.b16 %v1604
    %v1695 = vunpack.c.h.b16 %v1604
    %v1696 = vunpack.c.l.b16 %v1605
    %v1697 = vunpack.c.h.b16 %v1605
    %v1698 = vunpack.c.l.b16 %v1606
    %v1699 = vunpack.c.h.b16 %v1606
    %v1700 = vunpack.c.l.b16 %v1607
    %v1701 = vunpack.c.h.b16 %v1607
    %v1702 = vunpack.c.l.b16 %v1608
    %v1703 = vunpack.c.h.b16 %v1608
    %v1704 = vunpack.c.l.b16 %v1609
    %v1705 = vunpack.c.h.b16 %v1609
    %v1706 = vunpack.c.l.b16 %v1610
    %v1707 = vunpack.c.h.b16 %v1610
    %v1708 = vunpack.c.l.b16 %v1611
    %v1709 = vunpack.c.h.b16 %v1611
    %v1710 = vunpack.c.l.b16 %v1612
    %v1711 = vunpack.c.h.b16 %v1612
    %v1712 = vunpack.c.l.b16 %v1613
    %v1713 = vunpack.c.h.b16 %v1613
    %v1714 = vunpack.c.l.b16 %v1614
    %v1715 = vunpack.c.h.b16 %v1614
    %v1716 = vunpack.c.l.b16 %v1615
    %v1717 = vunpack.c.h.b16 %v1615
    %v1718 = vunpack.c.l.b16 %v1616
    %v1719 = vunpack.c.h.b16 %v1616
    %v1720 = vunpack.c.l.b16 %v1617
    %v1721 = vunpack.c.h.b16 %v1617
    %v1722 = vunpack.c.l.b16 %v1618
    %v1723 = vunpack.c.h.b16 %v1618
    %v1724 = vunpack.c.l.b16 %v1619
    %v1725 = vunpack.c.h.b16 %v1619
    %v1726 = vunpack.c.l.b16 %v1620
    %v1727 = vunpack.c.h.b16 %v1620
    %v1728 = vpack.c.b16 %v1666, %v1664
    %v1729 = vpack.c.b16 %v1667, %v1665
    %v1730 = vpack.c.b16 %v1670, %v1668
    %v1731 = vpack.c.b16 %v1671, %v1669
    %v1732 = vpack.c.b16 %v1674, %v1672
    %v1733 = vpack.c.b16 %v1675, %v1673
    %v1734 = vpack.c.b16 %v1678, %v1676
    %v1735 = vpack.c.b16 %v1679, %v1677
    %v1736 = vpack.c.b16 %v1682, %v1680
    %v1737 = vpack.c.b16 %v1683, %v1681
    %v1738 = vpack.c.b16 %v1686, %v1684
    %v1739 = vpack.c.b16 %v1687, %v1685
    %v1740 = vpack.c.b16 %v1690, %v1688
    %v1741 = vpack.c.b16 %v1691, %v1689
    %v1742 = vpack.c.b16 %v1694, %v1692
    %v1743 = vpack.c.b16 %v1695, %v1693
    %v1744 = vpack.c.b16 %v1698, %v1696
    %v1745 = vpack.c.b16 %v1699, %v1697
    %v1746 = vpack.c.b16 %v1702, %v1700
    %v1747 = vpack.c.b16 %v1703, %v1701
    %v1748 = vpack.c.b16 %v1706, %v1704
    %v1749 = vpack.c.b16 %v1707, %v1705
    %v1750 = vpack.c.b16 %v1710, %v1708
    %v1751 = vpack.c.b16 %v1711, %v1709
    %v1752 = vpack.c.b16 %v1714, %v1712
    %v1753 = vpack.c.b16 %v1715, %v1713
    %v1754 = vpack.c.b16 %v1718, %v1716
    %v1755 = vpack.c.b16 %v1719, %v1717
    %v1756 = vpack.c.b16 %v1722, %v1720
    %v1757 = vpack.c.b16 %v1723, %v1721
    %v1758 = vpack.c.b16 %v1726, %v1724
    %v1759 = vpack.c.b16 %v1727, %v1725
    %1792 = vmatprep.subr.bf16.mxu0 %v1729
    %1793 = vmatpush1.bf16.msra.mxu0 %v1728
    %1794 = vmatprep.subr.bf16.mxu0 %v1731
    %1795 = vmatpush1.bf16.msra.mxu0 %v1730
    %1796 = vmatprep.subr.bf16.mxu0 %v1733
    %1797 = vmatpush1.bf16.msra.mxu0 %v1732
    %1798 = vmatprep.subr.bf16.mxu0 %v1735
    %1799 = vmatpush1.bf16.msra.mxu0 %v1734
    %1800 = vmatprep.subr.bf16.mxu0 %v1737
    %1801 = vmatpush1.bf16.msra.mxu0 %v1736
    %1802 = vmatprep.subr.bf16.mxu0 %v1739
    %1803 = vmatpush1.bf16.msra.mxu0 %v1738
    %1804 = vmatprep.subr.bf16.mxu0 %v1741
    %1805 = vmatpush1.bf16.msra.mxu0 %v1740
    %1806 = vmatprep.subr.bf16.mxu0 %v1743
    %1807 = vmatpush1.bf16.msra.mxu0 %v1742
    %1808 = vmatprep.subr.bf16.mxu0 %v1745
    %1809 = vmatpush1.bf16.msra.mxu0 %v1744
    %1810 = vmatprep.subr.bf16.mxu0 %v1747
    %1811 = vmatpush1.bf16.msra.mxu0 %v1746
    %1812 = vmatprep.subr.bf16.mxu0 %v1749
    %1813 = vmatpush1.bf16.msra.mxu0 %v1748
    %1814 = vmatprep.subr.bf16.mxu0 %v1751
    %1815 = vmatpush1.bf16.msra.mxu0 %v1750
    %1816 = vmatprep.subr.bf16.mxu0 %v1753
    %1817 = vmatpush1.bf16.msra.mxu0 %v1752
    %1818 = vmatprep.subr.bf16.mxu0 %v1755
    %1819 = vmatpush1.bf16.msra.mxu0 %v1754
    %1820 = vmatprep.subr.bf16.mxu0 %v1757
    %1821 = vmatpush1.bf16.msra.mxu0 %v1756
    %1822 = vmatprep.subr.bf16.mxu0 %v1759
    %1823 = vmatpush1.bf16.msra.mxu0 %v1758
    %1824 = vmatprep.mubr.bf16.mxu0 %v1629
    %1825 = vmatmul.mubr.bf16.gmra.mrb[0].mxu0 %v1628
    %v1826 = vpop.f32.mrb[0].mxu0
    %v1827 = vadd.f32 0.0, %v1826
    %v1828 = vpop.f32.mrb[0].mxu0
    %v1829 = vadd.f32 0.0, %v1828
    %v1830 = vpop.f32.mrb[0].mxu0
    %v1831 = vpop.f32.mrb[0].mxu0
    %1832 = vdwg.mxu0
    %v1835 = vunpack.c.l.s4 1983009808
    %v1836 = vunpack.c.0.s8 %v1835
    %v1837 = vlaneseq
    %v1838 = vshrl.u32 %v1837, 7
    %v1839 = vsub.s32 %v1836, %v1838
    %v1840 = vrot.slane %v1554, %v1839
    %v1841 = vcombine.high %v1840, %v1840
    %v1876 = vunpack.c.l.b16 %v1555
    %v1877 = vunpack.c.h.b16 %v1555
    %v1878 = vunpack.c.l.b16 %v1556
    %v1879 = vunpack.c.h.b16 %v1556
    %v1880 = vunpack.c.l.b16 %v1557
    %v1881 = vunpack.c.h.b16 %v1557
    %v1882 = vunpack.c.l.b16 %v1558
    %v1883 = vunpack.c.h.b16 %v1558
    %v1884 = vunpack.c.l.b16 %v1559
    %v1885 = vunpack.c.h.b16 %v1559
    %v1886 = vunpack.c.l.b16 %v1560
    %v1887 = vunpack.c.h.b16 %v1560
    %v1888 = vunpack.c.l.b16 %v1561
    %v1889 = vunpack.c.h.b16 %v1561
    %v1890 = vunpack.c.l.b16 %v1562
    %v1891 = vunpack.c.h.b16 %v1562
    %v1892 = vunpack.c.l.b16 %v1563
    %v1893 = vunpack.c.h.b16 %v1563
    %v1894 = vunpack.c.l.b16 %v1564
    %v1895 = vunpack.c.h.b16 %v1564
    %v1896 = vunpack.c.l.b16 %v1565
    %v1897 = vunpack.c.h.b16 %v1565
    %v1898 = vunpack.c.l.b16 %v1566
    %v1899 = vunpack.c.h.b16 %v1566
    %v1900 = vunpack.c.l.b16 %v1567
    %v1901 = vunpack.c.h.b16 %v1567
    %v1902 = vunpack.c.l.b16 %v1568
    %v1903 = vunpack.c.h.b16 %v1568
    %v1904 = vunpack.c.l.b16 %v1569
    %v1905 = vunpack.c.h.b16 %v1569
    %v1906 = vunpack.c.l.b16 %v1570
    %v1907 = vunpack.c.h.b16 %v1570
    %v1908 = vunpack.c.l.b16 %v1571
    %v1909 = vunpack.c.h.b16 %v1571
    %v1910 = vunpack.c.l.b16 %v1572
    %v1911 = vunpack.c.h.b16 %v1572
    %v1912 = vunpack.c.l.b16 %v1573
    %v1913 = vunpack.c.h.b16 %v1573
    %v1914 = vunpack.c.l.b16 %v1574
    %v1915 = vunpack.c.h.b16 %v1574
    %v1916 = vunpack.c.l.b16 %v1575
    %v1917 = vunpack.c.h.b16 %v1575
    %v1918 = vunpack.c.l.b16 %v1576
    %v1919 = vunpack.c.h.b16 %v1576
    %v1920 = vunpack.c.l.b16 %v1577
    %v1921 = vunpack.c.h.b16 %v1577
    %v1922 = vunpack.c.l.b16 %v1578
    %v1923 = vunpack.c.h.b16 %v1578
    %v1924 = vunpack.c.l.b16 %v1579
    %v1925 = vunpack.c.h.b16 %v1579
    %v1926 = vunpack.c.l.b16 %v1580
    %v1927 = vunpack.c.h.b16 %v1580
    %v1928 = vunpack.c.l.b16 %v1581
    %v1929 = vunpack.c.h.b16 %v1581
    %v1930 = vunpack.c.l.b16 %v1582
    %v1931 = vunpack.c.h.b16 %v1582
    %v1932 = vunpack.c.l.b16 %v1583
    %v1933 = vunpack.c.h.b16 %v1583
    %v1934 = vunpack.c.l.b16 %v1584
    %v1935 = vunpack.c.h.b16 %v1584
    %v1936 = vunpack.c.l.b16 %v1585
    %v1937 = vunpack.c.h.b16 %v1585
    %v1938 = vunpack.c.l.b16 %v1586
    %v1939 = vunpack.c.h.b16 %v1586
    %v1940 = vpack.c.b16 %v1878, %v1876
    %v1941 = vpack.c.b16 %v1879, %v1877
    %v1942 = vpack.c.b16 %v1882, %v1880
    %v1943 = vpack.c.b16 %v1883, %v1881
    %v1944 = vpack.c.b16 %v1886, %v1884
    %v1945 = vpack.c.b16 %v1887, %v1885
    %v1946 = vpack.c.b16 %v1890, %v1888
    %v1947 = vpack.c.b16 %v1891, %v1889
    %v1948 = vpack.c.b16 %v1894, %v1892
    %v1949 = vpack.c.b16 %v1895, %v1893
    %v1950 = vpack.c.b16 %v1898, %v1896
    %v1951 = vpack.c.b16 %v1899, %v1897
    %v1952 = vpack.c.b16 %v1902, %v1900
    %v1953 = vpack.c.b16 %v1903, %v1901
    %v1954 = vpack.c.b16 %v1906, %v1904
    %v1955 = vpack.c.b16 %v1907, %v1905
    %v1956 = vpack.c.b16 %v1910, %v1908
    %v1957 = vpack.c.b16 %v1911, %v1909
    %v1958 = vpack.c.b16 %v1914, %v1912
    %v1959 = vpack.c.b16 %v1915, %v1913
    %v1960 = vpack.c.b16 %v1918, %v1916
    %v1961 = vpack.c.b16 %v1919, %v1917
    %v1962 = vpack.c.b16 %v1922, %v1920
    %v1963 = vpack.c.b16 %v1923, %v1921
    %v1964 = vpack.c.b16 %v1926, %v1924
    %v1965 = vpack.c.b16 %v1927, %v1925
    %v1966 = vpack.c.b16 %v1930, %v1928
    %v1967 = vpack.c.b16 %v1931, %v1929
    %v1968 = vpack.c.b16 %v1934, %v1932
    %v1969 = vpack.c.b16 %v1935, %v1933
    %v1970 = vpack.c.b16 %v1938, %v1936
    %v1971 = vpack.c.b16 %v1939, %v1937
    %2004 = vmatprep.subr.bf16.mxu0 %v1941
    %2005 = vmatpush1.bf16.msra.mxu0 %v1940
    %2006 = vmatprep.subr.bf16.mxu0 %v1943
    %2007 = vmatpush1.bf16.msra.mxu0 %v1942
    %2008 = vmatprep.subr.bf16.mxu0 %v1945
    %2009 = vmatpush1.bf16.msra.mxu0 %v1944
    %2010 = vmatprep.subr.bf16.mxu0 %v1947
    %2011 = vmatpush1.bf16.msra.mxu0 %v1946
    %2012 = vmatprep.subr.bf16.mxu0 %v1949
    %2013 = vmatpush1.bf16.msra.mxu0 %v1948
    %2014 = vmatprep.subr.bf16.mxu0 %v1951
    %2015 = vmatpush1.bf16.msra.mxu0 %v1950
    %2016 = vmatprep.subr.bf16.mxu0 %v1953
    %2017 = vmatpush1.bf16.msra.mxu0 %v1952
    %2018 = vmatprep.subr.bf16.mxu0 %v1955
    %2019 = vmatpush1.bf16.msra.mxu0 %v1954
    %2020 = vmatprep.subr.bf16.mxu0 %v1957
    %2021 = vmatpush1.bf16.msra.mxu0 %v1956
    %2022 = vmatprep.subr.bf16.mxu0 %v1959
    %2023 = vmatpush1.bf16.msra.mxu0 %v1958
    %2024 = vmatprep.subr.bf16.mxu0 %v1961
    %2025 = vmatpush1.bf16.msra.mxu0 %v1960
    %2026 = vmatprep.subr.bf16.mxu0 %v1963
    %2027 = vmatpush1.bf16.msra.mxu0 %v1962
    %2028 = vmatprep.subr.bf16.mxu0 %v1965
    %2029 = vmatpush1.bf16.msra.mxu0 %v1964
    %2030 = vmatprep.subr.bf16.mxu0 %v1967
    %2031 = vmatpush1.bf16.msra.mxu0 %v1966
    %2032 = vmatprep.subr.bf16.mxu0 %v1969
    %2033 = vmatpush1.bf16.msra.mxu0 %v1968
    %2034 = vmatprep.subr.bf16.mxu0 %v1971
    %2035 = vmatpush1.bf16.msra.mxu0 %v1970
    %2036 = vmatprep.mubr.bf16.mxu0 %v1841
    %2037 = vmatmul.mubr.bf16.gmra.mrb[0].mxu0 %v1840
    %v2038 = vpop.f32.mrb[0].mxu0
    %v2039 = vadd.f32 %v1827, %v2038
    %v2040 = vpop.f32.mrb[0].mxu0
    %v2041 = vadd.f32 %v1829, %v2040
    %v2042 = vpop.f32.mrb[0].mxu0
    %v2043 = vpop.f32.mrb[0].mxu0
    %2044 = vdwg.mxu0
    %v2045 = vadd.f32 %v1547, %v2039
    %2046 = vst [vmem:[#allocation10 + $0xc] sm:$0xf] %v2045
    %s2047 = scalar_lea.vmem [#allocation2], 16
    %v2048 = vld [vmem:[%s2047] sm:$0xf]
    %v2049 = vld [vmem:[#allocation7] sm:$0xff]
    %v2050 = vld [vmem:[#allocation7 + $0x8] sm:$0xff]
    %v2051 = vld [vmem:[#allocation7 + $0x10] sm:$0xff]
    %v2052 = vld [vmem:[#allocation7 + $0x18] sm:$0xff]
    %v2053 = vld [vmem:[#allocation7 + $0x20] sm:$0xff]
    %v2054 = vld [vmem:[#allocation7 + $0x28] sm:$0xff]
    %v2055 = vld [vmem:[#allocation7 + $0x30] sm:$0xff]
    %v2056 = vld [vmem:[#allocation7 + $0x38] sm:$0xff]
    %v2057 = vld [vmem:[#allocation7 + $0x40] sm:$0xff]
    %v2058 = vld [vmem:[#allocation7 + $0x48] sm:$0xff]
    %v2059 = vld [vmem:[#allocation7 + $0x50] sm:$0xff]
    %v2060 = vld [vmem:[#allocation7 + $0x58] sm:$0xff]
    %v2061 = vld [vmem:[#allocation7 + $0x60] sm:$0xff]
    %v2062 = vld [vmem:[#allocation7 + $0x68] sm:$0xff]
    %v2063 = vld [vmem:[#allocation7 + $0x70] sm:$0xff]
    %v2064 = vld [vmem:[#allocation7 + $0x78] sm:$0xff]
    %v2065 = vld [vmem:[#allocation7 + $0x80] sm:$0xff]
    %v2066 = vld [vmem:[#allocation7 + $0x88] sm:$0xff]
    %v2067 = vld [vmem:[#allocation7 + $0x90] sm:$0xff]
    %v2068 = vld [vmem:[#allocation7 + $0x98] sm:$0xff]
    %v2069 = vld [vmem:[#allocation7 + $0xa0] sm:$0xff]
    %v2070 = vld [vmem:[#allocation7 + $0xa8] sm:$0xff]
    %v2071 = vld [vmem:[#allocation7 + $0xb0] sm:$0xff]
    %v2072 = vld [vmem:[#allocation7 + $0xb8] sm:$0xff]
    %v2073 = vld [vmem:[#allocation7 + $0xc0] sm:$0xff]
    %v2074 = vld [vmem:[#allocation7 + $0xc8] sm:$0xff]
    %v2075 = vld [vmem:[#allocation7 + $0xd0] sm:$0xff]
    %v2076 = vld [vmem:[#allocation7 + $0xd8] sm:$0xff]
    %v2077 = vld [vmem:[#allocation7 + $0xe0] sm:$0xff]
    %v2078 = vld [vmem:[#allocation7 + $0xe8] sm:$0xff]
    %v2079 = vld [vmem:[#allocation7 + $0xf0] sm:$0xff]
    %v2080 = vld [vmem:[#allocation7 + $0xf8] sm:$0xff]
    %s2081 = scalar_lea.vmem [#allocation5], 16
    %v2082 = vld [vmem:[%s2081] sm:$0xf]
    %v2083 = vld [vmem:[#allocation8] sm:$0xff]
    %v2084 = vld [vmem:[#allocation8 + $0x8] sm:$0xff]
    %v2085 = vld [vmem:[#allocation8 + $0x10] sm:$0xff]
    %v2086 = vld [vmem:[#allocation8 + $0x18] sm:$0xff]
    %v2087 = vld [vmem:[#allocation8 + $0x20] sm:$0xff]
    %v2088 = vld [vmem:[#allocation8 + $0x28] sm:$0xff]
    %v2089 = vld [vmem:[#allocation8 + $0x30] sm:$0xff]
    %v2090 = vld [vmem:[#allocation8 + $0x38] sm:$0xff]
    %v2091 = vld [vmem:[#allocation8 + $0x40] sm:$0xff]
    %v2092 = vld [vmem:[#allocation8 + $0x48] sm:$0xff]
    %v2093 = vld [vmem:[#allocation8 + $0x50] sm:$0xff]
    %v2094 = vld [vmem:[#allocation8 + $0x58] sm:$0xff]
    %v2095 = vld [vmem:[#allocation8 + $0x60] sm:$0xff]
    %v2096 = vld [vmem:[#allocation8 + $0x68] sm:$0xff]
    %v2097 = vld [vmem:[#allocation8 + $0x70] sm:$0xff]
    %v2098 = vld [vmem:[#allocation8 + $0x78] sm:$0xff]
    %v2099 = vld [vmem:[#allocation8 + $0x80] sm:$0xff]
    %v2100 = vld [vmem:[#allocation8 + $0x88] sm:$0xff]
    %v2101 = vld [vmem:[#allocation8 + $0x90] sm:$0xff]
    %v2102 = vld [vmem:[#allocation8 + $0x98] sm:$0xff]
    %v2103 = vld [vmem:[#allocation8 + $0xa0] sm:$0xff]
    %v2104 = vld [vmem:[#allocation8 + $0xa8] sm:$0xff]
    %v2105 = vld [vmem:[#allocation8 + $0xb0] sm:$0xff]
    %v2106 = vld [vmem:[#allocation8 + $0xb8] sm:$0xff]
    %v2107 = vld [vmem:[#allocation8 + $0xc0] sm:$0xff]
    %v2108 = vld [vmem:[#allocation8 + $0xc8] sm:$0xff]
    %v2109 = vld [vmem:[#allocation8 + $0xd0] sm:$0xff]
    %v2110 = vld [vmem:[#allocation8 + $0xd8] sm:$0xff]
    %v2111 = vld [vmem:[#allocation8 + $0xe0] sm:$0xff]
    %v2112 = vld [vmem:[#allocation8 + $0xe8] sm:$0xff]
    %v2113 = vld [vmem:[#allocation8 + $0xf0] sm:$0xff]
    %v2114 = vld [vmem:[#allocation8 + $0xf8] sm:$0xff]
    %v2117 = vunpack.c.l.s4 1983009808
    %v2118 = vunpack.c.0.s8 %v2117
    %v2119 = vlaneseq
    %v2120 = vshrl.u32 %v2119, 7
    %v2121 = vsub.s32 %v2118, %v2120
    %v2122 = vrot.slane %v2082, %v2121
    %v2123 = vcombine.high %v2122, %v2122
    %v2158 = vunpack.c.l.b16 %v2083
    %v2159 = vunpack.c.h.b16 %v2083
    %v2160 = vunpack.c.l.b16 %v2084
    %v2161 = vunpack.c.h.b16 %v2084
    %v2162 = vunpack.c.l.b16 %v2085
    %v2163 = vunpack.c.h.b16 %v2085
    %v2164 = vunpack.c.l.b16 %v2086
    %v2165 = vunpack.c.h.b16 %v2086
    %v2166 = vunpack.c.l.b16 %v2087
    %v2167 = vunpack.c.h.b16 %v2087
    %v2168 = vunpack.c.l.b16 %v2088
    %v2169 = vunpack.c.h.b16 %v2088
    %v2170 = vunpack.c.l.b16 %v2089
    %v2171 = vunpack.c.h.b16 %v2089
    %v2172 = vunpack.c.l.b16 %v2090
    %v2173 = vunpack.c.h.b16 %v2090
    %v2174 = vunpack.c.l.b16 %v2091
    %v2175 = vunpack.c.h.b16 %v2091
    %v2176 = vunpack.c.l.b16 %v2092
    %v2177 = vunpack.c.h.b16 %v2092
    %v2178 = vunpack.c.l.b16 %v2093
    %v2179 = vunpack.c.h.b16 %v2093
    %v2180 = vunpack.c.l.b16 %v2094
    %v2181 = vunpack.c.h.b16 %v2094
    %v2182 = vunpack.c.l.b16 %v2095
    %v2183 = vunpack.c.h.b16 %v2095
    %v2184 = vunpack.c.l.b16 %v2096
    %v2185 = vunpack.c.h.b16 %v2096
    %v2186 = vunpack.c.l.b16 %v2097
    %v2187 = vunpack.c.h.b16 %v2097
    %v2188 = vunpack.c.l.b16 %v2098
    %v2189 = vunpack.c.h.b16 %v2098
    %v2190 = vunpack.c.l.b16 %v2099
    %v2191 = vunpack.c.h.b16 %v2099
    %v2192 = vunpack.c.l.b16 %v2100
    %v2193 = vunpack.c.h.b16 %v2100
    %v2194 = vunpack.c.l.b16 %v2101
    %v2195 = vunpack.c.h.b16 %v2101
    %v2196 = vunpack.c.l.b16 %v2102
    %v2197 = vunpack.c.h.b16 %v2102
    %v2198 = vunpack.c.l.b16 %v2103
    %v2199 = vunpack.c.h.b16 %v2103
    %v2200 = vunpack.c.l.b16 %v2104
    %v2201 = vunpack.c.h.b16 %v2104
    %v2202 = vunpack.c.l.b16 %v2105
    %v2203 = vunpack.c.h.b16 %v2105
    %v2204 = vunpack.c.l.b16 %v2106
    %v2205 = vunpack.c.h.b16 %v2106
    %v2206 = vunpack.c.l.b16 %v2107
    %v2207 = vunpack.c.h.b16 %v2107
    %v2208 = vunpack.c.l.b16 %v2108
    %v2209 = vunpack.c.h.b16 %v2108
    %v2210 = vunpack.c.l.b16 %v2109
    %v2211 = vunpack.c.h.b16 %v2109
    %v2212 = vunpack.c.l.b16 %v2110
    %v2213 = vunpack.c.h.b16 %v2110
    %v2214 = vunpack.c.l.b16 %v2111
    %v2215 = vunpack.c.h.b16 %v2111
    %v2216 = vunpack.c.l.b16 %v2112
    %v2217 = vunpack.c.h.b16 %v2112
    %v2218 = vunpack.c.l.b16 %v2113
    %v2219 = vunpack.c.h.b16 %v2113
    %v2220 = vunpack.c.l.b16 %v2114
    %v2221 = vunpack.c.h.b16 %v2114
    %v2222 = vpack.c.b16 %v2160, %v2158
    %v2223 = vpack.c.b16 %v2161, %v2159
    %v2224 = vpack.c.b16 %v2164, %v2162
    %v2225 = vpack.c.b16 %v2165, %v2163
    %v2226 = vpack.c.b16 %v2168, %v2166
    %v2227 = vpack.c.b16 %v2169, %v2167
    %v2228 = vpack.c.b16 %v2172, %v2170
    %v2229 = vpack.c.b16 %v2173, %v2171
    %v2230 = vpack.c.b16 %v2176, %v2174
    %v2231 = vpack.c.b16 %v2177, %v2175
    %v2232 = vpack.c.b16 %v2180, %v2178
    %v2233 = vpack.c.b16 %v2181, %v2179
    %v2234 = vpack.c.b16 %v2184, %v2182
    %v2235 = vpack.c.b16 %v2185, %v2183
    %v2236 = vpack.c.b16 %v2188, %v2186
    %v2237 = vpack.c.b16 %v2189, %v2187
    %v2238 = vpack.c.b16 %v2192, %v2190
    %v2239 = vpack.c.b16 %v2193, %v2191
    %v2240 = vpack.c.b16 %v2196, %v2194
    %v2241 = vpack.c.b16 %v2197, %v2195
    %v2242 = vpack.c.b16 %v2200, %v2198
    %v2243 = vpack.c.b16 %v2201, %v2199
    %v2244 = vpack.c.b16 %v2204, %v2202
    %v2245 = vpack.c.b16 %v2205, %v2203
    %v2246 = vpack.c.b16 %v2208, %v2206
    %v2247 = vpack.c.b16 %v2209, %v2207
    %v2248 = vpack.c.b16 %v2212, %v2210
    %v2249 = vpack.c.b16 %v2213, %v2211
    %v2250 = vpack.c.b16 %v2216, %v2214
    %v2251 = vpack.c.b16 %v2217, %v2215
    %v2252 = vpack.c.b16 %v2220, %v2218
    %v2253 = vpack.c.b16 %v2221, %v2219
    %2286 = vmatprep.subr.bf16.mxu0 %v2223
    %2287 = vmatpush1.bf16.msra.mxu0 %v2222
    %2288 = vmatprep.subr.bf16.mxu0 %v2225
    %2289 = vmatpush1.bf16.msra.mxu0 %v2224
    %2290 = vmatprep.subr.bf16.mxu0 %v2227
    %2291 = vmatpush1.bf16.msra.mxu0 %v2226
    %2292 = vmatprep.subr.bf16.mxu0 %v2229
    %2293 = vmatpush1.bf16.msra.mxu0 %v2228
    %2294 = vmatprep.subr.bf16.mxu0 %v2231
    %2295 = vmatpush1.bf16.msra.mxu0 %v2230
    %2296 = vmatprep.subr.bf16.mxu0 %v2233
    %2297 = vmatpush1.bf16.msra.mxu0 %v2232
    %2298 = vmatprep.subr.bf16.mxu0 %v2235
    %2299 = vmatpush1.bf16.msra.mxu0 %v2234
    %2300 = vmatprep.subr.bf16.mxu0 %v2237
    %2301 = vmatpush1.bf16.msra.mxu0 %v2236
    %2302 = vmatprep.subr.bf16.mxu0 %v2239
    %2303 = vmatpush1.bf16.msra.mxu0 %v2238
    %2304 = vmatprep.subr.bf16.mxu0 %v2241
    %2305 = vmatpush1.bf16.msra.mxu0 %v2240
    %2306 = vmatprep.subr.bf16.mxu0 %v2243
    %2307 = vmatpush1.bf16.msra.mxu0 %v2242
    %2308 = vmatprep.subr.bf16.mxu0 %v2245
    %2309 = vmatpush1.bf16.msra.mxu0 %v2244
    %2310 = vmatprep.subr.bf16.mxu0 %v2247
    %2311 = vmatpush1.bf16.msra.mxu0 %v2246
    %2312 = vmatprep.subr.bf16.mxu0 %v2249
    %2313 = vmatpush1.bf16.msra.mxu0 %v2248
    %2314 = vmatprep.subr.bf16.mxu0 %v2251
    %2315 = vmatpush1.bf16.msra.mxu0 %v2250
    %2316 = vmatprep.subr.bf16.mxu0 %v2253
    %2317 = vmatpush1.bf16.msra.mxu0 %v2252
    %2318 = vmatprep.mubr.bf16.mxu0 %v2123
    %2319 = vmatmul.mubr.bf16.gmra.mrb[0].mxu0 %v2122
    %v2320 = vpop.f32.mrb[0].mxu0
    %v2321 = vadd.f32 0.0, %v2320
    %v2322 = vpop.f32.mrb[0].mxu0
    %v2323 = vpop.f32.mrb[0].mxu0
    %v2324 = vpop.f32.mrb[0].mxu0
    %2325 = vdwg.mxu0
    %v2328 = vunpack.c.l.s4 1983009808
    %v2329 = vunpack.c.0.s8 %v2328
    %v2330 = vlaneseq
    %v2331 = vshrl.u32 %v2330, 7
    %v2332 = vsub.s32 %v2329, %v2331
    %v2333 = vrot.slane %v2048, %v2332
    %v2334 = vcombine.high %v2333, %v2333
    %v2369 = vunpack.c.l.b16 %v2049
    %v2370 = vunpack.c.h.b16 %v2049
    %v2371 = vunpack.c.l.b16 %v2050
    %v2372 = vunpack.c.h.b16 %v2050
    %v2373 = vunpack.c.l.b16 %v2051
    %v2374 = vunpack.c.h.b16 %v2051
    %v2375 = vunpack.c.l.b16 %v2052
    %v2376 = vunpack.c.h.b16 %v2052
    %v2377 = vunpack.c.l.b16 %v2053
    %v2378 = vunpack.c.h.b16 %v2053
    %v2379 = vunpack.c.l.b16 %v2054
    %v2380 = vunpack.c.h.b16 %v2054
    %v2381 = vunpack.c.l.b16 %v2055
    %v2382 = vunpack.c.h.b16 %v2055
    %v2383 = vunpack.c.l.b16 %v2056
    %v2384 = vunpack.c.h.b16 %v2056
    %v2385 = vunpack.c.l.b16 %v2057
    %v2386 = vunpack.c.h.b16 %v2057
    %v2387 = vunpack.c.l.b16 %v2058
    %v2388 = vunpack.c.h.b16 %v2058
    %v2389 = vunpack.c.l.b16 %v2059
    %v2390 = vunpack.c.h.b16 %v2059
    %v2391 = vunpack.c.l.b16 %v2060
    %v2392 = vunpack.c.h.b16 %v2060
    %v2393 = vunpack.c.l.b16 %v2061
    %v2394 = vunpack.c.h.b16 %v2061
    %v2395 = vunpack.c.l.b16 %v2062
    %v2396 = vunpack.c.h.b16 %v2062
    %v2397 = vunpack.c.l.b16 %v2063
    %v2398 = vunpack.c.h.b16 %v2063
    %v2399 = vunpack.c.l.b16 %v2064
    %v2400 = vunpack.c.h.b16 %v2064
    %v2401 = vunpack.c.l.b16 %v2065
    %v2402 = vunpack.c.h.b16 %v2065
    %v2403 = vunpack.c.l.b16 %v2066
    %v2404 = vunpack.c.h.b16 %v2066
    %v2405 = vunpack.c.l.b16 %v2067
    %v2406 = vunpack.c.h.b16 %v2067
    %v2407 = vunpack.c.l.b16 %v2068
    %v2408 = vunpack.c.h.b16 %v2068
    %v2409 = vunpack.c.l.b16 %v2069
    %v2410 = vunpack.c.h.b16 %v2069
    %v2411 = vunpack.c.l.b16 %v2070
    %v2412 = vunpack.c.h.b16 %v2070
    %v2413 = vunpack.c.l.b16 %v2071
    %v2414 = vunpack.c.h.b16 %v2071
    %v2415 = vunpack.c.l.b16 %v2072
    %v2416 = vunpack.c.h.b16 %v2072
    %v2417 = vunpack.c.l.b16 %v2073
    %v2418 = vunpack.c.h.b16 %v2073
    %v2419 = vunpack.c.l.b16 %v2074
    %v2420 = vunpack.c.h.b16 %v2074
    %v2421 = vunpack.c.l.b16 %v2075
    %v2422 = vunpack.c.h.b16 %v2075
    %v2423 = vunpack.c.l.b16 %v2076
    %v2424 = vunpack.c.h.b16 %v2076
    %v2425 = vunpack.c.l.b16 %v2077
    %v2426 = vunpack.c.h.b16 %v2077
    %v2427 = vunpack.c.l.b16 %v2078
    %v2428 = vunpack.c.h.b16 %v2078
    %v2429 = vunpack.c.l.b16 %v2079
    %v2430 = vunpack.c.h.b16 %v2079
    %v2431 = vunpack.c.l.b16 %v2080
    %v2432 = vunpack.c.h.b16 %v2080
    %v2433 = vpack.c.b16 %v2371, %v2369
    %v2434 = vpack.c.b16 %v2372, %v2370
    %v2435 = vpack.c.b16 %v2375, %v2373
    %v2436 = vpack.c.b16 %v2376, %v2374
    %v2437 = vpack.c.b16 %v2379, %v2377
    %v2438 = vpack.c.b16 %v2380, %v2378
    %v2439 = vpack.c.b16 %v2383, %v2381
    %v2440 = vpack.c.b16 %v2384, %v2382
    %v2441 = vpack.c.b16 %v2387, %v2385
    %v2442 = vpack.c.b16 %v2388, %v2386
    %v2443 = vpack.c.b16 %v2391, %v2389
    %v2444 = vpack.c.b16 %v2392, %v2390
    %v2445 = vpack.c.b16 %v2395, %v2393
    %v2446 = vpack.c.b16 %v2396, %v2394
    %v2447 = vpack.c.b16 %v2399, %v2397
    %v2448 = vpack.c.b16 %v2400, %v2398
    %v2449 = vpack.c.b16 %v2403, %v2401
    %v2450 = vpack.c.b16 %v2404, %v2402
    %v2451 = vpack.c.b16 %v2407, %v2405
    %v2452 = vpack.c.b16 %v2408, %v2406
    %v2453 = vpack.c.b16 %v2411, %v2409
    %v2454 = vpack.c.b16 %v2412, %v2410
    %v2455 = vpack.c.b16 %v2415, %v2413
    %v2456 = vpack.c.b16 %v2416, %v2414
    %v2457 = vpack.c.b16 %v2419, %v2417
    %v2458 = vpack.c.b16 %v2420, %v2418
    %v2459 = vpack.c.b16 %v2423, %v2421
    %v2460 = vpack.c.b16 %v2424, %v2422
    %v2461 = vpack.c.b16 %v2427, %v2425
    %v2462 = vpack.c.b16 %v2428, %v2426
    %v2463 = vpack.c.b16 %v2431, %v2429
    %v2464 = vpack.c.b16 %v2432, %v2430
    %2497 = vmatprep.subr.bf16.mxu0 %v2434
    %2498 = vmatpush1.bf16.msra.mxu0 %v2433
    %2499 = vmatprep.subr.bf16.mxu0 %v2436
    %2500 = vmatpush1.bf16.msra.mxu0 %v2435
    %2501 = vmatprep.subr.bf16.mxu0 %v2438
    %2502 = vmatpush1.bf16.msra.mxu0 %v2437
    %2503 = vmatprep.subr.bf16.mxu0 %v2440
    %2504 = vmatpush1.bf16.msra.mxu0 %v2439
    %2505 = vmatprep.subr.bf16.mxu0 %v2442
    %2506 = vmatpush1.bf16.msra.mxu0 %v2441
    %2507 = vmatprep.subr.bf16.mxu0 %v2444
    %2508 = vmatpush1.bf16.msra.mxu0 %v2443
    %2509 = vmatprep.subr.bf16.mxu0 %v2446
    %2510 = vmatpush1.bf16.msra.mxu0 %v2445
    %2511 = vmatprep.subr.bf16.mxu0 %v2448
    %2512 = vmatpush1.bf16.msra.mxu0 %v2447
    %2513 = vmatprep.subr.bf16.mxu0 %v2450
    %2514 = vmatpush1.bf16.msra.mxu0 %v2449
    %2515 = vmatprep.subr.bf16.mxu0 %v2452
    %2516 = vmatpush1.bf16.msra.mxu0 %v2451
    %2517 = vmatprep.subr.bf16.mxu0 %v2454
    %2518 = vmatpush1.bf16.msra.mxu0 %v2453
    %2519 = vmatprep.subr.bf16.mxu0 %v2456
    %2520 = vmatpush1.bf16.msra.mxu0 %v2455
    %2521 = vmatprep.subr.bf16.mxu0 %v2458
    %2522 = vmatpush1.bf16.msra.mxu0 %v2457
    %2523 = vmatprep.subr.bf16.mxu0 %v2460
    %2524 = vmatpush1.bf16.msra.mxu0 %v2459
    %2525 = vmatprep.subr.bf16.mxu0 %v2462
    %2526 = vmatpush1.bf16.msra.mxu0 %v2461
    %2527 = vmatprep.subr.bf16.mxu0 %v2464
    %2528 = vmatpush1.bf16.msra.mxu0 %v2463
    %2529 = vmatprep.mubr.bf16.mxu0 %v2334
    %2530 = vmatmul.mubr.bf16.gmra.mrb[0].mxu0 %v2333
    %v2531 = vpop.f32.mrb[0].mxu0
    %v2532 = vadd.f32 %v2321, %v2531
    %v2533 = vpop.f32.mrb[0].mxu0
    %v2534 = vpop.f32.mrb[0].mxu0
    %v2535 = vpop.f32.mrb[0].mxu0
    %2536 = vdwg.mxu0
    %v2537 = vadd.f32 %v2041, %v2532
    %2538 = vst [vmem:[#allocation10 + $0x10] sm:$0xf] %v2537
    // Predicated region
    $region34: #{tpu_custom_call.1} parent=1 // pred_check
      _
    $region35: #{tpu_custom_call.1} parent=1 // pred_check_branch
      %2540 = sbr.rel (0) target = $region37
    $region36: #{tpu_custom_call.1} parent=1 // pred_region
      %s2542 = ssub.s32 320, 320
      %2543 = vsyncadd [#allocation4], %s2542
      %s2545 = sshll.u32 [#allocation10], 4
      %s2546 = int_to_ptr.vmem [resolvable:$true] %s2545
      %2548 = dma.vmem_to_hbm [thread:$0]  %s2546, 320, %s4, [#allocation4]
    $region37: #{tpu_custom_call.1} parent=1 // pred_fallthru
      _
    // Predicated region
    $region38: #{tpu_custom_call.1} parent=1 // pred_check
      _
    $region39: #{tpu_custom_call.1} parent=1 // pred_check_branch
      %2550 = sbr.rel (0) target = $region41
    $region40: #{tpu_custom_call.1} parent=1 // pred_region
      %2551 = dma.done [#allocation4], 320
    $region41: #{tpu_custom_call.1} parent=1 // pred_fallthru
      _
    %2552 = vsyncpa [#allocation3], 1
    %2553 = vsyncpa [#allocation6], 1
    %2554 = vsyncpa [#allocation9], 1
    %2555 = vsyncpa [#allocation4], 1

// kernel: tpu_custom_call.1
$region0: #{tpu_custom_call.1}
  #allocation0 [shape = 'u32[]', space=smem, size = 0x4, offset = 0x4, fixed_abs, tag = 'smem constant byte address 0x4 - core index']
  #allocation1 [shape = 'u32[144,128]{1,0:T(1,128)}', space=vmem, size = 0x12000, scoped, tag = 'internal scratch']
  %s0 = inlined_call_operand.hbm [shape: bf16[5,4,256], index: 0, kind: input, shape index: {}]
  %s1 = inlined_call_operand.hbm [shape: bf16[5,4,256], index: 1, kind: input, shape index: {}]
  %s2 = inlined_call_operand.hbm [shape: bf16[256,256], index: 2, kind: input, shape index: {}]
  %s3 = inlined_call_operand.hbm [shape: bf16[256,256], index: 3, kind: input, shape index: {}]
  %s4 = inlined_call_operand.hbm [shape: f32[4,640], index: 4, kind: output, shape index: {}]
  %s5 = sld [smem:[#allocation0]]
  $region42: #{tpu_custom_call.1} parent=0
    _
  %s7 = ssub.s32 1, %s5
  %s8 = scalar_select 0, %s7, %s5
  $region1: #{tpu_custom_call.1} parent=0
    #allocation2 [shape = 'u8[10240]{0}', space=vmem, size = 0x2800, scoped, tag = 'input window, operand 0, single buffered']
    #allocation3 [shape = 's32[1]{0}', space=sflag, size = 0x4, scoped, tag = 'scoped memory for tpu_custom_call.1']
    #allocation4 [shape = 's32[1]{0}', space=sflag, size = 0x4, scoped, tag = 'scoped memory for tpu_custom_call.1']
    #allocation5 [shape = 'u8[10240]{0}', space=vmem, size = 0x2800, scoped, tag = 'input window, operand 1, single buffered']
    #allocation6 [shape = 's32[1]{0}', space=sflag, size = 0x4, scoped, tag = 'scoped memory for tpu_custom_call.1']
    #allocation7 [shape = 'u8[131072]{0}', space=vmem, size = 0x20000, scoped, tag = 'input window, operand 2, single buffered']
    #allocation8 [shape = 'u8[131072]{0}', space=vmem, size = 0x20000, scoped, tag = 'input window, operand 3, single buffered']
    #allocation9 [shape = 's32[1]{0}', space=sflag, size = 0x4, scoped, tag = 'scoped memory for tpu_custom_call.1']
    #allocation10 [shape = 'u8[10240]{0}', space=vmem, size = 0x2800, scoped, tag = 'output window, operand 0, single buffered']
    %9 = vsyncpa [#allocation3], 0
    %10 = vsyncpa [#allocation6], 0
    %11 = vsyncpa [#allocation9], 0
    %12 = vsyncpa [#allocation4], 0
    // Predicated region
    $region2: #{tpu_custom_call.1} parent=1 // pred_check
      _
    $region3: #{tpu_custom_call.1} parent=1 // pred_check_branch
      %14 = sbr.rel (0) target = $region5
    $region4: #{tpu_custom_call.1} parent=1 // pred_region
      %s16 = ssub.s32 320, 320
      %17 = vsyncadd [#allocation3], %s16
      %s18 = sshll.u32 [#allocation2], 4
      %s19 = int_to_ptr.vmem [resolvable:$true] %s18
      %24 = dma.hbm_to_vmem [thread:$0]  %s0, 320, %s19, [#allocation3], 64, 64, 4
    $region5: #{tpu_custom_call.1} parent=1 // pred_fallthru
      _
    // Predicated region
    $region6: #{tpu_custom_call.1} parent=1 // pred_check
      _
    $region7: #{tpu_custom_call.1} parent=1 // pred_check_branch
      %26 = sbr.rel (0) target = $region9
    $region8: #{tpu_custom_call.1} parent=1 // pred_region
      %s28 = ssub.s32 320, 320
      %29 = vsyncadd [#allocation6], %s28
      %s30 = sshll.u32 [#allocation5], 4
      %s31 = int_to_ptr.vmem [resolvable:$true] %s30
      %36 = dma.hbm_to_vmem [thread:$0]  %s1, 320, %s31, [#allocation6], 64, 64, 4
    $region9: #{tpu_custom_call.1} parent=1 // pred_fallthru
      _
    // Predicated region
    $region10: #{tpu_custom_call.1} parent=1 // pred_check
      _
    $region11: #{tpu_custom_call.1} parent=1 // pred_check_branch
      %38 = sbr.rel (0) target = $region13
    $region12: #{tpu_custom_call.1} parent=1 // pred_region
      %s40 = ssub.s32 4096, 4096
      %41 = vsyncadd [#allocation6], %s40
      %s42 = sshll.u32 [#allocation7], 4
      %s43 = int_to_ptr.vmem [resolvable:$true] %s42
      %48 = dma.hbm_to_vmem [thread:$0]  %s2, 4096, %s43, [#allocation6], 128, 128, 8
    $region13: #{tpu_custom_call.1} parent=1 // pred_fallthru
      _
    // Predicated region
    $region14: #{tpu_custom_call.1} parent=1 // pred_check
      _
    $region15: #{tpu_custom_call.1} parent=1 // pred_check_branch
      %50 = sbr.rel (0) target = $region17
    $region16: #{tpu_custom_call.1} parent=1 // pred_region
      %s52 = ssub.s32 4096, 4096
      %53 = vsyncadd [#allocation9], %s52
      %s54 = sshll.u32 [#allocation8], 4
      %s55 = int_to_ptr.vmem [resolvable:$true] %s54
      %60 = dma.hbm_to_vmem [thread:$0]  %s3, 4096, %s55, [#allocation9], 128, 128, 8
    $region17: #{tpu_custom_call.1} parent=1 // pred_fallthru
      _
    // Predicated region
    $region18: #{tpu_custom_call.1} parent=1 // pred_check
      _
    $region19: #{tpu_custom_call.1} parent=1 // pred_check_branch
      %62 = sbr.rel (0) target = $region21
    $region20: #{tpu_custom_call.1} parent=1 // pred_region
      %63 = dma.done [#allocation3], 320
    $region21: #{tpu_custom_call.1} parent=1 // pred_fallthru
      _
    // Predicated region
    $region22: #{tpu_custom_call.1} parent=1 // pred_check
      _
    $region23: #{tpu_custom_call.1} parent=1 // pred_check_branch
      %65 = sbr.rel (0) target = $region25
    $region24: #{tpu_custom_call.1} parent=1 // pred_region
      %66 = dma.done [#allocation6], 320
    $region25: #{tpu_custom_call.1} parent=1 // pred_fallthru
      _
    // Predicated region
    $region26: #{tpu_custom_call.1} parent=1 // pred_check
      _
    $region27: #{tpu_custom_call.1} parent=1 // pred_check_branch
      %68 = sbr.rel (0) target = $region29
    $region28: #{tpu_custom_call.1} parent=1 // pred_region
      %69 = dma.done [#allocation6], 4096
    $region29: #{tpu_custom_call.1} parent=1 // pred_fallthru
      _
    // Predicated region
    $region30: #{tpu_custom_call.1} parent=1 // pred_check
      _
    $region31: #{tpu_custom_call.1} parent=1 // pred_check_branch
      %71 = sbr.rel (0) target = $region33
    $region32: #{tpu_custom_call.1} parent=1 // pred_region
      %72 = dma.done [#allocation9], 4096
    $region33: #{tpu_custom_call.1} parent=1 // pred_fallthru
      _
    %v73 = vld [vmem:[#allocation2] sm:$0xf]
    %v74 = vld [vmem:[#allocation7] sm:$0xff]
    %v75 = vld [vmem:[#allocation7 + $0x8] sm:$0xff]
    %v76 = vld [vmem:[#allocation7 + $0x10] sm:$0xff]
    %v77 = vld [vmem:[#allocation7 + $0x18] sm:$0xff]
    %v78 = vld [vmem:[#allocation7 + $0x20] sm:$0xff]
    %v79 = vld [vmem:[#allocation7 + $0x28] sm:$0xff]
    %v80 = vld [vmem:[#allocation7 + $0x30] sm:$0xff]
    %v81 = vld [vmem:[#allocation7 + $0x38] sm:$0xff]
    %v82 = vld [vmem:[#allocation7 + $0x40] sm:$0xff]
    %v83 = vld [vmem:[#allocation7 + $0x48] sm:$0xff]
    %v84 = vld [vmem:[#allocation7 + $0x50] sm:$0xff]
    %v85 = vld [vmem:[#allocation7 + $0x58] sm:$0xff]
    %v86 = vld [vmem:[#allocation7 + $0x60] sm:$0xff]
    %v87 = vld [vmem:[#allocation7 + $0x68] sm:$0xff]
    %v88 = vld [vmem:[#allocation7 + $0x70] sm:$0xff]
    %v89 = vld [vmem:[#allocation7 + $0x78] sm:$0xff]
    %v90 = vld [vmem:[#allocation7 + $0x80] sm:$0xff]
    %v91 = vld [vmem:[#allocation7 + $0x88] sm:$0xff]
    %v92 = vld [vmem:[#allocation7 + $0x90] sm:$0xff]
    %v93 = vld [vmem:[#allocation7 + $0x98] sm:$0xff]
    %v94 = vld [vmem:[#allocation7 + $0xa0] sm:$0xff]
    %v95 = vld [vmem:[#allocation7 + $0xa8] sm:$0xff]
    %v96 = vld [vmem:[#allocation7 + $0xb0] sm:$0xff]
    %v97 = vld [vmem:[#allocation7 + $0xb8] sm:$0xff]
    %v98 = vld [vmem:[#allocation7 + $0xc0] sm:$0xff]
    %v99 = vld [vmem:[#allocation7 + $0xc8] sm:$0xff]
    %v100 = vld [vmem:[#allocation7 + $0xd0] sm:$0xff]
    %v101 = vld [vmem:[#allocation7 + $0xd8] sm:$0xff]
    %v102 = vld [vmem:[#allocation7 + $0xe0] sm:$0xff]
    %v103 = vld [vmem:[#allocation7 + $0xe8] sm:$0xff]
    %v104 = vld [vmem:[#allocation7 + $0xf0] sm:$0xff]
    %v105 = vld [vmem:[#allocation7 + $0xf8] sm:$0xff]
    %v106 = vld [vmem:[#allocation5] sm:$0xf]
    %v107 = vld [vmem:[#allocation8] sm:$0xff]
    %v108 = vld [vmem:[#allocation8 + $0x8] sm:$0xff]
    %v109 = vld [vmem:[#allocation8 + $0x10] sm:$0xff]
    %v110 = vld [vmem:[#allocation8 + $0x18] sm:$0xff]
    %v111 = vld [vmem:[#allocation8 + $0x20] sm:$0xff]
    %v112 = vld [vmem:[#allocation8 + $0x28] sm:$0xff]
    %v113 = vld [vmem:[#allocation8 + $0x30] sm:$0xff]
    %v114 = vld [vmem:[#allocation8 + $0x38] sm:$0xff]
    %v115 = vld [vmem:[#allocation8 + $0x40] sm:$0xff]
    %v116 = vld [vmem:[#allocation8 + $0x48] sm:$0xff]
    %v117 = vld [vmem:[#allocation8 + $0x50] sm:$0xff]
    %v118 = vld [vmem:[#allocation8 + $0x58] sm:$0xff]
    %v119 = vld [vmem:[#allocation8 + $0x60] sm:$0xff]
    %v120 = vld [vmem:[#allocation8 + $0x68] sm:$0xff]
    %v121 = vld [vmem:[#allocation8 + $0x70] sm:$0xff]
    %v122 = vld [vmem:[#allocation8 + $0x78] sm:$0xff]
    %v123 = vld [vmem:[#allocation8 + $0x80] sm:$0xff]
    %v124 = vld [vmem:[#allocation8 + $0x88] sm:$0xff]
    %v125 = vld [vmem:[#allocation8 + $0x90] sm:$0xff]
    %v126 = vld [vmem:[#allocation8 + $0x98] sm:$0xff]
    %v127 = vld [vmem:[#allocation8 + $0xa0] sm:$0xff]
    %v128 = vld [vmem:[#allocation8 + $0xa8] sm:$0xff]
    %v129 = vld [vmem:[#allocation8 + $0xb0] sm:$0xff]
    %v130 = vld [vmem:[#allocation8 + $0xb8] sm:$0xff]
    %v131 = vld [vmem:[#allocation8 + $0xc0] sm:$0xff]
    %v132 = vld [vmem:[#allocation8 + $0xc8] sm:$0xff]
    %v133 = vld [vmem:[#allocation8 + $0xd0] sm:$0xff]
    %v134 = vld [vmem:[#allocation8 + $0xd8] sm:$0xff]
    %v135 = vld [vmem:[#allocation8 + $0xe0] sm:$0xff]
    %v136 = vld [vmem:[#allocation8 + $0xe8] sm:$0xff]
    %v137 = vld [vmem:[#allocation8 + $0xf0] sm:$0xff]
    %v138 = vld [vmem:[#allocation8 + $0xf8] sm:$0xff]
    %v141 = vunpack.c.l.s4 1983009808
    %v142 = vunpack.c.0.s8 %v141
    %v143 = vlaneseq
    %v144 = vshrl.u32 %v143, 7
    %v145 = vsub.s32 %v142, %v144
    %v146 = vrot.slane %v106, %v145
    %v147 = vcombine.high %v146, %v146
    %v182 = vunpack.c.l.b16 %v107
    %v183 = vunpack.c.h.b16 %v107
    %v184 = vunpack.c.l.b16 %v108
    %v185 = vunpack.c.h.b16 %v108
    %v186 = vunpack.c.l.b16 %v109
    %v187 = vunpack.c.h.b16 %v109
    %v188 = vunpack.c.l.b16 %v110
    %v189 = vunpack.c.h.b16 %v110
    %v190 = vunpack.c.l.b16 %v111
    %v191 = vunpack.c.h.b16 %v111
    %v192 = vunpack.c.l.b16 %v112
    %v193 = vunpack.c.h.b16 %v112
    %v194 = vunpack.c.l.b16 %v113
    %v195 = vunpack.c.h.b16 %v113
    %v196 = vunpack.c.l.b16 %v114
    %v197 = vunpack.c.h.b16 %v114
    %v198 = vunpack.c.l.b16 %v115
    %v199 = vunpack.c.h.b16 %v115
    %v200 = vunpack.c.l.b16 %v116
    %v201 = vunpack.c.h.b16 %v116
    %v202 = vunpack.c.l.b16 %v117
    %v203 = vunpack.c.h.b16 %v117
    %v204 = vunpack.c.l.b16 %v118
    %v205 = vunpack.c.h.b16 %v118
    %v206 = vunpack.c.l.b16 %v119
    %v207 = vunpack.c.h.b16 %v119
    %v208 = vunpack.c.l.b16 %v120
    %v209 = vunpack.c.h.b16 %v120
    %v210 = vunpack.c.l.b16 %v121
    %v211 = vunpack.c.h.b16 %v121
    %v212 = vunpack.c.l.b16 %v122
    %v213 = vunpack.c.h.b16 %v122
    %v214 = vunpack.c.l.b16 %v123
    %v215 = vunpack.c.h.b16 %v123
    %v216 = vunpack.c.l.b16 %v124
    %v217 = vunpack.c.h.b16 %v124
    %v218 = vunpack.c.l.b16 %v125
    %v219 = vunpack.c.h.b16 %v125
    %v220 = vunpack.c.l.b16 %v126
    %v221 = vunpack.c.h.b16 %v126
    %v222 = vunpack.c.l.b16 %v127
    %v223 = vunpack.c.h.b16 %v127
    %v224 = vunpack.c.l.b16 %v128
    %v225 = vunpack.c.h.b16 %v128
    %v226 = vunpack.c.l.b16 %v129
    %v227 = vunpack.c.h.b16 %v129
    %v228 = vunpack.c.l.b16 %v130
    %v229 = vunpack.c.h.b16 %v130
    %v230 = vunpack.c.l.b16 %v131
    %v231 = vunpack.c.h.b16 %v131
    %v232 = vunpack.c.l.b16 %v132
    %v233 = vunpack.c.h.b16 %v132
    %v234 = vunpack.c.l.b16 %v133
    %v235 = vunpack.c.h.b16 %v133
    %v236 = vunpack.c.l.b16 %v134
    %v237 = vunpack.c.h.b16 %v134
    %v238 = vunpack.c.l.b16 %v135
    %v239 = vunpack.c.h.b16 %v135
    %v240 = vunpack.c.l.b16 %v136
    %v241 = vunpack.c.h.b16 %v136
    %v242 = vunpack.c.l.b16 %v137
    %v243 = vunpack.c.h.b16 %v137
    %v244 = vunpack.c.l.b16 %v138
    %v245 = vunpack.c.h.b16 %v138
    %v246 = vpack.c.b16 %v184, %v182
    %v247 = vpack.c.b16 %v185, %v183
    %v248 = vpack.c.b16 %v188, %v186
    %v249 = vpack.c.b16 %v189, %v187
    %v250 = vpack.c.b16 %v192, %v190
    %v251 = vpack.c.b16 %v193, %v191
    %v252 = vpack.c.b16 %v196, %v194
    %v253 = vpack.c.b16 %v197, %v195
    %v254 = vpack.c.b16 %v200, %v198
    %v255 = vpack.c.b16 %v201, %v199
    %v256 = vpack.c.b16 %v204, %v202
    %v257 = vpack.c.b16 %v205, %v203
    %v258 = vpack.c.b16 %v208, %v206
    %v259 = vpack.c.b16 %v209, %v207
    %v260 = vpack.c.b16 %v212, %v210
    %v261 = vpack.c.b16 %v213, %v211
    %v262 = vpack.c.b16 %v216, %v214
    %v263 = vpack.c.b16 %v217, %v215
    %v264 = vpack.c.b16 %v220, %v218
    %v265 = vpack.c.b16 %v221, %v219
    %v266 = vpack.c.b16 %v224, %v222
    %v267 = vpack.c.b16 %v225, %v223
    %v268 = vpack.c.b16 %v228, %v226
    %v269 = vpack.c.b16 %v229, %v227
    %v270 = vpack.c.b16 %v232, %v230
    %v271 = vpack.c.b16 %v233, %v231
    %v272 = vpack.c.b16 %v236, %v234
    %v273 = vpack.c.b16 %v237, %v235
    %v274 = vpack.c.b16 %v240, %v238
    %v275 = vpack.c.b16 %v241, %v239
    %v276 = vpack.c.b16 %v244, %v242
    %v277 = vpack.c.b16 %v245, %v243
    %310 = vmatprep.subr.bf16.mxu0 %v247
    %311 = vmatpush1.bf16.msra.mxu0 %v246
    %312 = vmatprep.subr.bf16.mxu0 %v249
    %313 = vmatpush1.bf16.msra.mxu0 %v248
    %314 = vmatprep.subr.bf16.mxu0 %v251
    %315 = vmatpush1.bf16.msra.mxu0 %v250
    %316 = vmatprep.subr.bf16.mxu0 %v253
    %317 = vmatpush1.bf16.msra.mxu0 %v252
    %318 = vmatprep.subr.bf16.mxu0 %v255
    %319 = vmatpush1.bf16.msra.mxu0 %v254
    %320 = vmatprep.subr.bf16.mxu0 %v257
    %321 = vmatpush1.bf16.msra.mxu0 %v256
    %322 = vmatprep.subr.bf16.mxu0 %v259
    %323 = vmatpush1.bf16.msra.mxu0 %v258
    %324 = vmatprep.subr.bf16.mxu0 %v261
    %325 = vmatpush1.bf16.msra.mxu0 %v260
    %326 = vmatprep.subr.bf16.mxu0 %v263
    %327 = vmatpush1.bf16.msra.mxu0 %v262
    %328 = vmatprep.subr.bf16.mxu0 %v265
    %329 = vmatpush1.bf16.msra.mxu0 %v264
    %330 = vmatprep.subr.bf16.mxu0 %v267
    %331 = vmatpush1.bf16.msra.mxu0 %v266
    %332 = vmatprep.subr.bf16.mxu0 %v269
    %333 = vmatpush1.bf16.msra.mxu0 %v268
    %334 = vmatprep.subr.bf16.mxu0 %v271
    %335 = vmatpush1.bf16.msra.mxu0 %v270
    %336 = vmatprep.subr.bf16.mxu0 %v273
    %337 = vmatpush1.bf16.msra.mxu0 %v272
    %338 = vmatprep.subr.bf16.mxu0 %v275
    %339 = vmatpush1.bf16.msra.mxu0 %v274
    %340 = vmatprep.subr.bf16.mxu0 %v277
    %341 = vmatpush1.bf16.msra.mxu0 %v276
    %342 = vmatprep.mubr.bf16.mxu0 %v147
    %343 = vmatmul.mubr.bf16.gmra.mrb[0].mxu0 %v146
    %v344 = vpop.f32.mrb[0].mxu0
    %v345 = vadd.f32 0.0, %v344
    %v346 = vpop.f32.mrb[0].mxu0
    %v347 = vadd.f32 0.0, %v346
    %v348 = vpop.f32.mrb[0].mxu0
    %v349 = vpop.f32.mrb[0].mxu0
    %350 = vdwg.mxu0
    %v353 = vunpack.c.l.s4 1983009808
    %v354 = vunpack.c.0.s8 %v353
    %v355 = vlaneseq
    %v356 = vshrl.u32 %v355, 7
    %v357 = vsub.s32 %v354, %v356
    %v358 = vrot.slane %v73, %v357
    %v359 = vcombine.high %v358, %v358
    %v394 = vunpack.c.l.b16 %v74
    %v395 = vunpack.c.h.b16 %v74
    %v396 = vunpack.c.l.b16 %v75
    %v397 = vunpack.c.h.b16 %v75
    %v398 = vunpack.c.l.b16 %v76
    %v399 = vunpack.c.h.b16 %v76
    %v400 = vunpack.c.l.b16 %v77
    %v401 = vunpack.c.h.b16 %v77
    %v402 = vunpack.c.l.b16 %v78
    %v403 = vunpack.c.h.b16 %v78
    %v404 = vunpack.c.l.b16 %v79
    %v405 = vunpack.c.h.b16 %v79
    %v406 = vunpack.c.l.b16 %v80
    %v407 = vunpack.c.h.b16 %v80
    %v408 = vunpack.c.l.b16 %v81
    %v409 = vunpack.c.h.b16 %v81
    %v410 = vunpack.c.l.b16 %v82
    %v411 = vunpack.c.h.b16 %v82
    %v412 = vunpack.c.l.b16 %v83
    %v413 = vunpack.c.h.b16 %v83
    %v414 = vunpack.c.l.b16 %v84
    %v415 = vunpack.c.h.b16 %v84
    %v416 = vunpack.c.l.b16 %v85
    %v417 = vunpack.c.h.b16 %v85
    %v418 = vunpack.c.l.b16 %v86
    %v419 = vunpack.c.h.b16 %v86
    %v420 = vunpack.c.l.b16 %v87
    %v421 = vunpack.c.h.b16 %v87
    %v422 = vunpack.c.l.b16 %v88
    %v423 = vunpack.c.h.b16 %v88
    %v424 = vunpack.c.l.b16 %v89
    %v425 = vunpack.c.h.b16 %v89
    %v426 = vunpack.c.l.b16 %v90
    %v427 = vunpack.c.h.b16 %v90
    %v428 = vunpack.c.l.b16 %v91
    %v429 = vunpack.c.h.b16 %v91
    %v430 = vunpack.c.l.b16 %v92
    %v431 = vunpack.c.h.b16 %v92
    %v432 = vunpack.c.l.b16 %v93
    %v433 = vunpack.c.h.b16 %v93
    %v434 = vunpack.c.l.b16 %v94
    %v435 = vunpack.c.h.b16 %v94
    %v436 = vunpack.c.l.b16 %v95
    %v437 = vunpack.c.h.b16 %v95
    %v438 = vunpack.c.l.b16 %v96
    %v439 = vunpack.c.h.b16 %v96
    %v440 = vunpack.c.l.b16 %v97
    %v441 = vunpack.c.h.b16 %v97
    %v442 = vunpack.c.l.b16 %v98
    %v443 = vunpack.c.h.b16 %v98
    %v444 = vunpack.c.l.b16 %v99
    %v445 = vunpack.c.h.b16 %v99
    %v446 = vunpack.c.l.b16 %v100
    %v447 = vunpack.c.h.b16 %v100
    %v448 = vunpack.c.l.b16 %v101
    %v449 = vunpack.c.h.b16 %v101
    %v450 = vunpack.c.l.b16 %v102
    %v451 = vunpack.c.h.b16 %v102
    %v452 = vunpack.c.l.b16 %v103
    %v453 = vunpack.c.h.b16 %v103
    %v454 = vunpack.c.l.b16 %v104
    %v455 = vunpack.c.h.b16 %v104
    %v456 = vunpack.c.l.b16 %v105
    %v457 = vunpack.c.h.b16 %v105
    %v458 = vpack.c.b16 %v396, %v394
    %v459 = vpack.c.b16 %v397, %v395
    %v460 = vpack.c.b16 %v400, %v398
    %v461 = vpack.c.b16 %v401, %v399
    %v462 = vpack.c.b16 %v404, %v402
    %v463 = vpack.c.b16 %v405, %v403
    %v464 = vpack.c.b16 %v408, %v406
    %v465 = vpack.c.b16 %v409, %v407
    %v466 = vpack.c.b16 %v412, %v410
    %v467 = vpack.c.b16 %v413, %v411
    %v468 = vpack.c.b16 %v416, %v414
    %v469 = vpack.c.b16 %v417, %v415
    %v470 = vpack.c.b16 %v420, %v418
    %v471 = vpack.c.b16 %v421, %v419
    %v472 = vpack.c.b16 %v424, %v422
    %v473 = vpack.c.b16 %v425, %v423
    %v474 = vpack.c.b16 %v428, %v426
    %v475 = vpack.c.b16 %v429, %v427
    %v476 = vpack.c.b16 %v432, %v430
    %v477 = vpack.c.b16 %v433, %v431
    %v478 = vpack.c.b16 %v436, %v434
    %v479 = vpack.c.b16 %v437, %v435
    %v480 = vpack.c.b16 %v440, %v438
    %v481 = vpack.c.b16 %v441, %v439
    %v482 = vpack.c.b16 %v444, %v442
    %v483 = vpack.c.b16 %v445, %v443
    %v484 = vpack.c.b16 %v448, %v446
    %v485 = vpack.c.b16 %v449, %v447
    %v486 = vpack.c.b16 %v452, %v450
    %v487 = vpack.c.b16 %v453, %v451
    %v488 = vpack.c.b16 %v456, %v454
    %v489 = vpack.c.b16 %v457, %v455
    %522 = vmatprep.subr.bf16.mxu0 %v459
    %523 = vmatpush1.bf16.msra.mxu0 %v458
    %524 = vmatprep.subr.bf16.mxu0 %v461
    %525 = vmatpush1.bf16.msra.mxu0 %v460
    %526 = vmatprep.subr.bf16.mxu0 %v463
    %527 = vmatpush1.bf16.msra.mxu0 %v462
    %528 = vmatprep.subr.bf16.mxu0 %v465
    %529 = vmatpush1.bf16.msra.mxu0 %v464
    %530 = vmatprep.subr.bf16.mxu0 %v467
    %531 = vmatpush1.bf16.msra.mxu0 %v466
    %532 = vmatprep.subr.bf16.mxu0 %v469
    %533 = vmatpush1.bf16.msra.mxu0 %v468
    %534 = vmatprep.subr.bf16.mxu0 %v471
    %535 = vmatpush1.bf16.msra.mxu0 %v470
    %536 = vmatprep.subr.bf16.mxu0 %v473
    %537 = vmatpush1.bf16.msra.mxu0 %v472
    %538 = vmatprep.subr.bf16.mxu0 %v475
    %539 = vmatpush1.bf16.msra.mxu0 %v474
    %540 = vmatprep.subr.bf16.mxu0 %v477
    %541 = vmatpush1.bf16.msra.mxu0 %v476
    %542 = vmatprep.subr.bf16.mxu0 %v479
    %543 = vmatpush1.bf16.msra.mxu0 %v478
    %544 = vmatprep.subr.bf16.mxu0 %v481
    %545 = vmatpush1.bf16.msra.mxu0 %v480
    %546 = vmatprep.subr.bf16.mxu0 %v483
    %547 = vmatpush1.bf16.msra.mxu0 %v482
    %548 = vmatprep.subr.bf16.mxu0 %v485
    %549 = vmatpush1.bf16.msra.mxu0 %v484
    %550 = vmatprep.subr.bf16.mxu0 %v487
    %551 = vmatpush1.bf16.msra.mxu0 %v486
    %552 = vmatprep.subr.bf16.mxu0 %v489
    %553 = vmatpush1.bf16.msra.mxu0 %v488
    %554 = vmatprep.mubr.bf16.mxu0 %v359
    %555 = vmatmul.mubr.bf16.gmra.mrb[0].mxu0 %v358
    %v556 = vpop.f32.mrb[0].mxu0
    %v557 = vadd.f32 %v345, %v556
    %v558 = vpop.f32.mrb[0].mxu0
    %v559 = vadd.f32 %v347, %v558
    %v560 = vpop.f32.mrb[0].mxu0
    %v561 = vpop.f32.mrb[0].mxu0
    %562 = vdwg.mxu0
    %v563 = vadd.f32 %v557, 0.0
    %564 = vst [vmem:[#allocation10] sm:$0xf] %v563
    %s565 = scalar_lea.vmem [#allocation2], 4
    %v566 = vld [vmem:[%s565] sm:$0xf]
    %v567 = vld [vmem:[#allocation7] sm:$0xff]
    %v568 = vld [vmem:[#allocation7 + $0x8] sm:$0xff]
    %v569 = vld [vmem:[#allocation7 + $0x10] sm:$0xff]
    %v570 = vld [vmem:[#allocation7 + $0x18] sm:$0xff]
    %v571 = vld [vmem:[#allocation7 + $0x20] sm:$0xff]
    %v572 = vld [vmem:[#allocation7 + $0x28] sm:$0xff]
    %v573 = vld [vmem:[#allocation7 + $0x30] sm:$0xff]
    %v574 = vld [vmem:[#allocation7 + $0x38] sm:$0xff]
    %v575 = vld [vmem:[#allocation7 + $0x40] sm:$0xff]
    %v576 = vld [vmem:[#allocation7 + $0x48] sm:$0xff]
    %v577 = vld [vmem:[#allocation7 + $0x50] sm:$0xff]
    %v578 = vld [vmem:[#allocation7 + $0x58] sm:$0xff]
    %v579 = vld [vmem:[#allocation7 + $0x60] sm:$0xff]
    %v580 = vld [vmem:[#allocation7 + $0x68] sm:$0xff]
    %v581 = vld [vmem:[#allocation7 + $0x70] sm:$0xff]
    %v582 = vld [vmem:[#allocation7 + $0x78] sm:$0xff]
    %v583 = vld [vmem:[#allocation7 + $0x80] sm:$0xff]
    %v584 = vld [vmem:[#allocation7 + $0x88] sm:$0xff]
    %v585 = vld [vmem:[#allocation7 + $0x90] sm:$0xff]
    %v586 = vld [vmem:[#allocation7 + $0x98] sm:$0xff]
    %v587 = vld [vmem:[#allocation7 + $0xa0] sm:$0xff]
    %v588 = vld [vmem:[#allocation7 + $0xa8] sm:$0xff]
    %v589 = vld [vmem:[#allocation7 + $0xb0] sm:$0xff]
    %v590 = vld [vmem:[#allocation7 + $0xb8] sm:$0xff]
    %v591 = vld [vmem:[#allocation7 + $0xc0] sm:$0xff]
    %v592 = vld [vmem:[#allocation7 + $0xc8] sm:$0xff]
    %v593 = vld [vmem:[#allocation7 + $0xd0] sm:$0xff]
    %v594 = vld [vmem:[#allocation7 + $0xd8] sm:$0xff]
    %v595 = vld [vmem:[#allocation7 + $0xe0] sm:$0xff]
    %v596 = vld [vmem:[#allocation7 + $0xe8] sm:$0xff]
    %v597 = vld [vmem:[#allocation7 + $0xf0] sm:$0xff]
    %v598 = vld [vmem:[#allocation7 + $0xf8] sm:$0xff]
    %s599 = scalar_lea.vmem [#allocation5], 4
    %v600 = vld [vmem:[%s599] sm:$0xf]
    %v601 = vld [vmem:[#allocation8] sm:$0xff]
    %v602 = vld [vmem:[#allocation8 + $0x8] sm:$0xff]
    %v603 = vld [vmem:[#allocation8 + $0x10] sm:$0xff]
    %v604 = vld [vmem:[#allocation8 + $0x18] sm:$0xff]
    %v605 = vld [vmem:[#allocation8 + $0x20] sm:$0xff]
    %v606 = vld [vmem:[#allocation8 + $0x28] sm:$0xff]
    %v607 = vld [vmem:[#allocation8 + $0x30] sm:$0xff]
    %v608 = vld [vmem:[#allocation8 + $0x38] sm:$0xff]
    %v609 = vld [vmem:[#allocation8 + $0x40] sm:$0xff]
    %v610 = vld [vmem:[#allocation8 + $0x48] sm:$0xff]
    %v611 = vld [vmem:[#allocation8 + $0x50] sm:$0xff]
    %v612 = vld [vmem:[#allocation8 + $0x58] sm:$0xff]
    %v613 = vld [vmem:[#allocation8 + $0x60] sm:$0xff]
    %v614 = vld [vmem:[#allocation8 + $0x68] sm:$0xff]
    %v615 = vld [vmem:[#allocation8 + $0x70] sm:$0xff]
    %v616 = vld [vmem:[#allocation8 + $0x78] sm:$0xff]
    %v617 = vld [vmem:[#allocation8 + $0x80] sm:$0xff]
    %v618 = vld [vmem:[#allocation8 + $0x88] sm:$0xff]
    %v619 = vld [vmem:[#allocation8 + $0x90] sm:$0xff]
    %v620 = vld [vmem:[#allocation8 + $0x98] sm:$0xff]
    %v621 = vld [vmem:[#allocation8 + $0xa0] sm:$0xff]
    %v622 = vld [vmem:[#allocation8 + $0xa8] sm:$0xff]
    %v623 = vld [vmem:[#allocation8 + $0xb0] sm:$0xff]
    %v624 = vld [vmem:[#allocation8 + $0xb8] sm:$0xff]
    %v625 = vld [vmem:[#allocation8 + $0xc0] sm:$0xff]
    %v626 = vld [vmem:[#allocation8 + $0xc8] sm:$0xff]
    %v627 = vld [vmem:[#allocation8 + $0xd0] sm:$0xff]
    %v628 = vld [vmem:[#allocation8 + $0xd8] sm:$0xff]
    %v629 = vld [vmem:[#allocation8 + $0xe0] sm:$0xff]
    %v630 = vld [vmem:[#allocation8 + $0xe8] sm:$0xff]
    %v631 = vld [vmem:[#allocation8 + $0xf0] sm:$0xff]
    %v632 = vld [vmem:[#allocation8 + $0xf8] sm:$0xff]
    %v635 = vunpack.c.l.s4 1983009808
    %v636 = vunpack.c.0.s8 %v635
    %v637 = vlaneseq
    %v638 = vshrl.u32 %v637, 7
    %v639 = vsub.s32 %v636, %v638
    %v640 = vrot.slane %v600, %v639
    %v641 = vcombine.high %v640, %v640
    %v676 = vunpack.c.l.b16 %v601
    %v677 = vunpack.c.h.b16 %v601
    %v678 = vunpack.c.l.b16 %v602
    %v679 = vunpack.c.h.b16 %v602
    %v680 = vunpack.c.l.b16 %v603
    %v681 = vunpack.c.h.b16 %v603
    %v682 = vunpack.c.l.b16 %v604
    %v683 = vunpack.c.h.b16 %v604
    %v684 = vunpack.c.l.b16 %v605
    %v685 = vunpack.c.h.b16 %v605
    %v686 = vunpack.c.l.b16 %v606
    %v687 = vunpack.c.h.b16 %v606
    %v688 = vunpack.c.l.b16 %v607
    %v689 = vunpack.c.h.b16 %v607
    %v690 = vunpack.c.l.b16 %v608
    %v691 = vunpack.c.h.b16 %v608
    %v692 = vunpack.c.l.b16 %v609
    %v693 = vunpack.c.h.b16 %v609
    %v694 = vunpack.c.l.b16 %v610
    %v695 = vunpack.c.h.b16 %v610
    %v696 = vunpack.c.l.b16 %v611
    %v697 = vunpack.c.h.b16 %v611
    %v698 = vunpack.c.l.b16 %v612
    %v699 = vunpack.c.h.b16 %v612
    %v700 = vunpack.c.l.b16 %v613
    %v701 = vunpack.c.h.b16 %v613
    %v702 = vunpack.c.l.b16 %v614
    %v703 = vunpack.c.h.b16 %v614
    %v704 = vunpack.c.l.b16 %v615
    %v705 = vunpack.c.h.b16 %v615
    %v706 = vunpack.c.l.b16 %v616
    %v707 = vunpack.c.h.b16 %v616
    %v708 = vunpack.c.l.b16 %v617
    %v709 = vunpack.c.h.b16 %v617
    %v710 = vunpack.c.l.b16 %v618
    %v711 = vunpack.c.h.b16 %v618
    %v712 = vunpack.c.l.b16 %v619
    %v713 = vunpack.c.h.b16 %v619
    %v714 = vunpack.c.l.b16 %v620
    %v715 = vunpack.c.h.b16 %v620
    %v716 = vunpack.c.l.b16 %v621
    %v717 = vunpack.c.h.b16 %v621
    %v718 = vunpack.c.l.b16 %v622
    %v719 = vunpack.c.h.b16 %v622
    %v720 = vunpack.c.l.b16 %v623
    %v721 = vunpack.c.h.b16 %v623
    %v722 = vunpack.c.l.b16 %v624
    %v723 = vunpack.c.h.b16 %v624
    %v724 = vunpack.c.l.b16 %v625
    %v725 = vunpack.c.h.b16 %v625
    %v726 = vunpack.c.l.b16 %v626
    %v727 = vunpack.c.h.b16 %v626
    %v728 = vunpack.c.l.b16 %v627
    %v729 = vunpack.c.h.b16 %v627
    %v730 = vunpack.c.l.b16 %v628
    %v731 = vunpack.c.h.b16 %v628
    %v732 = vunpack.c.l.b16 %v629
    %v733 = vunpack.c.h.b16 %v629
    %v734 = vunpack.c.l.b16 %v630
    %v735 = vunpack.c.h.b16 %v630
    %v736 = vunpack.c.l.b16 %v631
    %v737 = vunpack.c.h.b16 %v631
    %v738 = vunpack.c.l.b16 %v632
    %v739 = vunpack.c.h.b16 %v632
    %v740 = vpack.c.b16 %v678, %v676
    %v741 = vpack.c.b16 %v679, %v677
    %v742 = vpack.c.b16 %v682, %v680
    %v743 = vpack.c.b16 %v683, %v681
    %v744 = vpack.c.b16 %v686, %v684
    %v745 = vpack.c.b16 %v687, %v685
    %v746 = vpack.c.b16 %v690, %v688
    %v747 = vpack.c.b16 %v691, %v689
    %v748 = vpack.c.b16 %v694, %v692
    %v749 = vpack.c.b16 %v695, %v693
    %v750 = vpack.c.b16 %v698, %v696
    %v751 = vpack.c.b16 %v699, %v697
    %v752 = vpack.c.b16 %v702, %v700
    %v753 = vpack.c.b16 %v703, %v701
    %v754 = vpack.c.b16 %v706, %v704
    %v755 = vpack.c.b16 %v707, %v705
    %v756 = vpack.c.b16 %v710, %v708
    %v757 = vpack.c.b16 %v711, %v709
    %v758 = vpack.c.b16 %v714, %v712
    %v759 = vpack.c.b16 %v715, %v713
    %v760 = vpack.c.b16 %v718, %v716
    %v761 = vpack.c.b16 %v719, %v717
    %v762 = vpack.c.b16 %v722, %v720
    %v763 = vpack.c.b16 %v723, %v721
    %v764 = vpack.c.b16 %v726, %v724
    %v765 = vpack.c.b16 %v727, %v725
    %v766 = vpack.c.b16 %v730, %v728
    %v767 = vpack.c.b16 %v731, %v729
    %v768 = vpack.c.b16 %v734, %v732
    %v769 = vpack.c.b16 %v735, %v733
    %v770 = vpack.c.b16 %v738, %v736
    %v771 = vpack.c.b16 %v739, %v737
    %804 = vmatprep.subr.bf16.mxu0 %v741
    %805 = vmatpush1.bf16.msra.mxu0 %v740
    %806 = vmatprep.subr.bf16.mxu0 %v743
    %807 = vmatpush1.bf16.msra.mxu0 %v742
    %808 = vmatprep.subr.bf16.mxu0 %v745
    %809 = vmatpush1.bf16.msra.mxu0 %v744
    %810 = vmatprep.subr.bf16.mxu0 %v747
    %811 = vmatpush1.bf16.msra.mxu0 %v746
    %812 = vmatprep.subr.bf16.mxu0 %v749
    %813 = vmatpush1.bf16.msra.mxu0 %v748
    %814 = vmatprep.subr.bf16.mxu0 %v751
    %815 = vmatpush1.bf16.msra.mxu0 %v750
    %816 = vmatprep.subr.bf16.mxu0 %v753
    %817 = vmatpush1.bf16.msra.mxu0 %v752
    %818 = vmatprep.subr.bf16.mxu0 %v755
    %819 = vmatpush1.bf16.msra.mxu0 %v754
    %820 = vmatprep.subr.bf16.mxu0 %v757
    %821 = vmatpush1.bf16.msra.mxu0 %v756
    %822 = vmatprep.subr.bf16.mxu0 %v759
    %823 = vmatpush1.bf16.msra.mxu0 %v758
    %824 = vmatprep.subr.bf16.mxu0 %v761
    %825 = vmatpush1.bf16.msra.mxu0 %v760
    %826 = vmatprep.subr.bf16.mxu0 %v763
    %827 = vmatpush1.bf16.msra.mxu0 %v762
    %828 = vmatprep.subr.bf16.mxu0 %v765
    %829 = vmatpush1.bf16.msra.mxu0 %v764
    %830 = vmatprep.subr.bf16.mxu0 %v767
    %831 = vmatpush1.bf16.msra.mxu0 %v766
    %832 = vmatprep.subr.bf16.mxu0 %v769
    %833 = vmatpush1.bf16.msra.mxu0 %v768
    %834 = vmatprep.subr.bf16.mxu0 %v771
    %835 = vmatpush1.bf16.msra.mxu0 %v770
    %836 = vmatprep.mubr.bf16.mxu0 %v641
    %837 = vmatmul.mubr.bf16.gmra.mrb[0].mxu0 %v640
    %v838 = vpop.f32.mrb[0].mxu0
    %v839 = vadd.f32 0.0, %v838
    %v840 = vpop.f32.mrb[0].mxu0
    %v841 = vadd.f32 0.0, %v840
    %v842 = vpop.f32.mrb[0].mxu0
    %v843 = vpop.f32.mrb[0].mxu0
    %844 = vdwg.mxu0
    %v847 = vunpack.c.l.s4 1983009808
    %v848 = vunpack.c.0.s8 %v847
    %v849 = vlaneseq
    %v850 = vshrl.u32 %v849, 7
    %v851 = vsub.s32 %v848, %v850
    %v852 = vrot.slane %v566, %v851
    %v853 = vcombine.high %v852, %v852
    %v888 = vunpack.c.l.b16 %v567
    %v889 = vunpack.c.h.b16 %v567
    %v890 = vunpack.c.l.b16 %v568
    %v891 = vunpack.c.h.b16 %v568
    %v892 = vunpack.c.l.b16 %v569
    %v893 = vunpack.c.h.b16 %v569
    %v894 = vunpack.c.l.b16 %v570
    %v895 = vunpack.c.h.b16 %v570
    %v896 = vunpack.c.l.b16 %v571
    %v897 = vunpack.c.h.b16 %v571
    %v898 = vunpack.c.l.b16 %v572
    %v899 = vunpack.c.h.b16 %v572
    %v900 = vunpack.c.l.b16 %v573
    %v901 = vunpack.c.h.b16 %v573
    %v902 = vunpack.c.l.b16 %v574
    %v903 = vunpack.c.h.b16 %v574
    %v904 = vunpack.c.l.b16 %v575
    %v905 = vunpack.c.h.b16 %v575
    %v906 = vunpack.c.l.b16 %v576
    %v907 = vunpack.c.h.b16 %v576
    %v908 = vunpack.c.l.b16 %v577
    %v909 = vunpack.c.h.b16 %v577
    %v910 = vunpack.c.l.b16 %v578
    %v911 = vunpack.c.h.b16 %v578
    %v912 = vunpack.c.l.b16 %v579
    %v913 = vunpack.c.h.b16 %v579
    %v914 = vunpack.c.l.b16 %v580
    %v915 = vunpack.c.h.b16 %v580
    %v916 = vunpack.c.l.b16 %v581
    %v917 = vunpack.c.h.b16 %v581
    %v918 = vunpack.c.l.b16 %v582
    %v919 = vunpack.c.h.b16 %v582
    %v920 = vunpack.c.l.b16 %v583
    %v921 = vunpack.c.h.b16 %v583
    %v922 = vunpack.c.l.b16 %v584
    %v923 = vunpack.c.h.b16 %v584
    %v924 = vunpack.c.l.b16 %v585
    %v925 = vunpack.c.h.b16 %v585
    %v926 = vunpack.c.l.b16 %v586
    %v927 = vunpack.c.h.b16 %v586
    %v928 = vunpack.c.l.b16 %v587
    %v929 = vunpack.c.h.b16 %v587
    %v930 = vunpack.c.l.b16 %v588
    %v931 = vunpack.c.h.b16 %v588
    %v932 = vunpack.c.l.b16 %v589
    %v933 = vunpack.c.h.b16 %v589
    %v934 = vunpack.c.l.b16 %v590
    %v935 = vunpack.c.h.b16 %v590
    %v936 = vunpack.c.l.b16 %v591
    %v937 = vunpack.c.h.b16 %v591
    %v938 = vunpack.c.l.b16 %v592
    %v939 = vunpack.c.h.b16 %v592
    %v940 = vunpack.c.l.b16 %v593
    %v941 = vunpack.c.h.b16 %v593
    %v942 = vunpack.c.l.b16 %v594
    %v943 = vunpack.c.h.b16 %v594
    %v944 = vunpack.c.l.b16 %v595
    %v945 = vunpack.c.h.b16 %v595
    %v946 = vunpack.c.l.b16 %v596
    %v947 = vunpack.c.h.b16 %v596
    %v948 = vunpack.c.l.b16 %v597
    %v949 = vunpack.c.h.b16 %v597
    %v950 = vunpack.c.l.b16 %v598
    %v951 = vunpack.c.h.b16 %v598
    %v952 = vpack.c.b16 %v890, %v888
    %v953 = vpack.c.b16 %v891, %v889
    %v954 = vpack.c.b16 %v894, %v892
    %v955 = vpack.c.b16 %v895, %v893
    %v956 = vpack.c.b16 %v898, %v896
    %v957 = vpack.c.b16 %v899, %v897
    %v958 = vpack.c.b16 %v902, %v900
    %v959 = vpack.c.b16 %v903, %v901
    %v960 = vpack.c.b16 %v906, %v904
    %v961 = vpack.c.b16 %v907, %v905
    %v962 = vpack.c.b16 %v910, %v908
    %v963 = vpack.c.b16 %v911, %v909
    %v964 = vpack.c.b16 %v914, %v912
    %v965 = vpack.c.b16 %v915, %v913
    %v966 = vpack.c.b16 %v918, %v916
    %v967 = vpack.c.b16 %v919, %v917
    %v968 = vpack.c.b16 %v922, %v920
    %v969 = vpack.c.b16 %v923, %v921
    %v970 = vpack.c.b16 %v926, %v924
    %v971 = vpack.c.b16 %v927, %v925
    %v972 = vpack.c.b16 %v930, %v928
    %v973 = vpack.c.b16 %v931, %v929
    %v974 = vpack.c.b16 %v934, %v932
    %v975 = vpack.c.b16 %v935, %v933
    %v976 = vpack.c.b16 %v938, %v936
    %v977 = vpack.c.b16 %v939, %v937
    %v978 = vpack.c.b16 %v942, %v940
    %v979 = vpack.c.b16 %v943, %v941
    %v980 = vpack.c.b16 %v946, %v944
    %v981 = vpack.c.b16 %v947, %v945
    %v982 = vpack.c.b16 %v950, %v948
    %v983 = vpack.c.b16 %v951, %v949
    %1016 = vmatprep.subr.bf16.mxu0 %v953
    %1017 = vmatpush1.bf16.msra.mxu0 %v952
    %1018 = vmatprep.subr.bf16.mxu0 %v955
    %1019 = vmatpush1.bf16.msra.mxu0 %v954
    %1020 = vmatprep.subr.bf16.mxu0 %v957
    %1021 = vmatpush1.bf16.msra.mxu0 %v956
    %1022 = vmatprep.subr.bf16.mxu0 %v959
    %1023 = vmatpush1.bf16.msra.mxu0 %v958
    %1024 = vmatprep.subr.bf16.mxu0 %v961
    %1025 = vmatpush1.bf16.msra.mxu0 %v960
    %1026 = vmatprep.subr.bf16.mxu0 %v963
    %1027 = vmatpush1.bf16.msra.mxu0 %v962
    %1028 = vmatprep.subr.bf16.mxu0 %v965
    %1029 = vmatpush1.bf16.msra.mxu0 %v964
    %1030 = vmatprep.subr.bf16.mxu0 %v967
    %1031 = vmatpush1.bf16.msra.mxu0 %v966
    %1032 = vmatprep.subr.bf16.mxu0 %v969
    %1033 = vmatpush1.bf16.msra.mxu0 %v968
    %1034 = vmatprep.subr.bf16.mxu0 %v971
    %1035 = vmatpush1.bf16.msra.mxu0 %v970
    %1036 = vmatprep.subr.bf16.mxu0 %v973
    %1037 = vmatpush1.bf16.msra.mxu0 %v972
    %1038 = vmatprep.subr.bf16.mxu0 %v975
    %1039 = vmatpush1.bf16.msra.mxu0 %v974
    %1040 = vmatprep.subr.bf16.mxu0 %v977
    %1041 = vmatpush1.bf16.msra.mxu0 %v976
    %1042 = vmatprep.subr.bf16.mxu0 %v979
    %1043 = vmatpush1.bf16.msra.mxu0 %v978
    %1044 = vmatprep.subr.bf16.mxu0 %v981
    %1045 = vmatpush1.bf16.msra.mxu0 %v980
    %1046 = vmatprep.subr.bf16.mxu0 %v983
    %1047 = vmatpush1.bf16.msra.mxu0 %v982
    %1048 = vmatprep.mubr.bf16.mxu0 %v853
    %1049 = vmatmul.mubr.bf16.gmra.mrb[0].mxu0 %v852
    %v1050 = vpop.f32.mrb[0].mxu0
    %v1051 = vadd.f32 %v839, %v1050
    %v1052 = vpop.f32.mrb[0].mxu0
    %v1053 = vadd.f32 %v841, %v1052
    %v1054 = vpop.f32.mrb[0].mxu0
    %v1055 = vpop.f32.mrb[0].mxu0
    %1056 = vdwg.mxu0
    %v1057 = vadd.f32 %v559, %v1051
    %1058 = vst [vmem:[#allocation10 + $0x4] sm:$0xf] %v1057
    %s1059 = scalar_lea.vmem [#allocation2], 8
    %v1060 = vld [vmem:[%s1059] sm:$0xf]
    %v1061 = vld [vmem:[#allocation7] sm:$0xff]
    %v1062 = vld [vmem:[#allocation7 + $0x8] sm:$0xff]
    %v1063 = vld [vmem:[#allocation7 + $0x10] sm:$0xff]
    %v1064 = vld [vmem:[#allocation7 + $0x18] sm:$0xff]
    %v1065 = vld [vmem:[#allocation7 + $0x20] sm:$0xff]
    %v1066 = vld [vmem:[#allocation7 + $0x28] sm:$0xff]
    %v1067 = vld [vmem:[#allocation7 + $0x30] sm:$0xff]
    %v1068 = vld [vmem:[#allocation7 + $0x38] sm:$0xff]
    %v1069 = vld [vmem:[#allocation7 + $0x40] sm:$0xff]
    %v1070 = vld [vmem:[#allocation7 + $0x48] sm:$0xff]
    %v1071 = vld [vmem:[#allocation7 + $0x50] sm:$0xff]
    %v1072 = vld [vmem:[#allocation7 + $0x58] sm:$0xff]
    %v1073 = vld [vmem:[#allocation7 + $0x60] sm:$0xff]
    %v1074 = vld [vmem:[#allocation7 + $0x68] sm:$0xff]
    %v1075 = vld [vmem:[#allocation7 + $0x70] sm:$0xff]
    %v1076 = vld [vmem:[#allocation7 + $0x78] sm:$0xff]
    %v1077 = vld [vmem:[#allocation7 + $0x80] sm:$0xff]
    %v1078 = vld [vmem:[#allocation7 + $0x88] sm:$0xff]
    %v1079 = vld [vmem:[#allocation7 + $0x90] sm:$0xff]
    %v1080 = vld [vmem:[#allocation7 + $0x98] sm:$0xff]
    %v1081 = vld [vmem:[#allocation7 + $0xa0] sm:$0xff]
    %v1082 = vld [vmem:[#allocation7 + $0xa8] sm:$0xff]
    %v1083 = vld [vmem:[#allocation7 + $0xb0] sm:$0xff]
    %v1084 = vld [vmem:[#allocation7 + $0xb8] sm:$0xff]
    %v1085 = vld [vmem:[#allocation7 + $0xc0] sm:$0xff]
    %v1086 = vld [vmem:[#allocation7 + $0xc8] sm:$0xff]
    %v1087 = vld [vmem:[#allocation7 + $0xd0] sm:$0xff]
    %v1088 = vld [vmem:[#allocation7 + $0xd8] sm:$0xff]
    %v1089 = vld [vmem:[#allocation7 + $0xe0] sm:$0xff]
    %v1090 = vld [vmem:[#allocation7 + $0xe8] sm:$0xff]
    %v1091 = vld [vmem:[#allocation7 + $0xf0] sm:$0xff]
    %v1092 = vld [vmem:[#allocation7 + $0xf8] sm:$0xff]
    %s1093 = scalar_lea.vmem [#allocation5], 8
    %v1094 = vld [vmem:[%s1093] sm:$0xf]
    %v1095 = vld [vmem:[#allocation8] sm:$0xff]
    %v1096 = vld [vmem:[#allocation8 + $0x8] sm:$0xff]
    %v1097 = vld [vmem:[#allocation8 + $0x10] sm:$0xff]
    %v1098 = vld [vmem:[#allocation8 + $0x18] sm:$0xff]
    %v1099 = vld [vmem:[#allocation8 + $0x20] sm:$0xff]
    %v1100 = vld [vmem:[#allocation8 + $0x28] sm:$0xff]
    %v1101 = vld [vmem:[#allocation8 + $0x30] sm:$0xff]
    %v1102 = vld [vmem:[#allocation8 + $0x38] sm:$0xff]
    %v1103 = vld [vmem:[#allocation8 + $0x40] sm:$0xff]
    %v1104 = vld [vmem:[#allocation8 + $0x48] sm:$0xff]
    %v1105 = vld [vmem:[#allocation8 + $0x50] sm:$0xff]
    %v1106 = vld [vmem:[#allocation8 + $0x58] sm:$0xff]
    %v1107 = vld [vmem:[#allocation8 + $0x60] sm:$0xff]
    %v1108 = vld [vmem:[#allocation8 + $0x68] sm:$0xff]
    %v1109 = vld [vmem:[#allocation8 + $0x70] sm:$0xff]
    %v1110 = vld [vmem:[#allocation8 + $0x78] sm:$0xff]
    %v1111 = vld [vmem:[#allocation8 + $0x80] sm:$0xff]
    %v1112 = vld [vmem:[#allocation8 + $0x88] sm:$0xff]
    %v1113 = vld [vmem:[#allocation8 + $0x90] sm:$0xff]
    %v1114 = vld [vmem:[#allocation8 + $0x98] sm:$0xff]
    %v1115 = vld [vmem:[#allocation8 + $0xa0] sm:$0xff]
    %v1116 = vld [vmem:[#allocation8 + $0xa8] sm:$0xff]
    %v1117 = vld [vmem:[#allocation8 + $0xb0] sm:$0xff]
    %v1118 = vld [vmem:[#allocation8 + $0xb8] sm:$0xff]
    %v1119 = vld [vmem:[#allocation8 + $0xc0] sm:$0xff]
    %v1120 = vld [vmem:[#allocation8 + $0xc8] sm:$0xff]
    %v1121 = vld [vmem:[#allocation8 + $0xd0] sm:$0xff]
    %v1122 = vld [vmem:[#allocation8 + $0xd8] sm:$0xff]
    %v1123 = vld [vmem:[#allocation8 + $0xe0] sm:$0xff]
    %v1124 = vld [vmem:[#allocation8 + $0xe8] sm:$0xff]
    %v1125 = vld [vmem:[#allocation8 + $0xf0] sm:$0xff]
    %v1126 = vld [vmem:[#allocation8 + $0xf8] sm:$0xff]
    %v1129 = vunpack.c.l.s4 1983009808
    %v1130 = vunpack.c.0.s8 %v1129
    %v1131 = vlaneseq
    %v1132 = vshrl.u32 %v1131, 7
    %v1133 = vsub.s32 %v1130, %v1132
    %v1134 = vrot.slane %v1094, %v1133
    %v1135 = vcombine.high %v1134, %v1134
    %v1170 = vunpack.c.l.b16 %v1095
    %v1171 = vunpack.c.h.b16 %v1095
    %v1172 = vunpack.c.l.b16 %v1096
    %v1173 = vunpack.c.h.b16 %v1096
    %v1174 = vunpack.c.l.b16 %v1097
    %v1175 = vunpack.c.h.b16 %v1097
    %v1176 = vunpack.c.l.b16 %v1098
    %v1177 = vunpack.c.h.b16 %v1098
    %v1178 = vunpack.c.l.b16 %v1099
    %v1179 = vunpack.c.h.b16 %v1099
    %v1180 = vunpack.c.l.b16 %v1100
    %v1181 = vunpack.c.h.b16 %v1100
    %v1182 = vunpack.c.l.b16 %v1101
    %v1183 = vunpack.c.h.b16 %v1101
    %v1184 = vunpack.c.l.b16 %v1102
    %v1185 = vunpack.c.h.b16 %v1102
    %v1186 = vunpack.c.l.b16 %v1103
    %v1187 = vunpack.c.h.b16 %v1103
    %v1188 = vunpack.c.l.b16 %v1104
    %v1189 = vunpack.c.h.b16 %v1104
    %v1190 = vunpack.c.l.b16 %v1105
    %v1191 = vunpack.c.h.b16 %v1105
    %v1192 = vunpack.c.l.b16 %v1106
    %v1193 = vunpack.c.h.b16 %v1106
    %v1194 = vunpack.c.l.b16 %v1107
    %v1195 = vunpack.c.h.b16 %v1107
    %v1196 = vunpack.c.l.b16 %v1108
    %v1197 = vunpack.c.h.b16 %v1108
    %v1198 = vunpack.c.l.b16 %v1109
    %v1199 = vunpack.c.h.b16 %v1109
    %v1200 = vunpack.c.l.b16 %v1110
    %v1201 = vunpack.c.h.b16 %v1110
    %v1202 = vunpack.c.l.b16 %v1111
    %v1203 = vunpack.c.h.b16 %v1111
    %v1204 = vunpack.c.l.b16 %v1112
    %v1205 = vunpack.c.h.b16 %v1112
    %v1206 = vunpack.c.l.b16 %v1113
    %v1207 = vunpack.c.h.b16 %v1113
    %v1208 = vunpack.c.l.b16 %v1114
    %v1209 = vunpack.c.h.b16 %v1114
    %v1210 = vunpack.c.l.b16 %v1115
    %v1211 = vunpack.c.h.b16 %v1115
    %v1212 = vunpack.c.l.b16 %v1116
    %v1213 = vunpack.c.h.b16 %v1116
    %v1214 = vunpack.c.l.b16 %v1117
    %v1215 = vunpack.c.h.b16 %v1117
    %v1216 = vunpack.c.l.b16 %v1118
    %v1217 = vunpack.c.h.b16 %v1118
    %v1218 = vunpack.c.l.b16 %v1119
    %v1219 = vunpack.c.h.b16 %v1119
    %v1220 = vunpack.c.l.b16 %v1120
    %v1221 = vunpack.c.h.b16 %v1120
    %v1222 = vunpack.c.l.b16 %v1121
    %v1223 = vunpack.c.h.b16 %v1121
    %v1224 = vunpack.c.l.b16 %v1122
    %v1225 = vunpack.c.h.b16 %v1122
    %v1226 = vunpack.c.l.b16 %v1123
    %v1227 = vunpack.c.h.b16 %v1123
    %v1228 = vunpack.c.l.b16 %v1124
    %v1229 = vunpack.c.h.b16 %v1124
    %v1230 = vunpack.c.l.b16 %v1125
    %v1231 = vunpack.c.h.b16 %v1125
    %v1232 = vunpack.c.l.b16 %v1126
    %v1233 = vunpack.c.h.b16 %v1126
    %v1234 = vpack.c.b16 %v1172, %v1170
    %v1235 = vpack.c.b16 %v1173, %v1171
    %v1236 = vpack.c.b16 %v1176, %v1174
    %v1237 = vpack.c.b16 %v1177, %v1175
    %v1238 = vpack.c.b16 %v1180, %v1178
    %v1239 = vpack.c.b16 %v1181, %v1179
    %v1240 = vpack.c.b16 %v1184, %v1182
    %v1241 = vpack.c.b16 %v1185, %v1183
    %v1242 = vpack.c.b16 %v1188, %v1186
    %v1243 = vpack.c.b16 %v1189, %v1187
    %v1244 = vpack.c.b16 %v1192, %v1190
    %v1245 = vpack.c.b16 %v1193, %v1191
    %v1246 = vpack.c.b16 %v1196, %v1194
    %v1247 = vpack.c.b16 %v1197, %v1195
    %v1248 = vpack.c.b16 %v1200, %v1198
    %v1249 = vpack.c.b16 %v1201, %v1199
    %v1250 = vpack.c.b16 %v1204, %v1202
    %v1251 = vpack.c.b16 %v1205, %v1203
    %v1252 = vpack.c.b16 %v1208, %v1206
    %v1253 = vpack.c.b16 %v1209, %v1207
    %v1254 = vpack.c.b16 %v1212, %v1210
    %v1255 = vpack.c.b16 %v1213, %v1211
    %v1256 = vpack.c.b16 %v1216, %v1214
    %v1257 = vpack.c.b16 %v1217, %v1215
    %v1258 = vpack.c.b16 %v1220, %v1218
    %v1259 = vpack.c.b16 %v1221, %v1219
    %v1260 = vpack.c.b16 %v1224, %v1222
    %v1261 = vpack.c.b16 %v1225, %v1223
    %v1262 = vpack.c.b16 %v1228, %v1226
    %v1263 = vpack.c.b16 %v1229, %v1227
    %v1264 = vpack.c.b16 %v1232, %v1230
    %v1265 = vpack.c.b16 %v1233, %v1231
    %1298 = vmatprep.subr.bf16.mxu0 %v1235
    %1299 = vmatpush1.bf16.msra.mxu0 %v1234
    %1300 = vmatprep.subr.bf16.mxu0 %v1237
    %1301 = vmatpush1.bf16.msra.mxu0 %v1236
    %1302 = vmatprep.subr.bf16.mxu0 %v1239
    %1303 = vmatpush1.bf16.msra.mxu0 %v1238
    %1304 = vmatprep.subr.bf16.mxu0 %v1241
    %1305 = vmatpush1.bf16.msra.mxu0 %v1240
    %1306 = vmatprep.subr.bf16.mxu0 %v1243
    %1307 = vmatpush1.bf16.msra.mxu0 %v1242
    %1308 = vmatprep.subr.bf16.mxu0 %v1245
    %1309 = vmatpush1.bf16.msra.mxu0 %v1244
    %1310 = vmatprep.subr.bf16.mxu0 %v1247
    %1311 = vmatpush1.bf16.msra.mxu0 %v1246
    %1312 = vmatprep.subr.bf16.mxu0 %v1249
    %1313 = vmatpush1.bf16.msra.mxu0 %v1248
    %1314 = vmatprep.subr.bf16.mxu0 %v1251
    %1315 = vmatpush1.bf16.msra.mxu0 %v1250
    %1316 = vmatprep.subr.bf16.mxu0 %v1253
    %1317 = vmatpush1.bf16.msra.mxu0 %v1252
    %1318 = vmatprep.subr.bf16.mxu0 %v1255
    %1319 = vmatpush1.bf16.msra.mxu0 %v1254
    %1320 = vmatprep.subr.bf16.mxu0 %v1257
    %1321 = vmatpush1.bf16.msra.mxu0 %v1256
    %1322 = vmatprep.subr.bf16.mxu0 %v1259
    %1323 = vmatpush1.bf16.msra.mxu0 %v1258
    %1324 = vmatprep.subr.bf16.mxu0 %v1261
    %1325 = vmatpush1.bf16.msra.mxu0 %v1260
    %1326 = vmatprep.subr.bf16.mxu0 %v1263
    %1327 = vmatpush1.bf16.msra.mxu0 %v1262
    %1328 = vmatprep.subr.bf16.mxu0 %v1265
    %1329 = vmatpush1.bf16.msra.mxu0 %v1264
    %1330 = vmatprep.mubr.bf16.mxu0 %v1135
    %1331 = vmatmul.mubr.bf16.gmra.mrb[0].mxu0 %v1134
    %v1332 = vpop.f32.mrb[0].mxu0
    %v1333 = vadd.f32 0.0, %v1332
    %v1334 = vpop.f32.mrb[0].mxu0
    %v1335 = vadd.f32 0.0, %v1334
    %v1336 = vpop.f32.mrb[0].mxu0
    %v1337 = vpop.f32.mrb[0].mxu0
    %1338 = vdwg.mxu0
    %v1341 = vunpack.c.l.s4 1983009808
    %v1342 = vunpack.c.0.s8 %v1341
    %v1343 = vlaneseq
    %v1344 = vshrl.u32 %v1343, 7
    %v1345 = vsub.s32 %v1342, %v1344
    %v1346 = vrot.slane %v1060, %v1345
    %v1347 = vcombine.high %v1346, %v1346
    %v1382 = vunpack.c.l.b16 %v1061
    %v1383 = vunpack.c.h.b16 %v1061
    %v1384 = vunpack.c.l.b16 %v1062
    %v1385 = vunpack.c.h.b16 %v1062
    %v1386 = vunpack.c.l.b16 %v1063
    %v1387 = vunpack.c.h.b16 %v1063
    %v1388 = vunpack.c.l.b16 %v1064
    %v1389 = vunpack.c.h.b16 %v1064
    %v1390 = vunpack.c.l.b16 %v1065
    %v1391 = vunpack.c.h.b16 %v1065
    %v1392 = vunpack.c.l.b16 %v1066
    %v1393 = vunpack.c.h.b16 %v1066
    %v1394 = vunpack.c.l.b16 %v1067
    %v1395 = vunpack.c.h.b16 %v1067
    %v1396 = vunpack.c.l.b16 %v1068
    %v1397 = vunpack.c.h.b16 %v1068
    %v1398 = vunpack.c.l.b16 %v1069
    %v1399 = vunpack.c.h.b16 %v1069
    %v1400 = vunpack.c.l.b16 %v1070
    %v1401 = vunpack.c.h.b16 %v1070
    %v1402 = vunpack.c.l.b16 %v1071
    %v1403 = vunpack.c.h.b16 %v1071
    %v1404 = vunpack.c.l.b16 %v1072
    %v1405 = vunpack.c.h.b16 %v1072
    %v1406 = vunpack.c.l.b16 %v1073
    %v1407 = vunpack.c.h.b16 %v1073
    %v1408 = vunpack.c.l.b16 %v1074
    %v1409 = vunpack.c.h.b16 %v1074
    %v1410 = vunpack.c.l.b16 %v1075
    %v1411 = vunpack.c.h.b16 %v1075
    %v1412 = vunpack.c.l.b16 %v1076
    %v1413 = vunpack.c.h.b16 %v1076
    %v1414 = vunpack.c.l.b16 %v1077
    %v1415 = vunpack.c.h.b16 %v1077
    %v1416 = vunpack.c.l.b16 %v1078
    %v1417 = vunpack.c.h.b16 %v1078
    %v1418 = vunpack.c.l.b16 %v1079
    %v1419 = vunpack.c.h.b16 %v1079
    %v1420 = vunpack.c.l.b16 %v1080
    %v1421 = vunpack.c.h.b16 %v1080
    %v1422 = vunpack.c.l.b16 %v1081
    %v1423 = vunpack.c.h.b16 %v1081
    %v1424 = vunpack.c.l.b16 %v1082
    %v1425 = vunpack.c.h.b16 %v1082
    %v1426 = vunpack.c.l.b16 %v1083
    %v1427 = vunpack.c.h.b16 %v1083
    %v1428 = vunpack.c.l.b16 %v1084
    %v1429 = vunpack.c.h.b16 %v1084
    %v1430 = vunpack.c.l.b16 %v1085
    %v1431 = vunpack.c.h.b16 %v1085
    %v1432 = vunpack.c.l.b16 %v1086
    %v1433 = vunpack.c.h.b16 %v1086
    %v1434 = vunpack.c.l.b16 %v1087
    %v1435 = vunpack.c.h.b16 %v1087
    %v1436 = vunpack.c.l.b16 %v1088
    %v1437 = vunpack.c.h.b16 %v1088
    %v1438 = vunpack.c.l.b16 %v1089
    %v1439 = vunpack.c.h.b16 %v1089
    %v1440 = vunpack.c.l.b16 %v1090
    %v1441 = vunpack.c.h.b16 %v1090
    %v1442 = vunpack.c.l.b16 %v1091
    %v1443 = vunpack.c.h.b16 %v1091
    %v1444 = vunpack.c.l.b16 %v1092
    %v1445 = vunpack.c.h.b16 %v1092
    %v1446 = vpack.c.b16 %v1384, %v1382
    %v1447 = vpack.c.b16 %v1385, %v1383
    %v1448 = vpack.c.b16 %v1388, %v1386
    %v1449 = vpack.c.b16 %v1389, %v1387
    %v1450 = vpack.c.b16 %v1392, %v1390
    %v1451 = vpack.c.b16 %v1393, %v1391
    %v1452 = vpack.c.b16 %v1396, %v1394
    %v1453 = vpack.c.b16 %v1397, %v1395
    %v1454 = vpack.c.b16 %v1400, %v1398
    %v1455 = vpack.c.b16 %v1401, %v1399
    %v1456 = vpack.c.b16 %v1404, %v1402
    %v1457 = vpack.c.b16 %v1405, %v1403
    %v1458 = vpack.c.b16 %v1408, %v1406
    %v1459 = vpack.c.b16 %v1409, %v1407
    %v1460 = vpack.c.b16 %v1412, %v1410
    %v1461 = vpack.c.b16 %v1413, %v1411
    %v1462 = vpack.c.b16 %v1416, %v1414
    %v1463 = vpack.c.b16 %v1417, %v1415
    %v1464 = vpack.c.b16 %v1420, %v1418
    %v1465 = vpack.c.b16 %v1421, %v1419
    %v1466 = vpack.c.b16 %v1424, %v1422
    %v1467 = vpack.c.b16 %v1425, %v1423
    %v1468 = vpack.c.b16 %v1428, %v1426
    %v1469 = vpack.c.b16 %v1429, %v1427
    %v1470 = vpack.c.b16 %v1432, %v1430
    %v1471 = vpack.c.b16 %v1433, %v1431
    %v1472 = vpack.c.b16 %v1436, %v1434
    %v1473 = vpack.c.b16 %v1437, %v1435
    %v1474 = vpack.c.b16 %v1440, %v1438
    %v1475 = vpack.c.b16 %v1441, %v1439
    %v1476 = vpack.c.b16 %v1444, %v1442
    %v1477 = vpack.c.b16 %v1445, %v1443
    %1510 = vmatprep.subr.bf16.mxu0 %v1447
    %1511 = vmatpush1.bf16.msra.mxu0 %v1446
    %1512 = vmatprep.subr.bf16.mxu0 %v1449
    %1513 = vmatpush1.bf16.msra.mxu0 %v1448
    %1514 = vmatprep.subr.bf16.mxu0 %v1451
    %1515 = vmatpush1.bf16.msra.mxu0 %v1450
    %1516 = vmatprep.subr.bf16.mxu0 %v1453
    %1517 = vmatpush1.bf16.msra.mxu0 %v1452
    %1518 = vmatprep.subr.bf16.mxu0 %v1455
    %1519 = vmatpush1.bf16.msra.mxu0 %v1454
    %1520 = vmatprep.subr.bf16.mxu0 %v1457
    %1521 = vmatpush1.bf16.msra.mxu0 %v1456
    %1522 = vmatprep.subr.bf16.mxu0 %v1459
    %1523 = vmatpush1.bf16.msra.mxu0 %v1458
    %1524 = vmatprep.subr.bf16.mxu0 %v1461
    %1525 = vmatpush1.bf16.msra.mxu0 %v1460
    %1526 = vmatprep.subr.bf16.mxu0 %v1463
    %1527 = vmatpush1.bf16.msra.mxu0 %v1462
    %1528 = vmatprep.subr.bf16.mxu0 %v1465
    %1529 = vmatpush1.bf16.msra.mxu0 %v1464
    %1530 = vmatprep.subr.bf16.mxu0 %v1467
    %1531 = vmatpush1.bf16.msra.mxu0 %v1466
    %1532 = vmatprep.subr.bf16.mxu0 %v1469
    %1533 = vmatpush1.bf16.msra.mxu0 %v1468
    %1534 = vmatprep.subr.bf16.mxu0 %v1471
    %1535 = vmatpush1.bf16.msra.mxu0 %v1470
    %1536 = vmatprep.subr.bf16.mxu0 %v1473
    %1537 = vmatpush1.bf16.msra.mxu0 %v1472
    %1538 = vmatprep.subr.bf16.mxu0 %v1475
    %1539 = vmatpush1.bf16.msra.mxu0 %v1474
    %1540 = vmatprep.subr.bf16.mxu0 %v1477
    %1541 = vmatpush1.bf16.msra.mxu0 %v1476
    %1542 = vmatprep.mubr.bf16.mxu0 %v1347
    %1543 = vmatmul.mubr.bf16.gmra.mrb[0].mxu0 %v1346
    %v1544 = vpop.f32.mrb[0].mxu0
    %v1545 = vadd.f32 %v1333, %v1544
    %v1546 = vpop.f32.mrb[0].mxu0
    %v1547 = vadd.f32 %v1335, %v1546
    %v1548 = vpop.f32.mrb[0].mxu0
    %v1549 = vpop.f32.mrb[0].mxu0
    %1550 = vdwg.mxu0
    %v1551 = vadd.f32 %v1053, %v1545
    %1552 = vst [vmem:[#allocation10 + $0x8] sm:$0xf] %v1551
    %s1553 = scalar_lea.vmem [#allocation2], 12
    %v1554 = vld [vmem:[%s1553] sm:$0xf]
    %v1555 = vld [vmem:[#allocation7] sm:$0xff]
    %v1556 = vld [vmem:[#allocation7 + $0x8] sm:$0xff]
    %v1557 = vld [vmem:[#allocation7 + $0x10] sm:$0xff]
    %v1558 = vld [vmem:[#allocation7 + $0x18] sm:$0xff]
    %v1559 = vld [vmem:[#allocation7 + $0x20] sm:$0xff]
    %v1560 = vld [vmem:[#allocation7 + $0x28] sm:$0xff]
    %v1561 = vld [vmem:[#allocation7 + $0x30] sm:$0xff]
    %v1562 = vld [vmem:[#allocation7 + $0x38] sm:$0xff]
    %v1563 = vld [vmem:[#allocation7 + $0x40] sm:$0xff]
    %v1564 = vld [vmem:[#allocation7 + $0x48] sm:$0xff]
    %v1565 = vld [vmem:[#allocation7 + $0x50] sm:$0xff]
    %v1566 = vld [vmem:[#allocation7 + $0x58] sm:$0xff]
    %v1567 = vld [vmem:[#allocation7 + $0x60] sm:$0xff]
    %v1568 = vld [vmem:[#allocation7 + $0x68] sm:$0xff]
    %v1569 = vld [vmem:[#allocation7 + $0x70] sm:$0xff]
    %v1570 = vld [vmem:[#allocation7 + $0x78] sm:$0xff]
    %v1571 = vld [vmem:[#allocation7 + $0x80] sm:$0xff]
    %v1572 = vld [vmem:[#allocation7 + $0x88] sm:$0xff]
    %v1573 = vld [vmem:[#allocation7 + $0x90] sm:$0xff]
    %v1574 = vld [vmem:[#allocation7 + $0x98] sm:$0xff]
    %v1575 = vld [vmem:[#allocation7 + $0xa0] sm:$0xff]
    %v1576 = vld [vmem:[#allocation7 + $0xa8] sm:$0xff]
    %v1577 = vld [vmem:[#allocation7 + $0xb0] sm:$0xff]
    %v1578 = vld [vmem:[#allocation7 + $0xb8] sm:$0xff]
    %v1579 = vld [vmem:[#allocation7 + $0xc0] sm:$0xff]
    %v1580 = vld [vmem:[#allocation7 + $0xc8] sm:$0xff]
    %v1581 = vld [vmem:[#allocation7 + $0xd0] sm:$0xff]
    %v1582 = vld [vmem:[#allocation7 + $0xd8] sm:$0xff]
    %v1583 = vld [vmem:[#allocation7 + $0xe0] sm:$0xff]
    %v1584 = vld [vmem:[#allocation7 + $0xe8] sm:$0xff]
    %v1585 = vld [vmem:[#allocation7 + $0xf0] sm:$0xff]
    %v1586 = vld [vmem:[#allocation7 + $0xf8] sm:$0xff]
    %s1587 = scalar_lea.vmem [#allocation5], 12
    %v1588 = vld [vmem:[%s1587] sm:$0xf]
    %v1589 = vld [vmem:[#allocation8] sm:$0xff]
    %v1590 = vld [vmem:[#allocation8 + $0x8] sm:$0xff]
    %v1591 = vld [vmem:[#allocation8 + $0x10] sm:$0xff]
    %v1592 = vld [vmem:[#allocation8 + $0x18] sm:$0xff]
    %v1593 = vld [vmem:[#allocation8 + $0x20] sm:$0xff]
    %v1594 = vld [vmem:[#allocation8 + $0x28] sm:$0xff]
    %v1595 = vld [vmem:[#allocation8 + $0x30] sm:$0xff]
    %v1596 = vld [vmem:[#allocation8 + $0x38] sm:$0xff]
    %v1597 = vld [vmem:[#allocation8 + $0x40] sm:$0xff]
    %v1598 = vld [vmem:[#allocation8 + $0x48] sm:$0xff]
    %v1599 = vld [vmem:[#allocation8 + $0x50] sm:$0xff]
    %v1600 = vld [vmem:[#allocation8 + $0x58] sm:$0xff]
    %v1601 = vld [vmem:[#allocation8 + $0x60] sm:$0xff]
    %v1602 = vld [vmem:[#allocation8 + $0x68] sm:$0xff]
    %v1603 = vld [vmem:[#allocation8 + $0x70] sm:$0xff]
    %v1604 = vld [vmem:[#allocation8 + $0x78] sm:$0xff]
    %v1605 = vld [vmem:[#allocation8 + $0x80] sm:$0xff]
    %v1606 = vld [vmem:[#allocation8 + $0x88] sm:$0xff]
    %v1607 = vld [vmem:[#allocation8 + $0x90] sm:$0xff]
    %v1608 = vld [vmem:[#allocation8 + $0x98] sm:$0xff]
    %v1609 = vld [vmem:[#allocation8 + $0xa0] sm:$0xff]
    %v1610 = vld [vmem:[#allocation8 + $0xa8] sm:$0xff]
    %v1611 = vld [vmem:[#allocation8 + $0xb0] sm:$0xff]
    %v1612 = vld [vmem:[#allocation8 + $0xb8] sm:$0xff]
    %v1613 = vld [vmem:[#allocation8 + $0xc0] sm:$0xff]
    %v1614 = vld [vmem:[#allocation8 + $0xc8] sm:$0xff]
    %v1615 = vld [vmem:[#allocation8 + $0xd0] sm:$0xff]
    %v1616 = vld [vmem:[#allocation8 + $0xd8] sm:$0xff]
    %v1617 = vld [vmem:[#allocation8 + $0xe0] sm:$0xff]
    %v1618 = vld [vmem:[#allocation8 + $0xe8] sm:$0xff]
    %v1619 = vld [vmem:[#allocation8 + $0xf0] sm:$0xff]
    %v1620 = vld [vmem:[#allocation8 + $0xf8] sm:$0xff]
    %v1623 = vunpack.c.l.s4 1983009808
    %v1624 = vunpack.c.0.s8 %v1623
    %v1625 = vlaneseq
    %v1626 = vshrl.u32 %v1625, 7
    %v1627 = vsub.s32 %v1624, %v1626
    %v1628 = vrot.slane %v1588, %v1627
    %v1629 = vcombine.high %v1628, %v1628
    %v1664 = vunpack.c.l.b16 %v1589
    %v1665 = vunpack.c.h.b16 %v1589
    %v1666 = vunpack.c.l.b16 %v1590
    %v1667 = vunpack.c.h.b16 %v1590
    %v1668 = vunpack.c.l.b16 %v1591
    %v1669 = vunpack.c.h.b16 %v1591
    %v1670 = vunpack.c.l.b16 %v1592
    %v1671 = vunpack.c.h.b16 %v1592
    %v1672 = vunpack.c.l.b16 %v1593
    %v1673 = vunpack.c.h.b16 %v1593
    %v1674 = vunpack.c.l.b16 %v1594
    %v1675 = vunpack.c.h.b16 %v1594
    %v1676 = vunpack.c.l.b16 %v1595
    %v1677 = vunpack.c.h.b16 %v1595
    %v1678 = vunpack.c.l.b16 %v1596
    %v1679 = vunpack.c.h.b16 %v1596
    %v1680 = vunpack.c.l.b16 %v1597
    %v1681 = vunpack.c.h.b16 %v1597
    %v1682 = vunpack.c.l.b16 %v1598
    %v1683 = vunpack.c.h.b16 %v1598
    %v1684 = vunpack.c.l.b16 %v1599
    %v1685 = vunpack.c.h.b16 %v1599
    %v1686 = vunpack.c.l.b16 %v1600
    %v1687 = vunpack.c.h.b16 %v1600
    %v1688 = vunpack.c.l.b16 %v1601
    %v1689 = vunpack.c.h.b16 %v1601
    %v1690 = vunpack.c.l.b16 %v1602
    %v1691 = vunpack.c.h.b16 %v1602
    %v1692 = vunpack.c.l.b16 %v1603
    %v1693 = vunpack.c.h.b16 %v1603
    %v1694 = vunpack.c.l.b16 %v1604
    %v1695 = vunpack.c.h.b16 %v1604
    %v1696 = vunpack.c.l.b16 %v1605
    %v1697 = vunpack.c.h.b16 %v1605
    %v1698 = vunpack.c.l.b16 %v1606
    %v1699 = vunpack.c.h.b16 %v1606
    %v1700 = vunpack.c.l.b16 %v1607
    %v1701 = vunpack.c.h.b16 %v1607
    %v1702 = vunpack.c.l.b16 %v1608
    %v1703 = vunpack.c.h.b16 %v1608
    %v1704 = vunpack.c.l.b16 %v1609
    %v1705 = vunpack.c.h.b16 %v1609
    %v1706 = vunpack.c.l.b16 %v1610
    %v1707 = vunpack.c.h.b16 %v1610
    %v1708 = vunpack.c.l.b16 %v1611
    %v1709 = vunpack.c.h.b16 %v1611
    %v1710 = vunpack.c.l.b16 %v1612
    %v1711 = vunpack.c.h.b16 %v1612
    %v1712 = vunpack.c.l.b16 %v1613
    %v1713 = vunpack.c.h.b16 %v1613
    %v1714 = vunpack.c.l.b16 %v1614
    %v1715 = vunpack.c.h.b16 %v1614
    %v1716 = vunpack.c.l.b16 %v1615
    %v1717 = vunpack.c.h.b16 %v1615
    %v1718 = vunpack.c.l.b16 %v1616
    %v1719 = vunpack.c.h.b16 %v1616
    %v1720 = vunpack.c.l.b16 %v1617
    %v1721 = vunpack.c.h.b16 %v1617
    %v1722 = vunpack.c.l.b16 %v1618
    %v1723 = vunpack.c.h.b16 %v1618
    %v1724 = vunpack.c.l.b16 %v1619
    %v1725 = vunpack.c.h.b16 %v1619
    %v1726 = vunpack.c.l.b16 %v1620
    %v1727 = vunpack.c.h.b16 %v1620
    %v1728 = vpack.c.b16 %v1666, %v1664
    %v1729 = vpack.c.b16 %v1667, %v1665
    %v1730 = vpack.c.b16 %v1670, %v1668
    %v1731 = vpack.c.b16 %v1671, %v1669
    %v1732 = vpack.c.b16 %v1674, %v1672
    %v1733 = vpack.c.b16 %v1675, %v1673
    %v1734 = vpack.c.b16 %v1678, %v1676
    %v1735 = vpack.c.b16 %v1679, %v1677
    %v1736 = vpack.c.b16 %v1682, %v1680
    %v1737 = vpack.c.b16 %v1683, %v1681
    %v1738 = vpack.c.b16 %v1686, %v1684
    %v1739 = vpack.c.b16 %v1687, %v1685
    %v1740 = vpack.c.b16 %v1690, %v1688
    %v1741 = vpack.c.b16 %v1691, %v1689
    %v1742 = vpack.c.b16 %v1694, %v1692
    %v1743 = vpack.c.b16 %v1695, %v1693
    %v1744 = vpack.c.b16 %v1698, %v1696
    %v1745 = vpack.c.b16 %v1699, %v1697
    %v1746 = vpack.c.b16 %v1702, %v1700
    %v1747 = vpack.c.b16 %v1703, %v1701
    %v1748 = vpack.c.b16 %v1706, %v1704
    %v1749 = vpack.c.b16 %v1707, %v1705
    %v1750 = vpack.c.b16 %v1710, %v1708
    %v1751 = vpack.c.b16 %v1711, %v1709
    %v1752 = vpack.c.b16 %v1714, %v1712
    %v1753 = vpack.c.b16 %v1715, %v1713
    %v1754 = vpack.c.b16 %v1718, %v1716
    %v1755 = vpack.c.b16 %v1719, %v1717
    %v1756 = vpack.c.b16 %v1722, %v1720
    %v1757 = vpack.c.b16 %v1723, %v1721
    %v1758 = vpack.c.b16 %v1726, %v1724
    %v1759 = vpack.c.b16 %v1727, %v1725
    %1792 = vmatprep.subr.bf16.mxu0 %v1729
    %1793 = vmatpush1.bf16.msra.mxu0 %v1728
    %1794 = vmatprep.subr.bf16.mxu0 %v1731
    %1795 = vmatpush1.bf16.msra.mxu0 %v1730
    %1796 = vmatprep.subr.bf16.mxu0 %v1733
    %1797 = vmatpush1.bf16.msra.mxu0 %v1732
    %1798 = vmatprep.subr.bf16.mxu0 %v1735
    %1799 = vmatpush1.bf16.msra.mxu0 %v1734
    %1800 = vmatprep.subr.bf16.mxu0 %v1737
    %1801 = vmatpush1.bf16.msra.mxu0 %v1736
    %1802 = vmatprep.subr.bf16.mxu0 %v1739
    %1803 = vmatpush1.bf16.msra.mxu0 %v1738
    %1804 = vmatprep.subr.bf16.mxu0 %v1741
    %1805 = vmatpush1.bf16.msra.mxu0 %v1740
    %1806 = vmatprep.subr.bf16.mxu0 %v1743
    %1807 = vmatpush1.bf16.msra.mxu0 %v1742
    %1808 = vmatprep.subr.bf16.mxu0 %v1745
    %1809 = vmatpush1.bf16.msra.mxu0 %v1744
    %1810 = vmatprep.subr.bf16.mxu0 %v1747
    %1811 = vmatpush1.bf16.msra.mxu0 %v1746
    %1812 = vmatprep.subr.bf16.mxu0 %v1749
    %1813 = vmatpush1.bf16.msra.mxu0 %v1748
    %1814 = vmatprep.subr.bf16.mxu0 %v1751
    %1815 = vmatpush1.bf16.msra.mxu0 %v1750
    %1816 = vmatprep.subr.bf16.mxu0 %v1753
    %1817 = vmatpush1.bf16.msra.mxu0 %v1752
    %1818 = vmatprep.subr.bf16.mxu0 %v1755
    %1819 = vmatpush1.bf16.msra.mxu0 %v1754
    %1820 = vmatprep.subr.bf16.mxu0 %v1757
    %1821 = vmatpush1.bf16.msra.mxu0 %v1756
    %1822 = vmatprep.subr.bf16.mxu0 %v1759
    %1823 = vmatpush1.bf16.msra.mxu0 %v1758
    %1824 = vmatprep.mubr.bf16.mxu0 %v1629
    %1825 = vmatmul.mubr.bf16.gmra.mrb[0].mxu0 %v1628
    %v1826 = vpop.f32.mrb[0].mxu0
    %v1827 = vadd.f32 0.0, %v1826
    %v1828 = vpop.f32.mrb[0].mxu0
    %v1829 = vadd.f32 0.0, %v1828
    %v1830 = vpop.f32.mrb[0].mxu0
    %v1831 = vpop.f32.mrb[0].mxu0
    %1832 = vdwg.mxu0
    %v1835 = vunpack.c.l.s4 1983009808
    %v1836 = vunpack.c.0.s8 %v1835
    %v1837 = vlaneseq
    %v1838 = vshrl.u32 %v1837, 7
    %v1839 = vsub.s32 %v1836, %v1838
    %v1840 = vrot.slane %v1554, %v1839
    %v1841 = vcombine.high %v1840, %v1840
    %v1876 = vunpack.c.l.b16 %v1555
    %v1877 = vunpack.c.h.b16 %v1555
    %v1878 = vunpack.c.l.b16 %v1556
    %v1879 = vunpack.c.h.b16 %v1556
    %v1880 = vunpack.c.l.b16 %v1557
    %v1881 = vunpack.c.h.b16 %v1557
    %v1882 = vunpack.c.l.b16 %v1558
    %v1883 = vunpack.c.h.b16 %v1558
    %v1884 = vunpack.c.l.b16 %v1559
    %v1885 = vunpack.c.h.b16 %v1559
    %v1886 = vunpack.c.l.b16 %v1560
    %v1887 = vunpack.c.h.b16 %v1560
    %v1888 = vunpack.c.l.b16 %v1561
    %v1889 = vunpack.c.h.b16 %v1561
    %v1890 = vunpack.c.l.b16 %v1562
    %v1891 = vunpack.c.h.b16 %v1562
    %v1892 = vunpack.c.l.b16 %v1563
    %v1893 = vunpack.c.h.b16 %v1563
    %v1894 = vunpack.c.l.b16 %v1564
    %v1895 = vunpack.c.h.b16 %v1564
    %v1896 = vunpack.c.l.b16 %v1565
    %v1897 = vunpack.c.h.b16 %v1565
    %v1898 = vunpack.c.l.b16 %v1566
    %v1899 = vunpack.c.h.b16 %v1566
    %v1900 = vunpack.c.l.b16 %v1567
    %v1901 = vunpack.c.h.b16 %v1567
    %v1902 = vunpack.c.l.b16 %v1568
    %v1903 = vunpack.c.h.b16 %v1568
    %v1904 = vunpack.c.l.b16 %v1569
    %v1905 = vunpack.c.h.b16 %v1569
    %v1906 = vunpack.c.l.b16 %v1570
    %v1907 = vunpack.c.h.b16 %v1570
    %v1908 = vunpack.c.l.b16 %v1571
    %v1909 = vunpack.c.h.b16 %v1571
    %v1910 = vunpack.c.l.b16 %v1572
    %v1911 = vunpack.c.h.b16 %v1572
    %v1912 = vunpack.c.l.b16 %v1573
    %v1913 = vunpack.c.h.b16 %v1573
    %v1914 = vunpack.c.l.b16 %v1574
    %v1915 = vunpack.c.h.b16 %v1574
    %v1916 = vunpack.c.l.b16 %v1575
    %v1917 = vunpack.c.h.b16 %v1575
    %v1918 = vunpack.c.l.b16 %v1576
    %v1919 = vunpack.c.h.b16 %v1576
    %v1920 = vunpack.c.l.b16 %v1577
    %v1921 = vunpack.c.h.b16 %v1577
    %v1922 = vunpack.c.l.b16 %v1578
    %v1923 = vunpack.c.h.b16 %v1578
    %v1924 = vunpack.c.l.b16 %v1579
    %v1925 = vunpack.c.h.b16 %v1579
    %v1926 = vunpack.c.l.b16 %v1580
    %v1927 = vunpack.c.h.b16 %v1580
    %v1928 = vunpack.c.l.b16 %v1581
    %v1929 = vunpack.c.h.b16 %v1581
    %v1930 = vunpack.c.l.b16 %v1582
    %v1931 = vunpack.c.h.b16 %v1582
    %v1932 = vunpack.c.l.b16 %v1583
    %v1933 = vunpack.c.h.b16 %v1583
    %v1934 = vunpack.c.l.b16 %v1584
    %v1935 = vunpack.c.h.b16 %v1584
    %v1936 = vunpack.c.l.b16 %v1585
    %v1937 = vunpack.c.h.b16 %v1585
    %v1938 = vunpack.c.l.b16 %v1586
    %v1939 = vunpack.c.h.b16 %v1586
    %v1940 = vpack.c.b16 %v1878, %v1876
    %v1941 = vpack.c.b16 %v1879, %v1877
    %v1942 = vpack.c.b16 %v1882, %v1880
    %v1943 = vpack.c.b16 %v1883, %v1881
    %v1944 = vpack.c.b16 %v1886, %v1884
    %v1945 = vpack.c.b16 %v1887, %v1885
    %v1946 = vpack.c.b16 %v1890, %v1888
    %v1947 = vpack.c.b16 %v1891, %v1889
    %v1948 = vpack.c.b16 %v1894, %v1892
    %v1949 = vpack.c.b16 %v1895, %v1893
    %v1950 = vpack.c.b16 %v1898, %v1896
    %v1951 = vpack.c.b16 %v1899, %v1897
    %v1952 = vpack.c.b16 %v1902, %v1900
    %v1953 = vpack.c.b16 %v1903, %v1901
    %v1954 = vpack.c.b16 %v1906, %v1904
    %v1955 = vpack.c.b16 %v1907, %v1905
    %v1956 = vpack.c.b16 %v1910, %v1908
    %v1957 = vpack.c.b16 %v1911, %v1909
    %v1958 = vpack.c.b16 %v1914, %v1912
    %v1959 = vpack.c.b16 %v1915, %v1913
    %v1960 = vpack.c.b16 %v1918, %v1916
    %v1961 = vpack.c.b16 %v1919, %v1917
    %v1962 = vpack.c.b16 %v1922, %v1920
    %v1963 = vpack.c.b16 %v1923, %v1921
    %v1964 = vpack.c.b16 %v1926, %v1924
    %v1965 = vpack.c.b16 %v1927, %v1925
    %v1966 = vpack.c.b16 %v1930, %v1928
    %v1967 = vpack.c.b16 %v1931, %v1929
    %v1968 = vpack.c.b16 %v1934, %v1932
    %v1969 = vpack.c.b16 %v1935, %v1933
    %v1970 = vpack.c.b16 %v1938, %v1936
    %v1971 = vpack.c.b16 %v1939, %v1937
    %2004 = vmatprep.subr.bf16.mxu0 %v1941
    %2005 = vmatpush1.bf16.msra.mxu0 %v1940
    %2006 = vmatprep.subr.bf16.mxu0 %v1943
    %2007 = vmatpush1.bf16.msra.mxu0 %v1942
    %2008 = vmatprep.subr.bf16.mxu0 %v1945
    %2009 = vmatpush1.bf16.msra.mxu0 %v1944
    %2010 = vmatprep.subr.bf16.mxu0 %v1947
    %2011 = vmatpush1.bf16.msra.mxu0 %v1946
    %2012 = vmatprep.subr.bf16.mxu0 %v1949
    %2013 = vmatpush1.bf16.msra.mxu0 %v1948
    %2014 = vmatprep.subr.bf16.mxu0 %v1951
    %2015 = vmatpush1.bf16.msra.mxu0 %v1950
    %2016 = vmatprep.subr.bf16.mxu0 %v1953
    %2017 = vmatpush1.bf16.msra.mxu0 %v1952
    %2018 = vmatprep.subr.bf16.mxu0 %v1955
    %2019 = vmatpush1.bf16.msra.mxu0 %v1954
    %2020 = vmatprep.subr.bf16.mxu0 %v1957
    %2021 = vmatpush1.bf16.msra.mxu0 %v1956
    %2022 = vmatprep.subr.bf16.mxu0 %v1959
    %2023 = vmatpush1.bf16.msra.mxu0 %v1958
    %2024 = vmatprep.subr.bf16.mxu0 %v1961
    %2025 = vmatpush1.bf16.msra.mxu0 %v1960
    %2026 = vmatprep.subr.bf16.mxu0 %v1963
    %2027 = vmatpush1.bf16.msra.mxu0 %v1962
    %2028 = vmatprep.subr.bf16.mxu0 %v1965
    %2029 = vmatpush1.bf16.msra.mxu0 %v1964
    %2030 = vmatprep.subr.bf16.mxu0 %v1967
    %2031 = vmatpush1.bf16.msra.mxu0 %v1966
    %2032 = vmatprep.subr.bf16.mxu0 %v1969
    %2033 = vmatpush1.bf16.msra.mxu0 %v1968
    %2034 = vmatprep.subr.bf16.mxu0 %v1971
    %2035 = vmatpush1.bf16.msra.mxu0 %v1970
    %2036 = vmatprep.mubr.bf16.mxu0 %v1841
    %2037 = vmatmul.mubr.bf16.gmra.mrb[0].mxu0 %v1840
    %v2038 = vpop.f32.mrb[0].mxu0
    %v2039 = vadd.f32 %v1827, %v2038
    %v2040 = vpop.f32.mrb[0].mxu0
    %v2041 = vadd.f32 %v1829, %v2040
    %v2042 = vpop.f32.mrb[0].mxu0
    %v2043 = vpop.f32.mrb[0].mxu0
    %2044 = vdwg.mxu0
    %v2045 = vadd.f32 %v1547, %v2039
    %2046 = vst [vmem:[#allocation10 + $0xc] sm:$0xf] %v2045
    %s2047 = scalar_lea.vmem [#allocation2], 16
    %v2048 = vld [vmem:[%s2047] sm:$0xf]
    %v2049 = vld [vmem:[#allocation7] sm:$0xff]
    %v2050 = vld [vmem:[#allocation7 + $0x8] sm:$0xff]
    %v2051 = vld [vmem:[#allocation7 + $0x10] sm:$0xff]
    %v2052 = vld [vmem:[#allocation7 + $0x18] sm:$0xff]
    %v2053 = vld [vmem:[#allocation7 + $0x20] sm:$0xff]
    %v2054 = vld [vmem:[#allocation7 + $0x28] sm:$0xff]
    %v2055 = vld [vmem:[#allocation7 + $0x30] sm:$0xff]
    %v2056 = vld [vmem:[#allocation7 + $0x38] sm:$0xff]
    %v2057 = vld [vmem:[#allocation7 + $0x40] sm:$0xff]
    %v2058 = vld [vmem:[#allocation7 + $0x48] sm:$0xff]
    %v2059 = vld [vmem:[#allocation7 + $0x50] sm:$0xff]
    %v2060 = vld [vmem:[#allocation7 + $0x58] sm:$0xff]
    %v2061 = vld [vmem:[#allocation7 + $0x60] sm:$0xff]
    %v2062 = vld [vmem:[#allocation7 + $0x68] sm:$0xff]
    %v2063 = vld [vmem:[#allocation7 + $0x70] sm:$0xff]
    %v2064 = vld [vmem:[#allocation7 + $0x78] sm:$0xff]
    %v2065 = vld [vmem:[#allocation7 + $0x80] sm:$0xff]
    %v2066 = vld [vmem:[#allocation7 + $0x88] sm:$0xff]
    %v2067 = vld [vmem:[#allocation7 + $0x90] sm:$0xff]
    %v2068 = vld [vmem:[#allocation7 + $0x98] sm:$0xff]
    %v2069 = vld [vmem:[#allocation7 + $0xa0] sm:$0xff]
    %v2070 = vld [vmem:[#allocation7 + $0xa8] sm:$0xff]
    %v2071 = vld [vmem:[#allocation7 + $0xb0] sm:$0xff]
    %v2072 = vld [vmem:[#allocation7 + $0xb8] sm:$0xff]
    %v2073 = vld [vmem:[#allocation7 + $0xc0] sm:$0xff]
    %v2074 = vld [vmem:[#allocation7 + $0xc8] sm:$0xff]
    %v2075 = vld [vmem:[#allocation7 + $0xd0] sm:$0xff]
    %v2076 = vld [vmem:[#allocation7 + $0xd8] sm:$0xff]
    %v2077 = vld [vmem:[#allocation7 + $0xe0] sm:$0xff]
    %v2078 = vld [vmem:[#allocation7 + $0xe8] sm:$0xff]
    %v2079 = vld [vmem:[#allocation7 + $0xf0] sm:$0xff]
    %v2080 = vld [vmem:[#allocation7 + $0xf8] sm:$0xff]
    %s2081 = scalar_lea.vmem [#allocation5], 16
    %v2082 = vld [vmem:[%s2081] sm:$0xf]
    %v2083 = vld [vmem:[#allocation8] sm:$0xff]
    %v2084 = vld [vmem:[#allocation8 + $0x8] sm:$0xff]
    %v2085 = vld [vmem:[#allocation8 + $0x10] sm:$0xff]
    %v2086 = vld [vmem:[#allocation8 + $0x18] sm:$0xff]
    %v2087 = vld [vmem:[#allocation8 + $0x20] sm:$0xff]
    %v2088 = vld [vmem:[#allocation8 + $0x28] sm:$0xff]
    %v2089 = vld [vmem:[#allocation8 + $0x30] sm:$0xff]
    %v2090 = vld [vmem:[#allocation8 + $0x38] sm:$0xff]
    %v2091 = vld [vmem:[#allocation8 + $0x40] sm:$0xff]
    %v2092 = vld [vmem:[#allocation8 + $0x48] sm:$0xff]
    %v2093 = vld [vmem:[#allocation8 + $0x50] sm:$0xff]
    %v2094 = vld [vmem:[#allocation8 + $0x58] sm:$0xff]
    %v2095 = vld [vmem:[#allocation8 + $0x60] sm:$0xff]
    %v2096 = vld [vmem:[#allocation8 + $0x68] sm:$0xff]
    %v2097 = vld [vmem:[#allocation8 + $0x70] sm:$0xff]
    %v2098 = vld [vmem:[#allocation8 + $0x78] sm:$0xff]
    %v2099 = vld [vmem:[#allocation8 + $0x80] sm:$0xff]
    %v2100 = vld [vmem:[#allocation8 + $0x88] sm:$0xff]
    %v2101 = vld [vmem:[#allocation8 + $0x90] sm:$0xff]
    %v2102 = vld [vmem:[#allocation8 + $0x98] sm:$0xff]
    %v2103 = vld [vmem:[#allocation8 + $0xa0] sm:$0xff]
    %v2104 = vld [vmem:[#allocation8 + $0xa8] sm:$0xff]
    %v2105 = vld [vmem:[#allocation8 + $0xb0] sm:$0xff]
    %v2106 = vld [vmem:[#allocation8 + $0xb8] sm:$0xff]
    %v2107 = vld [vmem:[#allocation8 + $0xc0] sm:$0xff]
    %v2108 = vld [vmem:[#allocation8 + $0xc8] sm:$0xff]
    %v2109 = vld [vmem:[#allocation8 + $0xd0] sm:$0xff]
    %v2110 = vld [vmem:[#allocation8 + $0xd8] sm:$0xff]
    %v2111 = vld [vmem:[#allocation8 + $0xe0] sm:$0xff]
    %v2112 = vld [vmem:[#allocation8 + $0xe8] sm:$0xff]
    %v2113 = vld [vmem:[#allocation8 + $0xf0] sm:$0xff]
    %v2114 = vld [vmem:[#allocation8 + $0xf8] sm:$0xff]
    %v2117 = vunpack.c.l.s4 1983009808
    %v2118 = vunpack.c.0.s8 %v2117
    %v2119 = vlaneseq
    %v2120 = vshrl.u32 %v2119, 7
    %v2121 = vsub.s32 %v2118, %v2120
    %v2122 = vrot.slane %v2082, %v2121
    %v2123 = vcombine.high %v2122, %v2122
    %v2158 = vunpack.c.l.b16 %v2083
    %v2159 = vunpack.c.h.b16 %v2083
    %v2160 = vunpack.c.l.b16 %v2084
    %v2161 = vunpack.c.h.b16 %v2084
    %v2162 = vunpack.c.l.b16 %v2085
    %v2163 = vunpack.c.h.b16 %v2085
    %v2164 = vunpack.c.l.b16 %v2086
    %v2165 = vunpack.c.h.b16 %v2086
    %v2166 = vunpack.c.l.b16 %v2087
    %v2167 = vunpack.c.h.b16 %v2087
    %v2168 = vunpack.c.l.b16 %v2088
    %v2169 = vunpack.c.h.b16 %v2088
    %v2170 = vunpack.c.l.b16 %v2089
    %v2171 = vunpack.c.h.b16 %v2089
    %v2172 = vunpack.c.l.b16 %v2090
    %v2173 = vunpack.c.h.b16 %v2090
    %v2174 = vunpack.c.l.b16 %v2091
    %v2175 = vunpack.c.h.b16 %v2091
    %v2176 = vunpack.c.l.b16 %v2092
    %v2177 = vunpack.c.h.b16 %v2092
    %v2178 = vunpack.c.l.b16 %v2093
    %v2179 = vunpack.c.h.b16 %v2093
    %v2180 = vunpack.c.l.b16 %v2094
    %v2181 = vunpack.c.h.b16 %v2094
    %v2182 = vunpack.c.l.b16 %v2095
    %v2183 = vunpack.c.h.b16 %v2095
    %v2184 = vunpack.c.l.b16 %v2096
    %v2185 = vunpack.c.h.b16 %v2096
    %v2186 = vunpack.c.l.b16 %v2097
    %v2187 = vunpack.c.h.b16 %v2097
    %v2188 = vunpack.c.l.b16 %v2098
    %v2189 = vunpack.c.h.b16 %v2098
    %v2190 = vunpack.c.l.b16 %v2099
    %v2191 = vunpack.c.h.b16 %v2099
    %v2192 = vunpack.c.l.b16 %v2100
    %v2193 = vunpack.c.h.b16 %v2100
    %v2194 = vunpack.c.l.b16 %v2101
    %v2195 = vunpack.c.h.b16 %v2101
    %v2196 = vunpack.c.l.b16 %v2102
    %v2197 = vunpack.c.h.b16 %v2102
    %v2198 = vunpack.c.l.b16 %v2103
    %v2199 = vunpack.c.h.b16 %v2103
    %v2200 = vunpack.c.l.b16 %v2104
    %v2201 = vunpack.c.h.b16 %v2104
    %v2202 = vunpack.c.l.b16 %v2105
    %v2203 = vunpack.c.h.b16 %v2105
    %v2204 = vunpack.c.l.b16 %v2106
    %v2205 = vunpack.c.h.b16 %v2106
    %v2206 = vunpack.c.l.b16 %v2107
    %v2207 = vunpack.c.h.b16 %v2107
    %v2208 = vunpack.c.l.b16 %v2108
    %v2209 = vunpack.c.h.b16 %v2108
    %v2210 = vunpack.c.l.b16 %v2109
    %v2211 = vunpack.c.h.b16 %v2109
    %v2212 = vunpack.c.l.b16 %v2110
    %v2213 = vunpack.c.h.b16 %v2110
    %v2214 = vunpack.c.l.b16 %v2111
    %v2215 = vunpack.c.h.b16 %v2111
    %v2216 = vunpack.c.l.b16 %v2112
    %v2217 = vunpack.c.h.b16 %v2112
    %v2218 = vunpack.c.l.b16 %v2113
    %v2219 = vunpack.c.h.b16 %v2113
    %v2220 = vunpack.c.l.b16 %v2114
    %v2221 = vunpack.c.h.b16 %v2114
    %v2222 = vpack.c.b16 %v2160, %v2158
    %v2223 = vpack.c.b16 %v2161, %v2159
    %v2224 = vpack.c.b16 %v2164, %v2162
    %v2225 = vpack.c.b16 %v2165, %v2163
    %v2226 = vpack.c.b16 %v2168, %v2166
    %v2227 = vpack.c.b16 %v2169, %v2167
    %v2228 = vpack.c.b16 %v2172, %v2170
    %v2229 = vpack.c.b16 %v2173, %v2171
    %v2230 = vpack.c.b16 %v2176, %v2174
    %v2231 = vpack.c.b16 %v2177, %v2175
    %v2232 = vpack.c.b16 %v2180, %v2178
    %v2233 = vpack.c.b16 %v2181, %v2179
    %v2234 = vpack.c.b16 %v2184, %v2182
    %v2235 = vpack.c.b16 %v2185, %v2183
    %v2236 = vpack.c.b16 %v2188, %v2186
    %v2237 = vpack.c.b16 %v2189, %v2187
    %v2238 = vpack.c.b16 %v2192, %v2190
    %v2239 = vpack.c.b16 %v2193, %v2191
    %v2240 = vpack.c.b16 %v2196, %v2194
    %v2241 = vpack.c.b16 %v2197, %v2195
    %v2242 = vpack.c.b16 %v2200, %v2198
    %v2243 = vpack.c.b16 %v2201, %v2199
    %v2244 = vpack.c.b16 %v2204, %v2202
    %v2245 = vpack.c.b16 %v2205, %v2203
    %v2246 = vpack.c.b16 %v2208, %v2206
    %v2247 = vpack.c.b16 %v2209, %v2207
    %v2248 = vpack.c.b16 %v2212, %v2210
    %v2249 = vpack.c.b16 %v2213, %v2211
    %v2250 = vpack.c.b16 %v2216, %v2214
    %v2251 = vpack.c.b16 %v2217, %v2215
    %v2252 = vpack.c.b16 %v2220, %v2218
    %v2253 = vpack.c.b16 %v2221, %v2219
    %2286 = vmatprep.subr.bf16.mxu0 %v2223
    %2287 = vmatpush1.bf16.msra.mxu0 %v2222
    %2288 = vmatprep.subr.bf16.mxu0 %v2225
    %2289 = vmatpush1.bf16.msra.mxu0 %v2224
    %2290 = vmatprep.subr.bf16.mxu0 %v2227
    %2291 = vmatpush1.bf16.msra.mxu0 %v2226
    %2292 = vmatprep.subr.bf16.mxu0 %v2229
    %2293 = vmatpush1.bf16.msra.mxu0 %v2228
    %2294 = vmatprep.subr.bf16.mxu0 %v2231
    %2295 = vmatpush1.bf16.msra.mxu0 %v2230
    %2296 = vmatprep.subr.bf16.mxu0 %v2233
    %2297 = vmatpush1.bf16.msra.mxu0 %v2232
    %2298 = vmatprep.subr.bf16.mxu0 %v2235
    %2299 = vmatpush1.bf16.msra.mxu0 %v2234
    %2300 = vmatprep.subr.bf16.mxu0 %v2237
    %2301 = vmatpush1.bf16.msra.mxu0 %v2236
    %2302 = vmatprep.subr.bf16.mxu0 %v2239
    %2303 = vmatpush1.bf16.msra.mxu0 %v2238
    %2304 = vmatprep.subr.bf16.mxu0 %v2241
    %2305 = vmatpush1.bf16.msra.mxu0 %v2240
    %2306 = vmatprep.subr.bf16.mxu0 %v2243
    %2307 = vmatpush1.bf16.msra.mxu0 %v2242
    %2308 = vmatprep.subr.bf16.mxu0 %v2245
    %2309 = vmatpush1.bf16.msra.mxu0 %v2244
    %2310 = vmatprep.subr.bf16.mxu0 %v2247
    %2311 = vmatpush1.bf16.msra.mxu0 %v2246
    %2312 = vmatprep.subr.bf16.mxu0 %v2249
    %2313 = vmatpush1.bf16.msra.mxu0 %v2248
    %2314 = vmatprep.subr.bf16.mxu0 %v2251
    %2315 = vmatpush1.bf16.msra.mxu0 %v2250
    %2316 = vmatprep.subr.bf16.mxu0 %v2253
    %2317 = vmatpush1.bf16.msra.mxu0 %v2252
    %2318 = vmatprep.mubr.bf16.mxu0 %v2123
    %2319 = vmatmul.mubr.bf16.gmra.mrb[0].mxu0 %v2122
    %v2320 = vpop.f32.mrb[0].mxu0
    %v2321 = vadd.f32 0.0, %v2320
    %v2322 = vpop.f32.mrb[0].mxu0
    %v2323 = vpop.f32.mrb[0].mxu0
    %v2324 = vpop.f32.mrb[0].mxu0
    %2325 = vdwg.mxu0
    %v2328 = vunpack.c.l.s4 1983009808
    %v2329 = vunpack.c.0.s8 %v2328
    %v2330 = vlaneseq
    %v2331 = vshrl.u32 %v2330, 7
    %v2332 = vsub.s32 %v2329, %v2331
    %v2333 = vrot.slane %v2048, %v2332
    %v2334 = vcombine.high %v2333, %v2333
    %v2369 = vunpack.c.l.b16 %v2049
    %v2370 = vunpack.c.h.b16 %v2049
    %v2371 = vunpack.c.l.b16 %v2050
    %v2372 = vunpack.c.h.b16 %v2050
    %v2373 = vunpack.c.l.b16 %v2051
    %v2374 = vunpack.c.h.b16 %v2051
    %v2375 = vunpack.c.l.b16 %v2052
    %v2376 = vunpack.c.h.b16 %v2052
    %v2377 = vunpack.c.l.b16 %v2053
    %v2378 = vunpack.c.h.b16 %v2053
    %v2379 = vunpack.c.l.b16 %v2054
    %v2380 = vunpack.c.h.b16 %v2054
    %v2381 = vunpack.c.l.b16 %v2055
    %v2382 = vunpack.c.h.b16 %v2055
    %v2383 = vunpack.c.l.b16 %v2056
    %v2384 = vunpack.c.h.b16 %v2056
    %v2385 = vunpack.c.l.b16 %v2057
    %v2386 = vunpack.c.h.b16 %v2057
    %v2387 = vunpack.c.l.b16 %v2058
    %v2388 = vunpack.c.h.b16 %v2058
    %v2389 = vunpack.c.l.b16 %v2059
    %v2390 = vunpack.c.h.b16 %v2059
    %v2391 = vunpack.c.l.b16 %v2060
    %v2392 = vunpack.c.h.b16 %v2060
    %v2393 = vunpack.c.l.b16 %v2061
    %v2394 = vunpack.c.h.b16 %v2061
    %v2395 = vunpack.c.l.b16 %v2062
    %v2396 = vunpack.c.h.b16 %v2062
    %v2397 = vunpack.c.l.b16 %v2063
    %v2398 = vunpack.c.h.b16 %v2063
    %v2399 = vunpack.c.l.b16 %v2064
    %v2400 = vunpack.c.h.b16 %v2064
    %v2401 = vunpack.c.l.b16 %v2065
    %v2402 = vunpack.c.h.b16 %v2065
    %v2403 = vunpack.c.l.b16 %v2066
    %v2404 = vunpack.c.h.b16 %v2066
    %v2405 = vunpack.c.l.b16 %v2067
    %v2406 = vunpack.c.h.b16 %v2067
    %v2407 = vunpack.c.l.b16 %v2068
    %v2408 = vunpack.c.h.b16 %v2068
    %v2409 = vunpack.c.l.b16 %v2069
    %v2410 = vunpack.c.h.b16 %v2069
    %v2411 = vunpack.c.l.b16 %v2070
    %v2412 = vunpack.c.h.b16 %v2070
    %v2413 = vunpack.c.l.b16 %v2071
    %v2414 = vunpack.c.h.b16 %v2071
    %v2415 = vunpack.c.l.b16 %v2072
    %v2416 = vunpack.c.h.b16 %v2072
    %v2417 = vunpack.c.l.b16 %v2073
    %v2418 = vunpack.c.h.b16 %v2073
    %v2419 = vunpack.c.l.b16 %v2074
    %v2420 = vunpack.c.h.b16 %v2074
    %v2421 = vunpack.c.l.b16 %v2075
    %v2422 = vunpack.c.h.b16 %v2075
    %v2423 = vunpack.c.l.b16 %v2076
    %v2424 = vunpack.c.h.b16 %v2076
    %v2425 = vunpack.c.l.b16 %v2077
    %v2426 = vunpack.c.h.b16 %v2077
    %v2427 = vunpack.c.l.b16 %v2078
    %v2428 = vunpack.c.h.b16 %v2078
    %v2429 = vunpack.c.l.b16 %v2079
    %v2430 = vunpack.c.h.b16 %v2079
    %v2431 = vunpack.c.l.b16 %v2080
    %v2432 = vunpack.c.h.b16 %v2080
    %v2433 = vpack.c.b16 %v2371, %v2369
    %v2434 = vpack.c.b16 %v2372, %v2370
    %v2435 = vpack.c.b16 %v2375, %v2373
    %v2436 = vpack.c.b16 %v2376, %v2374
    %v2437 = vpack.c.b16 %v2379, %v2377
    %v2438 = vpack.c.b16 %v2380, %v2378
    %v2439 = vpack.c.b16 %v2383, %v2381
    %v2440 = vpack.c.b16 %v2384, %v2382
    %v2441 = vpack.c.b16 %v2387, %v2385
    %v2442 = vpack.c.b16 %v2388, %v2386
    %v2443 = vpack.c.b16 %v2391, %v2389
    %v2444 = vpack.c.b16 %v2392, %v2390
    %v2445 = vpack.c.b16 %v2395, %v2393
    %v2446 = vpack.c.b16 %v2396, %v2394
    %v2447 = vpack.c.b16 %v2399, %v2397
    %v2448 = vpack.c.b16 %v2400, %v2398
    %v2449 = vpack.c.b16 %v2403, %v2401
    %v2450 = vpack.c.b16 %v2404, %v2402
    %v2451 = vpack.c.b16 %v2407, %v2405
    %v2452 = vpack.c.b16 %v2408, %v2406
    %v2453 = vpack.c.b16 %v2411, %v2409
    %v2454 = vpack.c.b16 %v2412, %v2410
    %v2455 = vpack.c.b16 %v2415, %v2413
    %v2456 = vpack.c.b16 %v2416, %v2414
    %v2457 = vpack.c.b16 %v2419, %v2417
    %v2458 = vpack.c.b16 %v2420, %v2418
    %v2459 = vpack.c.b16 %v2423, %v2421
    %v2460 = vpack.c.b16 %v2424, %v2422
    %v2461 = vpack.c.b16 %v2427, %v2425
    %v2462 = vpack.c.b16 %v2428, %v2426
    %v2463 = vpack.c.b16 %v2431, %v2429
    %v2464 = vpack.c.b16 %v2432, %v2430
    %2497 = vmatprep.subr.bf16.mxu0 %v2434
    %2498 = vmatpush1.bf16.msra.mxu0 %v2433
    %2499 = vmatprep.subr.bf16.mxu0 %v2436
    %2500 = vmatpush1.bf16.msra.mxu0 %v2435
    %2501 = vmatprep.subr.bf16.mxu0 %v2438
    %2502 = vmatpush1.bf16.msra.mxu0 %v2437
    %2503 = vmatprep.subr.bf16.mxu0 %v2440
    %2504 = vmatpush1.bf16.msra.mxu0 %v2439
    %2505 = vmatprep.subr.bf16.mxu0 %v2442
    %2506 = vmatpush1.bf16.msra.mxu0 %v2441
    %2507 = vmatprep.subr.bf16.mxu0 %v2444
    %2508 = vmatpush1.bf16.msra.mxu0 %v2443
    %2509 = vmatprep.subr.bf16.mxu0 %v2446
    %2510 = vmatpush1.bf16.msra.mxu0 %v2445
    %2511 = vmatprep.subr.bf16.mxu0 %v2448
    %2512 = vmatpush1.bf16.msra.mxu0 %v2447
    %2513 = vmatprep.subr.bf16.mxu0 %v2450
    %2514 = vmatpush1.bf16.msra.mxu0 %v2449
    %2515 = vmatprep.subr.bf16.mxu0 %v2452
    %2516 = vmatpush1.bf16.msra.mxu0 %v2451
    %2517 = vmatprep.subr.bf16.mxu0 %v2454
    %2518 = vmatpush1.bf16.msra.mxu0 %v2453
    %2519 = vmatprep.subr.bf16.mxu0 %v2456
    %2520 = vmatpush1.bf16.msra.mxu0 %v2455
    %2521 = vmatprep.subr.bf16.mxu0 %v2458
    %2522 = vmatpush1.bf16.msra.mxu0 %v2457
    %2523 = vmatprep.subr.bf16.mxu0 %v2460
    %2524 = vmatpush1.bf16.msra.mxu0 %v2459
    %2525 = vmatprep.subr.bf16.mxu0 %v2462
    %2526 = vmatpush1.bf16.msra.mxu0 %v2461
    %2527 = vmatprep.subr.bf16.mxu0 %v2464
    %2528 = vmatpush1.bf16.msra.mxu0 %v2463
    %2529 = vmatprep.mubr.bf16.mxu0 %v2334
    %2530 = vmatmul.mubr.bf16.gmra.mrb[0].mxu0 %v2333
    %v2531 = vpop.f32.mrb[0].mxu0
    %v2532 = vadd.f32 %v2321, %v2531
    %v2533 = vpop.f32.mrb[0].mxu0
    %v2534 = vpop.f32.mrb[0].mxu0
    %v2535 = vpop.f32.mrb[0].mxu0
    %2536 = vdwg.mxu0
    %v2537 = vadd.f32 %v2041, %v2532
    %2538 = vst [vmem:[#allocation10 + $0x10] sm:$0xf] %v2537
    // Predicated region
    $region34: #{tpu_custom_call.1} parent=1 // pred_check
      _
    $region35: #{tpu_custom_call.1} parent=1 // pred_check_branch
      %2540 = sbr.rel (0) target = $region37
    $region36: #{tpu_custom_call.1} parent=1 // pred_region
      %s2542 = ssub.s32 320, 320
      %2543 = vsyncadd [#allocation4], %s2542
      %s2545 = sshll.u32 [#allocation10], 4
      %s2546 = int_to_ptr.vmem [resolvable:$true] %s2545
      %2548 = dma.vmem_to_hbm [thread:$0]  %s2546, 320, %s4, [#allocation4]
    $region37: #{tpu_custom_call.1} parent=1 // pred_fallthru
      _
    // Predicated region
    $region38: #{tpu_custom_call.1} parent=1 // pred_check
      _
    $region39: #{tpu_custom_call.1} parent=1 // pred_check_branch
      %2550 = sbr.rel (0) target = $region41
    $region40: #{tpu_custom_call.1} parent=1 // pred_region
      %2551 = dma.done [#allocation4], 320
    $region41: #{tpu_custom_call.1} parent=1 // pred_fallthru
      _
    %2552 = vsyncpa [#allocation3], 1
    %2553 = vsyncpa [#allocation6], 1
    %2554 = vsyncpa [#allocation9], 1
    %2555 = vsyncpa [#allocation4], 1

</llo_original>
